<compile_context>
chip_gen: v5e
topology: v5e:2x2
jax: 0.10.0
libtpu: 0.0.40
codegen_flags: <defaults>
</compile_context>

<pallas_src>
import math
import functools

import jax
import jax.numpy as jnp
import numpy as np
from jax.experimental import pallas as pl
from jax.experimental.pallas import tpu as pltpu


_LAYER_PARAM_ORDER = [
    "sq_w", "sq_b", "sk_w", "sk_b", "sv_w", "sv_b", "so_w", "so_b",
    "cq_w", "cq_b", "ck_w", "ck_b", "cv_w", "cv_b", "co_w", "co_b",
    "f1_w", "f1_b", "f2_w", "f2_b",
    "l1_g", "l1_b", "l2_g", "l2_b", "l3_g", "l3_b",
]
_NUM_LAYER_PARAMS = len(_LAYER_PARAM_ORDER)   # 26


# ----------------------------------------------------------------------------
# Fused Pallas kernel: one DecoderLayer per grid step
# ----------------------------------------------------------------------------
def fused_decoder_kernel(num_heads, batch_block, seq_q, seq_enc, *refs):
    x_in_ref, enc_ref = refs[0], refs[1]
    (sq_w, sq_b, sk_w, sk_b, sv_w, sv_b, so_w, so_b,
     cq_w, cq_b, ck_w, ck_b, cv_w, cv_b, co_w, co_b,
     f1_w, f1_b, f2_w, f2_b,
     l1_g, l1_b, l2_g, l2_b, l3_g, l3_b) = refs[2:2 + _NUM_LAYER_PARAMS]
    x_ref, sa_ref, ca_ref = refs[2 + _NUM_LAYER_PARAMS:]

    H = num_heads
    Bb = batch_block
    Sq, Se = seq_q, seq_enc
    D = x_ref.shape[-1]
    dk = D // H
    scale = 1.0 / math.sqrt(dk)

    layer = pl.program_id(1)

    # Layer 0: seed the activation carry.  The x output block has a constant
    # block index along the layer axis, so it stays resident in VMEM for all
    # layers of this batch block (layers fused; no inter-layer HBM round-trip).
    @pl.when(layer == 0)
    def _():
        x_ref[...] = x_in_ref[...]

    x = x_ref[...]                               # (Bb*Sq, D) f32 carry
    enc_bf = enc_ref[...].astype(jnp.bfloat16)   # (Bb*Se, D) bf16 (MXU input)

    def bmm(a_bf16, w_ref, b_ref):
        # bf16 MXU inputs, f32 accumulation; bias add in f32.
        return (jnp.dot(a_bf16, w_ref[0],
                        preferred_element_type=jnp.float32) + b_ref[0])

    def layernorm(y, g_ref, b_ref):
        # Single-pass variance (mean(y^2) - mu^2) saves one (M, D) VPU pass.
        mu = jnp.mean(y, axis=-1, keepdims=True)
        var = jnp.mean(y * y, axis=-1, keepdims=True) - mu * mu
        return (y - mu) * jax.lax.rsqrt(var + 1e-5) * g_ref[0] + b_ref[0]

    def split_heads(t, rows):
        # (Bb*rows, D) -> (Bb*H, rows, dk).  Pure data staging with static
        # slices + a leading-axis stack (chosen over a lane-splitting
        # reshape/transpose for robust Mosaic lowering).  Every matmul below
        # is a single contraction batched over the merged (batch, head) axis.
        parts = []
        for b in range(Bb):
            tb = t[b * rows:(b + 1) * rows, :]
            for h in range(H):
                parts.append(tb[:, h * dk:(h + 1) * dk])
        return jnp.stack(parts, axis=0)

    def combine_heads(t):
        # (Bb*H, Sq, dk) -> (Bb*Sq, D)
        rows = []
        for b in range(Bb):
            rows.append(jnp.concatenate([t[b * H + h] for h in range(H)], axis=-1))
        return jnp.concatenate(rows, axis=0)

    def mha(q_in_bf, kv_in_bf, kv_rows, wq, bq, wk, bk, wv, bv, wo, bo, attn_ref):
        # Projections on the flattened (Bb*rows, D) M dimension (full MXU rows).
        q = bmm(q_in_bf, wq, bq) * scale          # fold 1/sqrt(dk) into q (f32)
        k = bmm(kv_in_bf, wk, bk)
        v = bmm(kv_in_bf, wv, bv)
        qz = split_heads(q, Sq).astype(jnp.bfloat16)        # (Z, Sq, dk)
        kz = split_heads(k, kv_rows).astype(jnp.bfloat16)   # (Z, Skv, dk)
        vz = split_heads(v, kv_rows).astype(jnp.bfloat16)
        # One batched contraction over all (batch, head) pairs, f32 accumulate.
        scores = jnp.einsum("zqd,zkd->zqk", qz, kz,
                            preferred_element_type=jnp.float32)
        m = jnp.max(scores, axis=-1, keepdims=True)
        e = jnp.exp(scores - m)
        attn = e * pl.reciprocal(jnp.sum(e, axis=-1, keepdims=True), approx=True)
        attn_ref[0] = attn                        # single store: all heads at once
        ctx = jnp.einsum("zqk,zkd->zqd", attn.astype(jnp.bfloat16), vz,
                         preferred_element_type=jnp.float32)
        return bmm(combine_heads(ctx).astype(jnp.bfloat16), wo, bo)

    # TODO(synk): dropout layers are identity here (eval-mode semantics).
    x_bf = x.astype(jnp.bfloat16)
    sa = mha(x_bf, x_bf, Sq, sq_w, sq_b, sk_w, sk_b, sv_w, sv_b, so_w, so_b, sa_ref)
    x1 = layernorm(x + sa, l1_g, l1_b)
    x1_bf = x1.astype(jnp.bfloat16)
    ca = mha(x1_bf, enc_bf, Se, cq_w, cq_b, ck_w, ck_b, cv_w, cv_b, co_w, co_b, ca_ref)
    x2 = layernorm(x1 + ca, l2_g, l2_b)
    h1 = jnp.maximum(bmm(x2.astype(jnp.bfloat16), f1_w, f1_b), 0.0)
    ff = bmm(h1.astype(jnp.bfloat16), f2_w, f2_b)
    x_ref[...] = layernorm(x2 + ff, l3_g, l3_b)


# ----------------------------------------------------------------------------
# Wrapper: whole decoder stack in one pallas_call
# ----------------------------------------------------------------------------
def _stacked_spec(arr):
    nd = arr.ndim
    return pl.BlockSpec((1,) + tuple(arr.shape[1:]),
                        lambda bb, l, _nd=nd: (l,) + (0,) * (_nd - 1))


def decoder_layers_forward(x, enc, stacked, num_heads, *, batch_block=None):
    B, S, D = x.shape
    Se = enc.shape[1]
    H = num_heads
    L = stacked["sq_w"].shape[0]
    if batch_block is None:
        batch_block = B          # flatten the whole batch into the matmul M dim
    assert B % batch_block == 0
    num_bb = B // batch_block

    weights = [stacked[name] for name in _LAYER_PARAM_ORDER]

    # Host-side flatten: the kernel works on lane-major 2-D (rows, D) slabs.
    x2d = x.reshape(B * S, D).astype(jnp.float32)
    enc2d = enc.reshape(B * Se, D).astype(jnp.float32)

    in_specs = (
        [pl.BlockSpec((batch_block * S, D), lambda bb, l: (bb, 0)),
         pl.BlockSpec((batch_block * Se, D), lambda bb, l: (bb, 0))]
        + [_stacked_spec(w) for w in weights])

    out_shape = (
        jax.ShapeDtypeStruct((B * S, D), jnp.float32),
        jax.ShapeDtypeStruct((L, B * H, S, S), jnp.float32),
        jax.ShapeDtypeStruct((L, B * H, S, Se), jnp.float32),
    )
    out_specs = (
        pl.BlockSpec((batch_block * S, D), lambda bb, l: (bb, 0)),
        pl.BlockSpec((1, batch_block * H, S, S), lambda bb, l: (l, bb, 0, 0)),
        pl.BlockSpec((1, batch_block * H, S, Se), lambda bb, l: (l, bb, 0, 0)),
    )

    kernel = functools.partial(fused_decoder_kernel, H, batch_block, S, Se)

    x_out2d, sa_all, ca_all = pl.pallas_call(
        kernel,
        grid=(num_bb, L),
        in_specs=in_specs,
        out_specs=out_specs,
        out_shape=out_shape,
        compiler_params=pltpu.CompilerParams(
            # Batch blocks are independent (parallel / megacore-shardable);
            # the layer axis carries the activation -> arbitrary (sequential).
            dimension_semantics=("parallel", "arbitrary"),
            vmem_limit_bytes=32 * 1024 * 1024,
        ),
    )(x2d, enc2d, *weights)

    x_out = x_out2d.reshape(B, S, D)
    self_attn = [sa_all[l].reshape(B, H, S, S) for l in range(L)]
    cross_attn = [ca_all[l].reshape(B, H, S, Se) for l in range(L)]
    return x_out, self_attn, cross_attn


def decoder_forward(tokens, enc_output, params, num_heads):
    d_model = params["embedding"].shape[1]
    x = params["embedding"][tokens] * math.sqrt(d_model)          # (B, S, D)
    x = x + params["pe"][: x.shape[1]][None, :, :]
    # TODO(synk): top-level dropout is identity (eval-mode semantics).
    return decoder_layers_forward(x, enc_output, params["layers"], num_heads)


# ----------------------------------------------------------------------------
# Parameter construction (matches nn.Linear / nn.LayerNorm shapes)
# ----------------------------------------------------------------------------
def _linear_params(key, fan_in, fan_out):
    bound = 1.0 / math.sqrt(fan_in)
    kw, kb = jax.random.split(key)
    # stored as (in, out): kernel computes x @ W + b  (== x @ W_pt.T + b)
    w = jax.random.uniform(kw, (fan_in, fan_out), jnp.float32, -bound, bound)
    b = jax.random.uniform(kb, (1, fan_out), jnp.float32, -bound, bound)
    return w, b


def make_layer_params(key, d_model, d_ff):
    keys = jax.random.split(key, 10)
    p = {}
    for name, k in zip(["sq", "sk", "sv", "so", "cq", "ck", "cv", "co"], keys[:8]):
        w, b = _linear_params(k, d_model, d_model)
        p[name + "_w"], p[name + "_b"] = w, b
    p["f1_w"], p["f1_b"] = _linear_params(keys[8], d_model, d_ff)
    p["f2_w"], p["f2_b"] = _linear_params(keys[9], d_ff, d_model)
    for i in (1, 2, 3):
        p[f"l{i}_g"] = jnp.ones((1, d_model), jnp.float32)
        p[f"l{i}_b"] = jnp.zeros((1, d_model), jnp.float32)
    return p


def stack_layer_params(layer_list):
    """Stack per-layer params along a leading layer axis; weight matrices are
    stored in bf16 (MXU inputs, halves weight-DMA bytes); biases/LN stay f32."""
    stacked = {}
    for name in _LAYER_PARAM_ORDER:
        arr = jnp.stack([lp[name] for lp in layer_list], axis=0)
        if name.endswith("_w"):
            arr = arr.astype(jnp.bfloat16)
        stacked[name] = arr
    return stacked


def make_positional_encoding(max_len, d_model):
    pos = jnp.arange(max_len, dtype=jnp.float32)[:, None]
    div = jnp.exp(jnp.arange(0, d_model, 2, dtype=jnp.float32)
                  * (-math.log(10000.0) / d_model))
    pe = jnp.zeros((max_len, d_model), jnp.float32)
    pe = pe.at[:, 0::2].set(jnp.sin(pos * div))
    pe = pe.at[:, 1::2].set(jnp.cos(pos * div))
    return pe


# ----------------------------------------------------------------------------
# Pure-JAX reference (same numerics: bf16 matmul inputs, f32 accumulation)
# ----------------------------------------------------------------------------
def _ref_layer(x, enc, p, l, H):
    D = x.shape[-1]
    dk = D // H

    def mm(a, w):
        return jnp.dot(a.astype(jnp.bfloat16), w.astype(jnp.bfloat16),
                       preferred_element_type=jnp.float32)

    def ln(y, g, b):
        mu = y.mean(-1, keepdims=True)
        var = ((y - mu) ** 2).mean(-1, keepdims=True)
        return (y - mu) / jnp.sqrt(var + 1e-5) * g[l, 0] + b[l, 0]

    def mha(q_in, kv_in, pre):
        q = mm(q_in, p[pre + "q_w"][l]) + p[pre + "q_b"][l, 0]
        k = mm(kv_in, p[pre + "k_w"][l]) + p[pre + "k_b"][l, 0]
        v = mm(kv_in, p[pre + "v_w"][l]) + p[pre + "v_b"][l, 0]
        B, Lq, _ = q.shape
        Lk = k.shape[1]
        qh = (q / math.sqrt(dk)).reshape(B, Lq, H, dk).transpose(0, 2, 1, 3)
        kh = k.reshape(B, Lk, H, dk).transpose(0, 2, 1, 3)
        vh = v.reshape(B, Lk, H, dk).transpose(0, 2, 1, 3)
        sc = jnp.einsum("bhqd,bhkd->bhqk",
                        qh.astype(jnp.bfloat16), kh.astype(jnp.bfloat16),
                        preferred_element_type=jnp.float32)
        a = jax.nn.softmax(sc, axis=-1)
        o = jnp.einsum("bhqk,bhkd->bhqd",
                       a.astype(jnp.bfloat16), vh.astype(jnp.bfloat16),
                       preferred_element_type=jnp.float32)
        o = o.transpose(0, 2, 1, 3).reshape(B, Lq, D)
        return mm(o, p[pre + "o_w"][l]) + p[pre + "o_b"][l, 0], a

    sa, saw = mha(x, x, "s")
    x1 = ln(x + sa, p["l1_g"], p["l1_b"])
    ca, caw = mha(x1, enc, "c")
    x2 = ln(x1 + ca, p["l2_g"], p["l2_b"])
    h = jnp.maximum(mm(x2, p["f1_w"][l]) + p["f1_b"][l, 0], 0.0)
    ff = mm(h, p["f2_w"][l]) + p["f2_b"][l, 0]
    return ln(x2 + ff, p["l3_g"], p["l3_b"]), saw, caw


def decoder_forward_ref(tokens, enc_output, params, num_heads):
    d_model = params["embedding"].shape[1]
    x = params["embedding"][tokens] * math.sqrt(d_model)
    x = x + params["pe"][: x.shape[1]][None, :, :]
    p = params["layers"]
    L = p["sq_w"].shape[0]
    for l in range(L):
        x, _, _ = _ref_layer(x, enc_output, p, l, num_heads)
    return x


# ----------------------------------------------------------------------------
if __name__ == "__main__":
    B, S, Se = 2, 8, 8
    d_model, num_heads, d_ff = 32, 4, 64
    num_layers, vocab_size, max_seq_len = 2, 50, 16

    root = jax.random.PRNGKey(0)
    k_emb, k_tok, k_enc, k_layers = jax.random.split(root, 4)

    layer_list = [make_layer_params(k, d_model, d_ff)
                  for k in jax.random.split(k_layers, num_layers)]
    params = {
        "embedding": jax.random.normal(k_emb, (vocab_size, d_model), jnp.float32),
        "pe": make_positional_encoding(max_seq_len, d_model),
        "layers": stack_layer_params(layer_list),
    }

    tokens = jax.random.randint(k_tok, (B, S), 0, vocab_size)
    enc_output = jax.random.normal(k_enc, (B, Se, d_model), jnp.float32)

    out, self_w, cross_w = decoder_forward(tokens, enc_output, params, num_heads)
    jax.block_until_ready(out)
    for w in self_w + cross_w:
        jax.block_until_ready(w)

    # sanity check against a pure-JAX reference with matched numerics
    ref = decoder_forward_ref(tokens, enc_output, params, num_heads)
    np.testing.assert_allclose(np.asarray(out), np.asarray(ref),
                               rtol=2e-2, atol=2e-2)

    assert out.shape == (B, S, d_model)
    assert len(self_w) == num_layers and len(cross_w) == num_layers
    assert self_w[0].shape == (B, num_heads, S, S)
    assert cross_w[0].shape == (B, num_heads, S, Se)
    print("KERNEL_OK")
</pallas_src>

<mosaic_0001>
module attributes {stable_mosaic.version = 11 : i64} {
  func.func @fused_decoder_kernel(%arg0: i32, %arg1: i32, %arg2: memref<16x32xf32, #tpu.memory_space<vmem>>, %arg3: memref<16x32xf32, #tpu.memory_space<vmem>>, %arg4: memref<1x32x32xbf16, #tpu.memory_space<vmem>>, %arg5: memref<1x1x32xf32, #tpu.memory_space<vmem>>, %arg6: memref<1x32x32xbf16, #tpu.memory_space<vmem>>, %arg7: memref<1x1x32xf32, #tpu.memory_space<vmem>>, %arg8: memref<1x32x32xbf16, #tpu.memory_space<vmem>>, %arg9: memref<1x1x32xf32, #tpu.memory_space<vmem>>, %arg10: memref<1x32x32xbf16, #tpu.memory_space<vmem>>, %arg11: memref<1x1x32xf32, #tpu.memory_space<vmem>>, %arg12: memref<1x32x32xbf16, #tpu.memory_space<vmem>>, %arg13: memref<1x1x32xf32, #tpu.memory_space<vmem>>, %arg14: memref<1x32x32xbf16, #tpu.memory_space<vmem>>, %arg15: memref<1x1x32xf32, #tpu.memory_space<vmem>>, %arg16: memref<1x32x32xbf16, #tpu.memory_space<vmem>>, %arg17: memref<1x1x32xf32, #tpu.memory_space<vmem>>, %arg18: memref<1x32x32xbf16, #tpu.memory_space<vmem>>, %arg19: memref<1x1x32xf32, #tpu.memory_space<vmem>>, %arg20: memref<1x32x64xbf16, #tpu.memory_space<vmem>>, %arg21: memref<1x1x64xf32, #tpu.memory_space<vmem>>, %arg22: memref<1x64x32xbf16, #tpu.memory_space<vmem>>, %arg23: memref<1x1x32xf32, #tpu.memory_space<vmem>>, %arg24: memref<1x1x32xf32, #tpu.memory_space<vmem>>, %arg25: memref<1x1x32xf32, #tpu.memory_space<vmem>>, %arg26: memref<1x1x32xf32, #tpu.memory_space<vmem>>, %arg27: memref<1x1x32xf32, #tpu.memory_space<vmem>>, %arg28: memref<1x1x32xf32, #tpu.memory_space<vmem>>, %arg29: memref<1x1x32xf32, #tpu.memory_space<vmem>>, %arg30: memref<16x32xf32, #tpu.memory_space<vmem>>, %arg31: memref<1x8x8x8xf32, #tpu.memory_space<vmem>>, %arg32: memref<1x8x8x8xf32, #tpu.memory_space<vmem>>) attributes {dimension_semantics = [#tpu.dimension_semantics<parallel>, #tpu.dimension_semantics<arbitrary>], iteration_bounds = array<i64: 1, 2>, scalar_prefetch = 0 : i64, scratch_operands = 0 : i64, tpu.core_type = #tpu.core_type<tc>, window_params = [{transform_indices = @transform_0, window_bounds = array<i64: 16, 32>}, {transform_indices = @transform_1, window_bounds = array<i64: 16, 32>}, {transform_indices = @transform_2, window_bounds = array<i64: 1, 32, 32>}, {transform_indices = @transform_3, window_bounds = array<i64: 1, 1, 32>}, {transform_indices = @transform_4, window_bounds = array<i64: 1, 32, 32>}, {transform_indices = @transform_5, window_bounds = array<i64: 1, 1, 32>}, {transform_indices = @transform_6, window_bounds = array<i64: 1, 32, 32>}, {transform_indices = @transform_7, window_bounds = array<i64: 1, 1, 32>}, {transform_indices = @transform_8, window_bounds = array<i64: 1, 32, 32>}, {transform_indices = @transform_9, window_bounds = array<i64: 1, 1, 32>}, {transform_indices = @transform_10, window_bounds = array<i64: 1, 32, 32>}, {transform_indices = @transform_11, window_bounds = array<i64: 1, 1, 32>}, {transform_indices = @transform_12, window_bounds = array<i64: 1, 32, 32>}, {transform_indices = @transform_13, window_bounds = array<i64: 1, 1, 32>}, {transform_indices = @transform_14, window_bounds = array<i64: 1, 32, 32>}, {transform_indices = @transform_15, window_bounds = array<i64: 1, 1, 32>}, {transform_indices = @transform_16, window_bounds = array<i64: 1, 32, 32>}, {transform_indices = @transform_17, window_bounds = array<i64: 1, 1, 32>}, {transform_indices = @transform_18, window_bounds = array<i64: 1, 32, 64>}, {transform_indices = @transform_19, window_bounds = array<i64: 1, 1, 64>}, {transform_indices = @transform_20, window_bounds = array<i64: 1, 64, 32>}, {transform_indices = @transform_21, window_bounds = array<i64: 1, 1, 32>}, {transform_indices = @transform_22, window_bounds = array<i64: 1, 1, 32>}, {transform_indices = @transform_23, window_bounds = array<i64: 1, 1, 32>}, {transform_indices = @transform_24, window_bounds = array<i64: 1, 1, 32>}, {transform_indices = @transform_25, window_bounds = array<i64: 1, 1, 32>}, {transform_indices = @transform_26, window_bounds = array<i64: 1, 1, 32>}, {transform_indices = @transform_27, window_bounds = array<i64: 1, 1, 32>}, {transform_indices = @transform_28, window_bounds = array<i64: 16, 32>}, {transform_indices = @transform_29, window_bounds = array<i64: 1, 8, 8, 8>}, {transform_indices = @transform_30, window_bounds = array<i64: 1, 8, 8, 8>}]} {
    %c0_i32 = arith.constant 0 : i32
    %0 = arith.cmpi eq, %arg1, %c0_i32 : i32
    %1 = arith.extui %0 : i1 to i32
    %c0_i32_0 = arith.constant 0 : i32
    %2 = arith.cmpi ne, %1, %c0_i32_0 : i32
    scf.if %2 {
      %c0_127 = arith.constant 0 : index
      %c0_128 = arith.constant 0 : index
      %360 = vector.load %arg2[%c0_127, %c0_128] : memref<16x32xf32, #tpu.memory_space<vmem>>, vector<16x32xf32>
      %c0_129 = arith.constant 0 : index
      %c0_130 = arith.constant 0 : index
      %361 = vector.load %arg30[%c0_129, %c0_130] : memref<16x32xf32, #tpu.memory_space<vmem>>, vector<16x32xf32>
      tpu.vector_store %arg30[%c0_129, %c0_130], %360 {strides = array<i32>} : memref<16x32xf32, #tpu.memory_space<vmem>>, vector<16x32xf32>,
    } else {
    }
    %c0 = arith.constant 0 : index
    %c0_1 = arith.constant 0 : index
    %3 = vector.load %arg30[%c0, %c0_1] : memref<16x32xf32, #tpu.memory_space<vmem>>, vector<16x32xf32>
    %c0_2 = arith.constant 0 : index
    %c0_3 = arith.constant 0 : index
    %4 = vector.load %arg3[%c0_2, %c0_3] : memref<16x32xf32, #tpu.memory_space<vmem>>, vector<16x32xf32>
    %5 = arith.truncf %4 : vector<16x32xf32> to vector<16x32xbf16>
    %6 = arith.truncf %3 : vector<16x32xf32> to vector<16x32xbf16>
    %c0_4 = arith.constant 0 : index
    %c0_5 = arith.constant 0 : index
    %c0_6 = arith.constant 0 : index
    %7 = vector.load %arg4[%c0_4, %c0_5, %c0_6] : memref<1x32x32xbf16, #tpu.memory_space<vmem>>, vector<1x32x32xbf16>
    %8 = vector.shape_cast %7 : vector<1x32x32xbf16> to vector<32x32xbf16>
    %cst = arith.constant dense<0.000000e+00> : vector<16x32xf32>
    %9 = tpu.matmul %6, %8, %cst {dimension_numbers = #tpu.dot_dimension_numbers<[1], [0], [0], [1], [0, 0, 1, 1], [], []>} : vector<16x32xbf16>, vector<32x32xbf16>, vector<16x32xf32> -> vector<16x32xf32>
    %c0_7 = arith.constant 0 : index
    %c0_8 = arith.constant 0 : index
    %c0_9 = arith.constant 0 : index
    %10 = vector.load %arg5[%c0_7, %c0_8, %c0_9] : memref<1x1x32xf32, #tpu.memory_space<vmem>>, vector<1x1x32xf32>
    %11 = vector.shape_cast %10 : vector<1x1x32xf32> to vector<1x32xf32>
    %12 = vector.broadcast %11 : vector<1x32xf32> to vector<16x32xf32>
    %13 = arith.addf %9, %12 : vector<16x32xf32>
    %cst_10 = arith.constant 0.353553385 : f32
    %14 = vector.broadcast %cst_10 : f32 to vector<16x32xf32>
    %15 = arith.mulf %13, %14 : vector<16x32xf32>
    %c0_11 = arith.constant 0 : index
    %c0_12 = arith.constant 0 : index
    %c0_13 = arith.constant 0 : index
    %16 = vector.load %arg6[%c0_11, %c0_12, %c0_13] : memref<1x32x32xbf16, #tpu.memory_space<vmem>>, vector<1x32x32xbf16>
    %17 = vector.shape_cast %16 : vector<1x32x32xbf16> to vector<32x32xbf16>
    %cst_14 = arith.constant dense<0.000000e+00> : vector<16x32xf32>
    %18 = tpu.matmul %6, %17, %cst_14 {dimension_numbers = #tpu.dot_dimension_numbers<[1], [0], [0], [1], [0, 0, 1, 1], [], []>} : vector<16x32xbf16>, vector<32x32xbf16>, vector<16x32xf32> -> vector<16x32xf32>
    %c0_15 = arith.constant 0 : index
    %c0_16 = arith.constant 0 : index
    %c0_17 = arith.constant 0 : index
    %19 = vector.load %arg7[%c0_15, %c0_16, %c0_17] : memref<1x1x32xf32, #tpu.memory_space<vmem>>, vector<1x1x32xf32>
    %20 = vector.shape_cast %19 : vector<1x1x32xf32> to vector<1x32xf32>
    %21 = vector.broadcast %20 : vector<1x32xf32> to vector<16x32xf32>
    %22 = arith.addf %18, %21 : vector<16x32xf32>
    %c0_18 = arith.constant 0 : index
    %c0_19 = arith.constant 0 : index
    %c0_20 = arith.constant 0 : index
    %23 = vector.load %arg8[%c0_18, %c0_19, %c0_20] : memref<1x32x32xbf16, #tpu.memory_space<vmem>>, vector<1x32x32xbf16>
    %24 = vector.shape_cast %23 : vector<1x32x32xbf16> to vector<32x32xbf16>
    %cst_21 = arith.constant dense<0.000000e+00> : vector<16x32xf32>
    %25 = tpu.matmul %6, %24, %cst_21 {dimension_numbers = #tpu.dot_dimension_numbers<[1], [0], [0], [1], [0, 0, 1, 1], [], []>} : vector<16x32xbf16>, vector<32x32xbf16>, vector<16x32xf32> -> vector<16x32xf32>
    %c0_22 = arith.constant 0 : index
    %c0_23 = arith.constant 0 : index
    %c0_24 = arith.constant 0 : index
    %26 = vector.load %arg9[%c0_22, %c0_23, %c0_24] : memref<1x1x32xf32, #tpu.memory_space<vmem>>, vector<1x1x32xf32>
    %27 = vector.shape_cast %26 : vector<1x1x32xf32> to vector<1x32xf32>
    %28 = vector.broadcast %27 : vector<1x32xf32> to vector<16x32xf32>
    %29 = arith.addf %25, %28 : vector<16x32xf32>
    %30 = vector.extract_strided_slice %15 {offsets = [0, 0], sizes = [8, 32], strides = [1, 1]} : vector<16x32xf32> to vector<8x32xf32>
    %31 = vector.extract_strided_slice %30 {offsets = [0, 0], sizes = [8, 8], strides = [1, 1]} : vector<8x32xf32> to vector<8x8xf32>
    %32 = vector.extract_strided_slice %30 {offsets = [0, 8], sizes = [8, 8], strides = [1, 1]} : vector<8x32xf32> to vector<8x8xf32>
    %33 = vector.extract_strided_slice %30 {offsets = [0, 16], sizes = [8, 8], strides = [1, 1]} : vector<8x32xf32> to vector<8x8xf32>
    %34 = vector.extract_strided_slice %30 {offsets = [0, 24], sizes = [8, 8], strides = [1, 1]} : vector<8x32xf32> to vector<8x8xf32>
    %35 = vector.extract_strided_slice %15 {offsets = [8, 0], sizes = [8, 32], strides = [1, 1]} : vector<16x32xf32> to vector<8x32xf32>
    %36 = vector.extract_strided_slice %35 {offsets = [0, 0], sizes = [8, 8], strides = [1, 1]} : vector<8x32xf32> to vector<8x8xf32>
    %37 = vector.extract_strided_slice %35 {offsets = [0, 8], sizes = [8, 8], strides = [1, 1]} : vector<8x32xf32> to vector<8x8xf32>
    %38 = vector.extract_strided_slice %35 {offsets = [0, 16], sizes = [8, 8], strides = [1, 1]} : vector<8x32xf32> to vector<8x8xf32>
    %39 = vector.extract_strided_slice %35 {offsets = [0, 24], sizes = [8, 8], strides = [1, 1]} : vector<8x32xf32> to vector<8x8xf32>
    %40 = vector.shape_cast %31 : vector<8x8xf32> to vector<1x8x8xf32>
    %41 = vector.shape_cast %32 : vector<8x8xf32> to vector<1x8x8xf32>
    %42 = vector.shape_cast %33 : vector<8x8xf32> to vector<1x8x8xf32>
    %43 = vector.shape_cast %34 : vector<8x8xf32> to vector<1x8x8xf32>
    %44 = vector.shape_cast %36 : vector<8x8xf32> to vector<1x8x8xf32>
    %45 = vector.shape_cast %37 : vector<8x8xf32> to vector<1x8x8xf32>
    %46 = vector.shape_cast %38 : vector<8x8xf32> to vector<1x8x8xf32>
    %47 = vector.shape_cast %39 : vector<8x8xf32> to vector<1x8x8xf32>
    %48 = tpu.concatenate %40, %41, %42, %43, %44, %45, %46, %47 in 0 : vector<1x8x8xf32>, vector<1x8x8xf32>, vector<1x8x8xf32>, vector<1x8x8xf32>, vector<1x8x8xf32>, vector<1x8x8xf32>, vector<1x8x8xf32>, vector<1x8x8xf32> -> vector<8x8x8xf32>
    %49 = arith.truncf %48 : vector<8x8x8xf32> to vector<8x8x8xbf16>
    %50 = vector.extract_strided_slice %22 {offsets = [0, 0], sizes = [8, 32], strides = [1, 1]} : vector<16x32xf32> to vector<8x32xf32>
    %51 = vector.extract_strided_slice %50 {offsets = [0, 0], sizes = [8, 8], strides = [1, 1]} : vector<8x32xf32> to vector<8x8xf32>
    %52 = vector.extract_strided_slice %50 {offsets = [0, 8], sizes = [8, 8], strides = [1, 1]} : vector<8x32xf32> to vector<8x8xf32>
    %53 = vector.extract_strided_slice %50 {offsets = [0, 16], sizes = [8, 8], strides = [1, 1]} : vector<8x32xf32> to vector<8x8xf32>
    %54 = vector.extract_strided_slice %50 {offsets = [0, 24], sizes = [8, 8], strides = [1, 1]} : vector<8x32xf32> to vector<8x8xf32>
    %55 = vector.extract_strided_slice %22 {offsets = [8, 0], sizes = [8, 32], strides = [1, 1]} : vector<16x32xf32> to vector<8x32xf32>
    %56 = vector.extract_strided_slice %55 {offsets = [0, 0], sizes = [8, 8], strides = [1, 1]} : vector<8x32xf32> to vector<8x8xf32>
    %57 = vector.extract_strided_slice %55 {offsets = [0, 8], sizes = [8, 8], strides = [1, 1]} : vector<8x32xf32> to vector<8x8xf32>
    %58 = vector.extract_strided_slice %55 {offsets = [0, 16], sizes = [8, 8], strides = [1, 1]} : vector<8x32xf32> to vector<8x8xf32>
    %59 = vector.extract_strided_slice %55 {offsets = [0, 24], sizes = [8, 8], strides = [1, 1]} : vector<8x32xf32> to vector<8x8xf32>
    %60 = vector.shape_cast %51 : vector<8x8xf32> to vector<1x8x8xf32>
    %61 = vector.shape_cast %52 : vector<8x8xf32> to vector<1x8x8xf32>
    %62 = vector.shape_cast %53 : vector<8x8xf32> to vector<1x8x8xf32>
    %63 = vector.shape_cast %54 : vector<8x8xf32> to vector<1x8x8xf32>
    %64 = vector.shape_cast %56 : vector<8x8xf32> to vector<1x8x8xf32>
    %65 = vector.shape_cast %57 : vector<8x8xf32> to vector<1x8x8xf32>
    %66 = vector.shape_cast %58 : vector<8x8xf32> to vector<1x8x8xf32>
    %67 = vector.shape_cast %59 : vector<8x8xf32> to vector<1x8x8xf32>
    %68 = tpu.concatenate %60, %61, %62, %63, %64, %65, %66, %67 in 0 : vector<1x8x8xf32>, vector<1x8x8xf32>, vector<1x8x8xf32>, vector<1x8x8xf32>, vector<1x8x8xf32>, vector<1x8x8xf32>, vector<1x8x8xf32>, vector<1x8x8xf32> -> vector<8x8x8xf32>
    %69 = arith.truncf %68 : vector<8x8x8xf32> to vector<8x8x8xbf16>
    %70 = vector.extract_strided_slice %29 {offsets = [0, 0], sizes = [8, 32], strides = [1, 1]} : vector<16x32xf32> to vector<8x32xf32>
    %71 = vector.extract_strided_slice %70 {offsets = [0, 0], sizes = [8, 8], strides = [1, 1]} : vector<8x32xf32> to vector<8x8xf32>
    %72 = vector.extract_strided_slice %70 {offsets = [0, 8], sizes = [8, 8], strides = [1, 1]} : vector<8x32xf32> to vector<8x8xf32>
    %73 = vector.extract_strided_slice %70 {offsets = [0, 16], sizes = [8, 8], strides = [1, 1]} : vector<8x32xf32> to vector<8x8xf32>
    %74 = vector.extract_strided_slice %70 {offsets = [0, 24], sizes = [8, 8], strides = [1, 1]} : vector<8x32xf32> to vector<8x8xf32>
    %75 = vector.extract_strided_slice %29 {offsets = [8, 0], sizes = [8, 32], strides = [1, 1]} : vector<16x32xf32> to vector<8x32xf32>
    %76 = vector.extract_strided_slice %75 {offsets = [0, 0], sizes = [8, 8], strides = [1, 1]} : vector<8x32xf32> to vector<8x8xf32>
    %77 = vector.extract_strided_slice %75 {offsets = [0, 8], sizes = [8, 8], strides = [1, 1]} : vector<8x32xf32> to vector<8x8xf32>
    %78 = vector.extract_strided_slice %75 {offsets = [0, 16], sizes = [8, 8], strides = [1, 1]} : vector<8x32xf32> to vector<8x8xf32>
    %79 = vector.extract_strided_slice %75 {offsets = [0, 24], sizes = [8, 8], strides = [1, 1]} : vector<8x32xf32> to vector<8x8xf32>
    %80 = vector.shape_cast %71 : vector<8x8xf32> to vector<1x8x8xf32>
    %81 = vector.shape_cast %72 : vector<8x8xf32> to vector<1x8x8xf32>
    %82 = vector.shape_cast %73 : vector<8x8xf32> to vector<1x8x8xf32>
    %83 = vector.shape_cast %74 : vector<8x8xf32> to vector<1x8x8xf32>
    %84 = vector.shape_cast %76 : vector<8x8xf32> to vector<1x8x8xf32>
    %85 = vector.shape_cast %77 : vector<8x8xf32> to vector<1x8x8xf32>
    %86 = vector.shape_cast %78 : vector<8x8xf32> to vector<1x8x8xf32>
    %87 = vector.shape_cast %79 : vector<8x8xf32> to vector<1x8x8xf32>
    %88 = tpu.concatenate %80, %81, %82, %83, %84, %85, %86, %87 in 0 : vector<1x8x8xf32>, vector<1x8x8xf32>, vector<1x8x8xf32>, vector<1x8x8xf32>, vector<1x8x8xf32>, vector<1x8x8xf32>, vector<1x8x8xf32>, vector<1x8x8xf32> -> vector<8x8x8xf32>
    %89 = arith.truncf %88 : vector<8x8x8xf32> to vector<8x8x8xbf16>
    "tpu.trace_start"() <{level = 10 : i32, message = "zqd,zkd->zqk"}> : () -> ()
    %cst_25 = arith.constant dense<0.000000e+00> : vector<8x8x8xf32>
    %90 = tpu.matmul %49, %69, %cst_25 {dimension_numbers = #tpu.dot_dimension_numbers<[2], [2], [1], [1], [0, 0, 0, 1, 1, 1], [0], [0]>} : vector<8x8x8xbf16>, vector<8x8x8xbf16>, vector<8x8x8xf32> -> vector<8x8x8xf32>
    "tpu.trace_stop"() : () -> ()
    %cst_26 = arith.constant dense<0xFF800000> : vector<8x8xf32>
    %91 = vector.multi_reduction <maximumf>, %90, %cst_26 [2] : vector<8x8x8xf32> to vector<8x8xf32>
    %92 = vector.shape_cast %91 : vector<8x8xf32> to vector<8x8x1xf32>
    %93 = vector.broadcast %92 : vector<8x8x1xf32> to vector<8x8x8xf32>
    %94 = arith.subf %90, %93 : vector<8x8x8xf32>
    %95 = math.exp %94 : vector<8x8x8xf32>
    %cst_27 = arith.constant dense<0.000000e+00> : vector<8x8xf32>
    %96 = vector.multi_reduction <add>, %95, %cst_27 [2] : vector<8x8x8xf32> to vector<8x8xf32>
    %97 = vector.shape_cast %96 : vector<8x8xf32> to vector<8x8x1xf32>
    %98 = tpu.reciprocal %97 {approx = true} : vector<8x8x1xf32> -> vector<8x8x1xf32>
    %99 = vector.broadcast %98 : vector<8x8x1xf32> to vector<8x8x8xf32>
    %100 = arith.mulf %95, %99 : vector<8x8x8xf32>
    %c0_28 = arith.constant 0 : index
    %c0_29 = arith.constant 0 : index
    %c0_30 = arith.constant 0 : index
    %c0_31 = arith.constant 0 : index
    %101 = vector.load %arg31[%c0_28, %c0_29, %c0_30, %c0_31] : memref<1x8x8x8xf32, #tpu.memory_space<vmem>>, vector<1x8x8x8xf32>
    %102 = vector.shape_cast %101 : vector<1x8x8x8xf32> to vector<8x8x8xf32>
    %103 = vector.shape_cast %100 : vector<8x8x8xf32> to vector<1x8x8x8xf32>
    tpu.vector_store %arg31[%c0_28, %c0_29, %c0_30, %c0_31], %103 {strides = array<i32>} : memref<1x8x8x8xf32, #tpu.memory_space<vmem>>, vector<1x8x8x8xf32>,
    %104 = arith.truncf %100 : vector<8x8x8xf32> to vector<8x8x8xbf16>
    "tpu.trace_start"() <{level = 10 : i32, message = "zqk,zkd->zqd"}> : () -> ()
    %cst_32 = arith.constant dense<0.000000e+00> : vector<8x8x8xf32>
    %105 = tpu.matmul %104, %89, %cst_32 {dimension_numbers = #tpu.dot_dimension_numbers<[2], [1], [1], [2], [0, 0, 0, 1, 1, 2], [0], [0]>} : vector<8x8x8xbf16>, vector<8x8x8xbf16>, vector<8x8x8xf32> -> vector<8x8x8xf32>
    "tpu.trace_stop"() : () -> ()
    %106 = vector.extract_strided_slice %105 {offsets = [0, 0, 0], sizes = [1, 8, 8], strides = [1, 1, 1]} : vector<8x8x8xf32> to vector<1x8x8xf32>
    %107 = vector.shape_cast %106 : vector<1x8x8xf32> to vector<8x8xf32>
    %108 = vector.extract_strided_slice %105 {offsets = [1, 0, 0], sizes = [1, 8, 8], strides = [1, 1, 1]} : vector<8x8x8xf32> to vector<1x8x8xf32>
    %109 = vector.shape_cast %108 : vector<1x8x8xf32> to vector<8x8xf32>
    %110 = vector.extract_strided_slice %105 {offsets = [2, 0, 0], sizes = [1, 8, 8], strides = [1, 1, 1]} : vector<8x8x8xf32> to vector<1x8x8xf32>
    %111 = vector.shape_cast %110 : vector<1x8x8xf32> to vector<8x8xf32>
    %112 = vector.extract_strided_slice %105 {offsets = [3, 0, 0], sizes = [1, 8, 8], strides = [1, 1, 1]} : vector<8x8x8xf32> to vector<1x8x8xf32>
    %113 = vector.shape_cast %112 : vector<1x8x8xf32> to vector<8x8xf32>
    %114 = tpu.concatenate %107, %109, %111, %113 in 1 : vector<8x8xf32>, vector<8x8xf32>, vector<8x8xf32>, vector<8x8xf32> -> vector<8x32xf32>
    %115 = vector.extract_strided_slice %105 {offsets = [4, 0, 0], sizes = [1, 8, 8], strides = [1, 1, 1]} : vector<8x8x8xf32> to vector<1x8x8xf32>
    %116 = vector.shape_cast %115 : vector<1x8x8xf32> to vector<8x8xf32>
    %117 = vector.extract_strided_slice %105 {offsets = [5, 0, 0], sizes = [1, 8, 8], strides = [1, 1, 1]} : vector<8x8x8xf32> to vector<1x8x8xf32>
    %118 = vector.shape_cast %117 : vector<1x8x8xf32> to vector<8x8xf32>
    %119 = vector.extract_strided_slice %105 {offsets = [6, 0, 0], sizes = [1, 8, 8], strides = [1, 1, 1]} : vector<8x8x8xf32> to vector<1x8x8xf32>
    %120 = vector.shape_cast %119 : vector<1x8x8xf32> to vector<8x8xf32>
    %121 = vector.extract_strided_slice %105 {offsets = [7, 0, 0], sizes = [1, 8, 8], strides = [1, 1, 1]} : vector<8x8x8xf32> to vector<1x8x8xf32>
    %122 = vector.shape_cast %121 : vector<1x8x8xf32> to vector<8x8xf32>
    %123 = tpu.concatenate %116, %118, %120, %122 in 1 : vector<8x8xf32>, vector<8x8xf32>, vector<8x8xf32>, vector<8x8xf32> -> vector<8x32xf32>
    %124 = tpu.concatenate %114, %123 in 0 : vector<8x32xf32>, vector<8x32xf32> -> vector<16x32xf32>
    %125 = arith.truncf %124 : vector<16x32xf32> to vector<16x32xbf16>
    %c0_33 = arith.constant 0 : index
    %c0_34 = arith.constant 0 : index
    %c0_35 = arith.constant 0 : index
    %126 = vector.load %arg10[%c0_33, %c0_34, %c0_35] : memref<1x32x32xbf16, #tpu.memory_space<vmem>>, vector<1x32x32xbf16>
    %127 = vector.shape_cast %126 : vector<1x32x32xbf16> to vector<32x32xbf16>
    %cst_36 = arith.constant dense<0.000000e+00> : vector<16x32xf32>
    %128 = tpu.matmul %125, %127, %cst_36 {dimension_numbers = #tpu.dot_dimension_numbers<[1], [0], [0], [1], [0, 0, 1, 1], [], []>} : vector<16x32xbf16>, vector<32x32xbf16>, vector<16x32xf32> -> vector<16x32xf32>
    %c0_37 = arith.constant 0 : index
    %c0_38 = arith.constant 0 : index
    %c0_39 = arith.constant 0 : index
    %129 = vector.load %arg11[%c0_37, %c0_38, %c0_39] : memref<1x1x32xf32, #tpu.memory_space<vmem>>, vector<1x1x32xf32>
    %130 = vector.shape_cast %129 : vector<1x1x32xf32> to vector<1x32xf32>
    %131 = vector.broadcast %130 : vector<1x32xf32> to vector<16x32xf32>
    %132 = arith.addf %128, %131 : vector<16x32xf32>
    %133 = arith.addf %3, %132 : vector<16x32xf32>
    %cst_40 = arith.constant dense<0.000000e+00> : vector<16xf32>
    %134 = vector.multi_reduction <add>, %133, %cst_40 [1] : vector<16x32xf32> to vector<16xf32>
    %135 = vector.shape_cast %134 : vector<16xf32> to vector<16x1xf32>
    %cst_41 = arith.constant 3.200000e+01 : f32
    %136 = vector.broadcast %cst_41 : f32 to vector<16x1xf32>
    %137 = arith.divf %135, %136 : vector<16x1xf32>
    %138 = arith.mulf %133, %133 : vector<16x32xf32>
    %cst_42 = arith.constant dense<0.000000e+00> : vector<16xf32>
    %139 = vector.multi_reduction <add>, %138, %cst_42 [1] : vector<16x32xf32> to vector<16xf32>
    %140 = vector.shape_cast %139 : vector<16xf32> to vector<16x1xf32>
    %cst_43 = arith.constant 3.200000e+01 : f32
    %141 = vector.broadcast %cst_43 : f32 to vector<16x1xf32>
    %142 = arith.divf %140, %141 : vector<16x1xf32>
    %143 = arith.mulf %137, %137 : vector<16x1xf32>
    %144 = arith.subf %142, %143 : vector<16x1xf32>
    %145 = vector.broadcast %137 : vector<16x1xf32> to vector<16x32xf32>
    %146 = arith.subf %133, %145 : vector<16x32xf32>
    %cst_44 = arith.constant 9.99999974E-6 : f32
    %147 = vector.broadcast %cst_44 : f32 to vector<16x1xf32>
    %148 = arith.addf %144, %147 : vector<16x1xf32>
    %149 = math.rsqrt %148 : vector<16x1xf32>
    %150 = vector.broadcast %149 : vector<16x1xf32> to vector<16x32xf32>
    %151 = arith.mulf %146, %150 : vector<16x32xf32>
    %c0_45 = arith.constant 0 : index
    %c0_46 = arith.constant 0 : index
    %c0_47 = arith.constant 0 : index
    %152 = vector.load %arg24[%c0_45, %c0_46, %c0_47] : memref<1x1x32xf32, #tpu.memory_space<vmem>>, vector<1x1x32xf32>
    %153 = vector.shape_cast %152 : vector<1x1x32xf32> to vector<1x32xf32>
    %154 = vector.broadcast %153 : vector<1x32xf32> to vector<16x32xf32>
    %155 = arith.mulf %151, %154 : vector<16x32xf32>
    %c0_48 = arith.constant 0 : index
    %c0_49 = arith.constant 0 : index
    %c0_50 = arith.constant 0 : index
    %156 = vector.load %arg25[%c0_48, %c0_49, %c0_50] : memref<1x1x32xf32, #tpu.memory_space<vmem>>, vector<1x1x32xf32>
    %157 = vector.shape_cast %156 : vector<1x1x32xf32> to vector<1x32xf32>
    %158 = vector.broadcast %157 : vector<1x32xf32> to vector<16x32xf32>
    %159 = arith.addf %155, %158 : vector<16x32xf32>
    %160 = arith.truncf %159 : vector<16x32xf32> to vector<16x32xbf16>
    %c0_51 = arith.constant 0 : index
    %c0_52 = arith.constant 0 : index
    %c0_53 = arith.constant 0 : index
    %161 = vector.load %arg12[%c0_51, %c0_52, %c0_53] : memref<1x32x32xbf16, #tpu.memory_space<vmem>>, vector<1x32x32xbf16>
    %162 = vector.shape_cast %161 : vector<1x32x32xbf16> to vector<32x32xbf16>
    %cst_54 = arith.constant dense<0.000000e+00> : vector<16x32xf32>
    %163 = tpu.matmul %160, %162, %cst_54 {dimension_numbers = #tpu.dot_dimension_numbers<[1], [0], [0], [1], [0, 0, 1, 1], [], []>} : vector<16x32xbf16>, vector<32x32xbf16>, vector<16x32xf32> -> vector<16x32xf32>
    %c0_55 = arith.constant 0 : index
    %c0_56 = arith.constant 0 : index
    %c0_57 = arith.constant 0 : index
    %164 = vector.load %arg13[%c0_55, %c0_56, %c0_57] : memref<1x1x32xf32, #tpu.memory_space<vmem>>, vector<1x1x32xf32>
    %165 = vector.shape_cast %164 : vector<1x1x32xf32> to vector<1x32xf32>
    %166 = vector.broadcast %165 : vector<1x32xf32> to vector<16x32xf32>
    %167 = arith.addf %163, %166 : vector<16x32xf32>
    %cst_58 = arith.constant 0.353553385 : f32
    %168 = vector.broadcast %cst_58 : f32 to vector<16x32xf32>
    %169 = arith.mulf %167, %168 : vector<16x32xf32>
    %c0_59 = arith.constant 0 : index
    %c0_60 = arith.constant 0 : index
    %c0_61 = arith.constant 0 : index
    %170 = vector.load %arg14[%c0_59, %c0_60, %c0_61] : memref<1x32x32xbf16, #tpu.memory_space<vmem>>, vector<1x32x32xbf16>
    %171 = vector.shape_cast %170 : vector<1x32x32xbf16> to vector<32x32xbf16>
    %cst_62 = arith.constant dense<0.000000e+00> : vector<16x32xf32>
    %172 = tpu.matmul %5, %171, %cst_62 {dimension_numbers = #tpu.dot_dimension_numbers<[1], [0], [0], [1], [0, 0, 1, 1], [], []>} : vector<16x32xbf16>, vector<32x32xbf16>, vector<16x32xf32> -> vector<16x32xf32>
    %c0_63 = arith.constant 0 : index
    %c0_64 = arith.constant 0 : index
    %c0_65 = arith.constant 0 : index
    %173 = vector.load %arg15[%c0_63, %c0_64, %c0_65] : memref<1x1x32xf32, #tpu.memory_space<vmem>>, vector<1x1x32xf32>
    %174 = vector.shape_cast %173 : vector<1x1x32xf32> to vector<1x32xf32>
    %175 = vector.broadcast %174 : vector<1x32xf32> to vector<16x32xf32>
    %176 = arith.addf %172, %175 : vector<16x32xf32>
    %c0_66 = arith.constant 0 : index
    %c0_67 = arith.constant 0 : index
    %c0_68 = arith.constant 0 : index
    %177 = vector.load %arg16[%c0_66, %c0_67, %c0_68] : memref<1x32x32xbf16, #tpu.memory_space<vmem>>, vector<1x32x32xbf16>
    %178 = vector.shape_cast %177 : vector<1x32x32xbf16> to vector<32x32xbf16>
    %cst_69 = arith.constant dense<0.000000e+00> : vector<16x32xf32>
    %179 = tpu.matmul %5, %178, %cst_69 {dimension_numbers = #tpu.dot_dimension_numbers<[1], [0], [0], [1], [0, 0, 1, 1], [], []>} : vector<16x32xbf16>, vector<32x32xbf16>, vector<16x32xf32> -> vector<16x32xf32>
    %c0_70 = arith.constant 0 : index
    %c0_71 = arith.constant 0 : index
    %c0_72 = arith.constant 0 : index
    %180 = vector.load %arg17[%c0_70, %c0_71, %c0_72] : memref<1x1x32xf32, #tpu.memory_space<vmem>>, vector<1x1x32xf32>
    %181 = vector.shape_cast %180 : vector<1x1x32xf32> to vector<1x32xf32>
    %182 = vector.broadcast %181 : vector<1x32xf32> to vector<16x32xf32>
    %183 = arith.addf %179, %182 : vector<16x32xf32>
    %184 = vector.extract_strided_slice %169 {offsets = [0, 0], sizes = [8, 32], strides = [1, 1]} : vector<16x32xf32> to vector<8x32xf32>
    %185 = vector.extract_strided_slice %184 {offsets = [0, 0], sizes = [8, 8], strides = [1, 1]} : vector<8x32xf32> to vector<8x8xf32>
    %186 = vector.extract_strided_slice %184 {offsets = [0, 8], sizes = [8, 8], strides = [1, 1]} : vector<8x32xf32> to vector<8x8xf32>
    %187 = vector.extract_strided_slice %184 {offsets = [0, 16], sizes = [8, 8], strides = [1, 1]} : vector<8x32xf32> to vector<8x8xf32>
    %188 = vector.extract_strided_slice %184 {offsets = [0, 24], sizes = [8, 8], strides = [1, 1]} : vector<8x32xf32> to vector<8x8xf32>
    %189 = vector.extract_strided_slice %169 {offsets = [8, 0], sizes = [8, 32], strides = [1, 1]} : vector<16x32xf32> to vector<8x32xf32>
    %190 = vector.extract_strided_slice %189 {offsets = [0, 0], sizes = [8, 8], strides = [1, 1]} : vector<8x32xf32> to vector<8x8xf32>
    %191 = vector.extract_strided_slice %189 {offsets = [0, 8], sizes = [8, 8], strides = [1, 1]} : vector<8x32xf32> to vector<8x8xf32>
    %192 = vector.extract_strided_slice %189 {offsets = [0, 16], sizes = [8, 8], strides = [1, 1]} : vector<8x32xf32> to vector<8x8xf32>
    %193 = vector.extract_strided_slice %189 {offsets = [0, 24], sizes = [8, 8], strides = [1, 1]} : vector<8x32xf32> to vector<8x8xf32>
    %194 = vector.shape_cast %185 : vector<8x8xf32> to vector<1x8x8xf32>
    %195 = vector.shape_cast %186 : vector<8x8xf32> to vector<1x8x8xf32>
    %196 = vector.shape_cast %187 : vector<8x8xf32> to vector<1x8x8xf32>
    %197 = vector.shape_cast %188 : vector<8x8xf32> to vector<1x8x8xf32>
    %198 = vector.shape_cast %190 : vector<8x8xf32> to vector<1x8x8xf32>
    %199 = vector.shape_cast %191 : vector<8x8xf32> to vector<1x8x8xf32>
    %200 = vector.shape_cast %192 : vector<8x8xf32> to vector<1x8x8xf32>
    %201 = vector.shape_cast %193 : vector<8x8xf32> to vector<1x8x8xf32>
    %202 = tpu.concatenate %194, %195, %196, %197, %198, %199, %200, %201 in 0 : vector<1x8x8xf32>, vector<1x8x8xf32>, vector<1x8x8xf32>, vector<1x8x8xf32>, vector<1x8x8xf32>, vector<1x8x8xf32>, vector<1x8x8xf32>, vector<1x8x8xf32> -> vector<8x8x8xf32>
    %203 = arith.truncf %202 : vector<8x8x8xf32> to vector<8x8x8xbf16>
    %204 = vector.extract_strided_slice %176 {offsets = [0, 0], sizes = [8, 32], strides = [1, 1]} : vector<16x32xf32> to vector<8x32xf32>
    %205 = vector.extract_strided_slice %204 {offsets = [0, 0], sizes = [8, 8], strides = [1, 1]} : vector<8x32xf32> to vector<8x8xf32>
    %206 = vector.extract_strided_slice %204 {offsets = [0, 8], sizes = [8, 8], strides = [1, 1]} : vector<8x32xf32> to vector<8x8xf32>
    %207 = vector.extract_strided_slice %204 {offsets = [0, 16], sizes = [8, 8], strides = [1, 1]} : vector<8x32xf32> to vector<8x8xf32>
    %208 = vector.extract_strided_slice %204 {offsets = [0, 24], sizes = [8, 8], strides = [1, 1]} : vector<8x32xf32> to vector<8x8xf32>
    %209 = vector.extract_strided_slice %176 {offsets = [8, 0], sizes = [8, 32], strides = [1, 1]} : vector<16x32xf32> to vector<8x32xf32>
    %210 = vector.extract_strided_slice %209 {offsets = [0, 0], sizes = [8, 8], strides = [1, 1]} : vector<8x32xf32> to vector<8x8xf32>
    %211 = vector.extract_strided_slice %209 {offsets = [0, 8], sizes = [8, 8], strides = [1, 1]} : vector<8x32xf32> to vector<8x8xf32>
    %212 = vector.extract_strided_slice %209 {offsets = [0, 16], sizes = [8, 8], strides = [1, 1]} : vector<8x32xf32> to vector<8x8xf32>
    %213 = vector.extract_strided_slice %209 {offsets = [0, 24], sizes = [8, 8], strides = [1, 1]} : vector<8x32xf32> to vector<8x8xf32>
    %214 = vector.shape_cast %205 : vector<8x8xf32> to vector<1x8x8xf32>
    %215 = vector.shape_cast %206 : vector<8x8xf32> to vector<1x8x8xf32>
    %216 = vector.shape_cast %207 : vector<8x8xf32> to vector<1x8x8xf32>
    %217 = vector.shape_cast %208 : vector<8x8xf32> to vector<1x8x8xf32>
    %218 = vector.shape_cast %210 : vector<8x8xf32> to vector<1x8x8xf32>
    %219 = vector.shape_cast %211 : vector<8x8xf32> to vector<1x8x8xf32>
    %220 = vector.shape_cast %212 : vector<8x8xf32> to vector<1x8x8xf32>
    %221 = vector.shape_cast %213 : vector<8x8xf32> to vector<1x8x8xf32>
    %222 = tpu.concatenate %214, %215, %216, %217, %218, %219, %220, %221 in 0 : vector<1x8x8xf32>, vector<1x8x8xf32>, vector<1x8x8xf32>, vector<1x8x8xf32>, vector<1x8x8xf32>, vector<1x8x8xf32>, vector<1x8x8xf32>, vector<1x8x8xf32> -> vector<8x8x8xf32>
    %223 = arith.truncf %222 : vector<8x8x8xf32> to vector<8x8x8xbf16>
    %224 = vector.extract_strided_slice %183 {offsets = [0, 0], sizes = [8, 32], strides = [1, 1]} : vector<16x32xf32> to vector<8x32xf32>
    %225 = vector.extract_strided_slice %224 {offsets = [0, 0], sizes = [8, 8], strides = [1, 1]} : vector<8x32xf32> to vector<8x8xf32>
    %226 = vector.extract_strided_slice %224 {offsets = [0, 8], sizes = [8, 8], strides = [1, 1]} : vector<8x32xf32> to vector<8x8xf32>
    %227 = vector.extract_strided_slice %224 {offsets = [0, 16], sizes = [8, 8], strides = [1, 1]} : vector<8x32xf32> to vector<8x8xf32>
    %228 = vector.extract_strided_slice %224 {offsets = [0, 24], sizes = [8, 8], strides = [1, 1]} : vector<8x32xf32> to vector<8x8xf32>
    %229 = vector.extract_strided_slice %183 {offsets = [8, 0], sizes = [8, 32], strides = [1, 1]} : vector<16x32xf32> to vector<8x32xf32>
    %230 = vector.extract_strided_slice %229 {offsets = [0, 0], sizes = [8, 8], strides = [1, 1]} : vector<8x32xf32> to vector<8x8xf32>
    %231 = vector.extract_strided_slice %229 {offsets = [0, 8], sizes = [8, 8], strides = [1, 1]} : vector<8x32xf32> to vector<8x8xf32>
    %232 = vector.extract_strided_slice %229 {offsets = [0, 16], sizes = [8, 8], strides = [1, 1]} : vector<8x32xf32> to vector<8x8xf32>
    %233 = vector.extract_strided_slice %229 {offsets = [0, 24], sizes = [8, 8], strides = [1, 1]} : vector<8x32xf32> to vector<8x8xf32>
    %234 = vector.shape_cast %225 : vector<8x8xf32> to vector<1x8x8xf32>
    %235 = vector.shape_cast %226 : vector<8x8xf32> to vector<1x8x8xf32>
    %236 = vector.shape_cast %227 : vector<8x8xf32> to vector<1x8x8xf32>
    %237 = vector.shape_cast %228 : vector<8x8xf32> to vector<1x8x8xf32>
    %238 = vector.shape_cast %230 : vector<8x8xf32> to vector<1x8x8xf32>
    %239 = vector.shape_cast %231 : vector<8x8xf32> to vector<1x8x8xf32>
    %240 = vector.shape_cast %232 : vector<8x8xf32> to vector<1x8x8xf32>
    %241 = vector.shape_cast %233 : vector<8x8xf32> to vector<1x8x8xf32>
    %242 = tpu.concatenate %234, %235, %236, %237, %238, %239, %240, %241 in 0 : vector<1x8x8xf32>, vector<1x8x8xf32>, vector<1x8x8xf32>, vector<1x8x8xf32>, vector<1x8x8xf32>, vector<1x8x8xf32>, vector<1x8x8xf32>, vector<1x8x8xf32> -> vector<8x8x8xf32>
    %243 = arith.truncf %242 : vector<8x8x8xf32> to vector<8x8x8xbf16>
    "tpu.trace_start"() <{level = 10 : i32, message = "zqd,zkd->zqk"}> : () -> ()
    %cst_73 = arith.constant dense<0.000000e+00> : vector<8x8x8xf32>
    %244 = tpu.matmul %203, %223, %cst_73 {dimension_numbers = #tpu.dot_dimension_numbers<[2], [2], [1], [1], [0, 0, 0, 1, 1, 1], [0], [0]>} : vector<8x8x8xbf16>, vector<8x8x8xbf16>, vector<8x8x8xf32> -> vector<8x8x8xf32>
    "tpu.trace_stop"() : () -> ()
    %cst_74 = arith.constant dense<0xFF800000> : vector<8x8xf32>
    %245 = vector.multi_reduction <maximumf>, %244, %cst_74 [2] : vector<8x8x8xf32> to vector<8x8xf32>
    %246 = vector.shape_cast %245 : vector<8x8xf32> to vector<8x8x1xf32>
    %247 = vector.broadcast %246 : vector<8x8x1xf32> to vector<8x8x8xf32>
    %248 = arith.subf %244, %247 : vector<8x8x8xf32>
    %249 = math.exp %248 : vector<8x8x8xf32>
    %cst_75 = arith.constant dense<0.000000e+00> : vector<8x8xf32>
    %250 = vector.multi_reduction <add>, %249, %cst_75 [2] : vector<8x8x8xf32> to vector<8x8xf32>
    %251 = vector.shape_cast %250 : vector<8x8xf32> to vector<8x8x1xf32>
    %252 = tpu.reciprocal %251 {approx = true} : vector<8x8x1xf32> -> vector<8x8x1xf32>
    %253 = vector.broadcast %252 : vector<8x8x1xf32> to vector<8x8x8xf32>
    %254 = arith.mulf %249, %253 : vector<8x8x8xf32>
    %c0_76 = arith.constant 0 : index
    %c0_77 = arith.constant 0 : index
    %c0_78 = arith.constant 0 : index
    %c0_79 = arith.constant 0 : index
    %255 = vector.load %arg32[%c0_76, %c0_77, %c0_78, %c0_79] : memref<1x8x8x8xf32, #tpu.memory_space<vmem>>, vector<1x8x8x8xf32>
    %256 = vector.shape_cast %255 : vector<1x8x8x8xf32> to vector<8x8x8xf32>
    %257 = vector.shape_cast %254 : vector<8x8x8xf32> to vector<1x8x8x8xf32>
    tpu.vector_store %arg32[%c0_76, %c0_77, %c0_78, %c0_79], %257 {strides = array<i32>} : memref<1x8x8x8xf32, #tpu.memory_space<vmem>>, vector<1x8x8x8xf32>,
    %258 = arith.truncf %254 : vector<8x8x8xf32> to vector<8x8x8xbf16>
    "tpu.trace_start"() <{level = 10 : i32, message = "zqk,zkd->zqd"}> : () -> ()
    %cst_80 = arith.constant dense<0.000000e+00> : vector<8x8x8xf32>
    %259 = tpu.matmul %258, %243, %cst_80 {dimension_numbers = #tpu.dot_dimension_numbers<[2], [1], [1], [2], [0, 0, 0, 1, 1, 2], [0], [0]>} : vector<8x8x8xbf16>, vector<8x8x8xbf16>, vector<8x8x8xf32> -> vector<8x8x8xf32>
    "tpu.trace_stop"() : () -> ()
    %260 = vector.extract_strided_slice %259 {offsets = [0, 0, 0], sizes = [1, 8, 8], strides = [1, 1, 1]} : vector<8x8x8xf32> to vector<1x8x8xf32>
    %261 = vector.shape_cast %260 : vector<1x8x8xf32> to vector<8x8xf32>
    %262 = vector.extract_strided_slice %259 {offsets = [1, 0, 0], sizes = [1, 8, 8], strides = [1, 1, 1]} : vector<8x8x8xf32> to vector<1x8x8xf32>
    %263 = vector.shape_cast %262 : vector<1x8x8xf32> to vector<8x8xf32>
    %264 = vector.extract_strided_slice %259 {offsets = [2, 0, 0], sizes = [1, 8, 8], strides = [1, 1, 1]} : vector<8x8x8xf32> to vector<1x8x8xf32>
    %265 = vector.shape_cast %264 : vector<1x8x8xf32> to vector<8x8xf32>
    %266 = vector.extract_strided_slice %259 {offsets = [3, 0, 0], sizes = [1, 8, 8], strides = [1, 1, 1]} : vector<8x8x8xf32> to vector<1x8x8xf32>
    %267 = vector.shape_cast %266 : vector<1x8x8xf32> to vector<8x8xf32>
    %268 = tpu.concatenate %261, %263, %265, %267 in 1 : vector<8x8xf32>, vector<8x8xf32>, vector<8x8xf32>, vector<8x8xf32> -> vector<8x32xf32>
    %269 = vector.extract_strided_slice %259 {offsets = [4, 0, 0], sizes = [1, 8, 8], strides = [1, 1, 1]} : vector<8x8x8xf32> to vector<1x8x8xf32>
    %270 = vector.shape_cast %269 : vector<1x8x8xf32> to vector<8x8xf32>
    %271 = vector.extract_strided_slice %259 {offsets = [5, 0, 0], sizes = [1, 8, 8], strides = [1, 1, 1]} : vector<8x8x8xf32> to vector<1x8x8xf32>
    %272 = vector.shape_cast %271 : vector<1x8x8xf32> to vector<8x8xf32>
    %273 = vector.extract_strided_slice %259 {offsets = [6, 0, 0], sizes = [1, 8, 8], strides = [1, 1, 1]} : vector<8x8x8xf32> to vector<1x8x8xf32>
    %274 = vector.shape_cast %273 : vector<1x8x8xf32> to vector<8x8xf32>
    %275 = vector.extract_strided_slice %259 {offsets = [7, 0, 0], sizes = [1, 8, 8], strides = [1, 1, 1]} : vector<8x8x8xf32> to vector<1x8x8xf32>
    %276 = vector.shape_cast %275 : vector<1x8x8xf32> to vector<8x8xf32>
    %277 = tpu.concatenate %270, %272, %274, %276 in 1 : vector<8x8xf32>, vector<8x8xf32>, vector<8x8xf32>, vector<8x8xf32> -> vector<8x32xf32>
    %278 = tpu.concatenate %268, %277 in 0 : vector<8x32xf32>, vector<8x32xf32> -> vector<16x32xf32>
    %279 = arith.truncf %278 : vector<16x32xf32> to vector<16x32xbf16>
    %c0_81 = arith.constant 0 : index
    %c0_82 = arith.constant 0 : index
    %c0_83 = arith.constant 0 : index
    %280 = vector.load %arg18[%c0_81, %c0_82, %c0_83] : memref<1x32x32xbf16, #tpu.memory_space<vmem>>, vector<1x32x32xbf16>
    %281 = vector.shape_cast %280 : vector<1x32x32xbf16> to vector<32x32xbf16>
    %cst_84 = arith.constant dense<0.000000e+00> : vector<16x32xf32>
    %282 = tpu.matmul %279, %281, %cst_84 {dimension_numbers = #tpu.dot_dimension_numbers<[1], [0], [0], [1], [0, 0, 1, 1], [], []>} : vector<16x32xbf16>, vector<32x32xbf16>, vector<16x32xf32> -> vector<16x32xf32>
    %c0_85 = arith.constant 0 : index
    %c0_86 = arith.constant 0 : index
    %c0_87 = arith.constant 0 : index
    %283 = vector.load %arg19[%c0_85, %c0_86, %c0_87] : memref<1x1x32xf32, #tpu.memory_space<vmem>>, vector<1x1x32xf32>
    %284 = vector.shape_cast %283 : vector<1x1x32xf32> to vector<1x32xf32>
    %285 = vector.broadcast %284 : vector<1x32xf32> to vector<16x32xf32>
    %286 = arith.addf %282, %285 : vector<16x32xf32>
    %287 = arith.addf %159, %286 : vector<16x32xf32>
    %cst_88 = arith.constant dense<0.000000e+00> : vector<16xf32>
    %288 = vector.multi_reduction <add>, %287, %cst_88 [1] : vector<16x32xf32> to vector<16xf32>
    %289 = vector.shape_cast %288 : vector<16xf32> to vector<16x1xf32>
    %cst_89 = arith.constant 3.200000e+01 : f32
    %290 = vector.broadcast %cst_89 : f32 to vector<16x1xf32>
    %291 = arith.divf %289, %290 : vector<16x1xf32>
    %292 = arith.mulf %287, %287 : vector<16x32xf32>
    %cst_90 = arith.constant dense<0.000000e+00> : vector<16xf32>
    %293 = vector.multi_reduction <add>, %292, %cst_90 [1] : vector<16x32xf32> to vector<16xf32>
    %294 = vector.shape_cast %293 : vector<16xf32> to vector<16x1xf32>
    %cst_91 = arith.constant 3.200000e+01 : f32
    %295 = vector.broadcast %cst_91 : f32 to vector<16x1xf32>
    %296 = arith.divf %294, %295 : vector<16x1xf32>
    %297 = arith.mulf %291, %291 : vector<16x1xf32>
    %298 = arith.subf %296, %297 : vector<16x1xf32>
    %299 = vector.broadcast %291 : vector<16x1xf32> to vector<16x32xf32>
    %300 = arith.subf %287, %299 : vector<16x32xf32>
    %cst_92 = arith.constant 9.99999974E-6 : f32
    %301 = vector.broadcast %cst_92 : f32 to vector<16x1xf32>
    %302 = arith.addf %298, %301 : vector<16x1xf32>
    %303 = math.rsqrt %302 : vector<16x1xf32>
    %304 = vector.broadcast %303 : vector<16x1xf32> to vector<16x32xf32>
    %305 = arith.mulf %300, %304 : vector<16x32xf32>
    %c0_93 = arith.constant 0 : index
    %c0_94 = arith.constant 0 : index
    %c0_95 = arith.constant 0 : index
    %306 = vector.load %arg26[%c0_93, %c0_94, %c0_95] : memref<1x1x32xf32, #tpu.memory_space<vmem>>, vector<1x1x32xf32>
    %307 = vector.shape_cast %306 : vector<1x1x32xf32> to vector<1x32xf32>
    %308 = vector.broadcast %307 : vector<1x32xf32> to vector<16x32xf32>
    %309 = arith.mulf %305, %308 : vector<16x32xf32>
    %c0_96 = arith.constant 0 : index
    %c0_97 = arith.constant 0 : index
    %c0_98 = arith.constant 0 : index
    %310 = vector.load %arg27[%c0_96, %c0_97, %c0_98] : memref<1x1x32xf32, #tpu.memory_space<vmem>>, vector<1x1x32xf32>
    %311 = vector.shape_cast %310 : vector<1x1x32xf32> to vector<1x32xf32>
    %312 = vector.broadcast %311 : vector<1x32xf32> to vector<16x32xf32>
    %313 = arith.addf %309, %312 : vector<16x32xf32>
    %314 = arith.truncf %313 : vector<16x32xf32> to vector<16x32xbf16>
    %c0_99 = arith.constant 0 : index
    %c0_100 = arith.constant 0 : index
    %c0_101 = arith.constant 0 : index
    %315 = vector.load %arg20[%c0_99, %c0_100, %c0_101] : memref<1x32x64xbf16, #tpu.memory_space<vmem>>, vector<1x32x64xbf16>
    %316 = vector.shape_cast %315 : vector<1x32x64xbf16> to vector<32x64xbf16>
    %cst_102 = arith.constant dense<0.000000e+00> : vector<16x64xf32>
    %317 = tpu.matmul %314, %316, %cst_102 {dimension_numbers = #tpu.dot_dimension_numbers<[1], [0], [0], [1], [0, 0, 1, 1], [], []>} : vector<16x32xbf16>, vector<32x64xbf16>, vector<16x64xf32> -> vector<16x64xf32>
    %c0_103 = arith.constant 0 : index
    %c0_104 = arith.constant 0 : index
    %c0_105 = arith.constant 0 : index
    %318 = vector.load %arg21[%c0_103, %c0_104, %c0_105] : memref<1x1x64xf32, #tpu.memory_space<vmem>>, vector<1x1x64xf32>
    %319 = vector.shape_cast %318 : vector<1x1x64xf32> to vector<1x64xf32>
    %320 = vector.broadcast %319 : vector<1x64xf32> to vector<16x64xf32>
    %321 = arith.addf %317, %320 : vector<16x64xf32>
    %cst_106 = arith.constant 0.000000e+00 : f32
    %322 = vector.broadcast %cst_106 : f32 to vector<16x64xf32>
    %323 = arith.maximumf %321, %322 : vector<16x64xf32>
    %324 = arith.truncf %323 : vector<16x64xf32> to vector<16x64xbf16>
    %c0_107 = arith.constant 0 : index
    %c0_108 = arith.constant 0 : index
    %c0_109 = arith.constant 0 : index
    %325 = vector.load %arg22[%c0_107, %c0_108, %c0_109] : memref<1x64x32xbf16, #tpu.memory_space<vmem>>, vector<1x64x32xbf16>
    %326 = vector.shape_cast %325 : vector<1x64x32xbf16> to vector<64x32xbf16>
    %cst_110 = arith.constant dense<0.000000e+00> : vector<16x32xf32>
    %327 = tpu.matmul %324, %326, %cst_110 {dimension_numbers = #tpu.dot_dimension_numbers<[1], [0], [0], [1], [0, 0, 1, 1], [], []>} : vector<16x64xbf16>, vector<64x32xbf16>, vector<16x32xf32> -> vector<16x32xf32>
    %c0_111 = arith.constant 0 : index
    %c0_112 = arith.constant 0 : index
    %c0_113 = arith.constant 0 : index
    %328 = vector.load %arg23[%c0_111, %c0_112, %c0_113] : memref<1x1x32xf32, #tpu.memory_space<vmem>>, vector<1x1x32xf32>
    %329 = vector.shape_cast %328 : vector<1x1x32xf32> to vector<1x32xf32>
    %330 = vector.broadcast %329 : vector<1x32xf32> to vector<16x32xf32>
    %331 = arith.addf %327, %330 : vector<16x32xf32>
    %332 = arith.addf %313, %331 : vector<16x32xf32>
    %cst_114 = arith.constant dense<0.000000e+00> : vector<16xf32>
    %333 = vector.multi_reduction <add>, %332, %cst_114 [1] : vector<16x32xf32> to vector<16xf32>
    %334 = vector.shape_cast %333 : vector<16xf32> to vector<16x1xf32>
    %cst_115 = arith.constant 3.200000e+01 : f32
    %335 = vector.broadcast %cst_115 : f32 to vector<16x1xf32>
    %336 = arith.divf %334, %335 : vector<16x1xf32>
    %337 = arith.mulf %332, %332 : vector<16x32xf32>
    %cst_116 = arith.constant dense<0.000000e+00> : vector<16xf32>
    %338 = vector.multi_reduction <add>, %337, %cst_116 [1] : vector<16x32xf32> to vector<16xf32>
    %339 = vector.shape_cast %338 : vector<16xf32> to vector<16x1xf32>
    %cst_117 = arith.constant 3.200000e+01 : f32
    %340 = vector.broadcast %cst_117 : f32 to vector<16x1xf32>
    %341 = arith.divf %339, %340 : vector<16x1xf32>
    %342 = arith.mulf %336, %336 : vector<16x1xf32>
    %343 = arith.subf %341, %342 : vector<16x1xf32>
    %344 = vector.broadcast %336 : vector<16x1xf32> to vector<16x32xf32>
    %345 = arith.subf %332, %344 : vector<16x32xf32>
    %cst_118 = arith.constant 9.99999974E-6 : f32
    %346 = vector.broadcast %cst_118 : f32 to vector<16x1xf32>
    %347 = arith.addf %343, %346 : vector<16x1xf32>
    %348 = math.rsqrt %347 : vector<16x1xf32>
    %349 = vector.broadcast %348 : vector<16x1xf32> to vector<16x32xf32>
    %350 = arith.mulf %345, %349 : vector<16x32xf32>
    %c0_119 = arith.constant 0 : index
    %c0_120 = arith.constant 0 : index
    %c0_121 = arith.constant 0 : index
    %351 = vector.load %arg28[%c0_119, %c0_120, %c0_121] : memref<1x1x32xf32, #tpu.memory_space<vmem>>, vector<1x1x32xf32>
    %352 = vector.shape_cast %351 : vector<1x1x32xf32> to vector<1x32xf32>
    %353 = vector.broadcast %352 : vector<1x32xf32> to vector<16x32xf32>
    %354 = arith.mulf %350, %353 : vector<16x32xf32>
    %c0_122 = arith.constant 0 : index
    %c0_123 = arith.constant 0 : index
    %c0_124 = arith.constant 0 : index
    %355 = vector.load %arg29[%c0_122, %c0_123, %c0_124] : memref<1x1x32xf32, #tpu.memory_space<vmem>>, vector<1x1x32xf32>
    %356 = vector.shape_cast %355 : vector<1x1x32xf32> to vector<1x32xf32>
    %357 = vector.broadcast %356 : vector<1x32xf32> to vector<16x32xf32>
    %358 = arith.addf %354, %357 : vector<16x32xf32>
    %c0_125 = arith.constant 0 : index
    %c0_126 = arith.constant 0 : index
    %359 = vector.load %arg30[%c0_125, %c0_126] : memref<16x32xf32, #tpu.memory_space<vmem>>, vector<16x32xf32>
    tpu.vector_store %arg30[%c0_125, %c0_126], %358 {strides = array<i32>} : memref<16x32xf32, #tpu.memory_space<vmem>>, vector<16x32xf32>,
    return
  }
  func.func @transform_0(%arg0: i32, %arg1: i32) -> (i32, i32) {
    %c0_i32 = arith.constant 0 : i32
    %c0_i32_0 = arith.constant 0 : i32
    return %arg0, %c0_i32 : i32, i32
  }
  func.func @transform_1(%arg0: i32, %arg1: i32) -> (i32, i32) {
    %c0_i32 = arith.constant 0 : i32
    %c0_i32_0 = arith.constant 0 : i32
    return %arg0, %c0_i32 : i32, i32
  }
  func.func @transform_2(%arg0: i32, %arg1: i32) -> (i32, i32, i32) {
    %c0_i32 = arith.constant 0 : i32
    %c0_i32_0 = arith.constant 0 : i32
    %c0_i32_1 = arith.constant 0 : i32
    return %arg1, %c0_i32, %c0_i32_0 : i32, i32, i32
  }
  func.func @transform_3(%arg0: i32, %arg1: i32) -> (i32, i32, i32) {
    %c0_i32 = arith.constant 0 : i32
    %c0_i32_0 = arith.constant 0 : i32
    %c0_i32_1 = arith.constant 0 : i32
    return %arg1, %c0_i32, %c0_i32_0 : i32, i32, i32
  }
  func.func @transform_4(%arg0: i32, %arg1: i32) -> (i32, i32, i32) {
    %c0_i32 = arith.constant 0 : i32
    %c0_i32_0 = arith.constant 0 : i32
    %c0_i32_1 = arith.constant 0 : i32
    return %arg1, %c0_i32, %c0_i32_0 : i32, i32, i32
  }
  func.func @transform_5(%arg0: i32, %arg1: i32) -> (i32, i32, i32) {
    %c0_i32 = arith.constant 0 : i32
    %c0_i32_0 = arith.constant 0 : i32
    %c0_i32_1 = arith.constant 0 : i32
    return %arg1, %c0_i32, %c0_i32_0 : i32, i32, i32
  }
  func.func @transform_6(%arg0: i32, %arg1: i32) -> (i32, i32, i32) {
    %c0_i32 = arith.constant 0 : i32
    %c0_i32_0 = arith.constant 0 : i32
    %c0_i32_1 = arith.constant 0 : i32
    return %arg1, %c0_i32, %c0_i32_0 : i32, i32, i32
  }
  func.func @transform_7(%arg0: i32, %arg1: i32) -> (i32, i32, i32) {
    %c0_i32 = arith.constant 0 : i32
    %c0_i32_0 = arith.constant 0 : i32
    %c0_i32_1 = arith.constant 0 : i32
    return %arg1, %c0_i32, %c0_i32_0 : i32, i32, i32
  }
  func.func @transform_8(%arg0: i32, %arg1: i32) -> (i32, i32, i32) {
    %c0_i32 = arith.constant 0 : i32
    %c0_i32_0 = arith.constant 0 : i32
    %c0_i32_1 = arith.constant 0 : i32
    return %arg1, %c0_i32, %c0_i32_0 : i32, i32, i32
  }
  func.func @transform_9(%arg0: i32, %arg1: i32) -> (i32, i32, i32) {
    %c0_i32 = arith.constant 0 : i32
    %c0_i32_0 = arith.constant 0 : i32
    %c0_i32_1 = arith.constant 0 : i32
    return %arg1, %c0_i32, %c0_i32_0 : i32, i32, i32
  }
  func.func @transform_10(%arg0: i32, %arg1: i32) -> (i32, i32, i32) {
    %c0_i32 = arith.constant 0 : i32
    %c0_i32_0 = arith.constant 0 : i32
    %c0_i32_1 = arith.constant 0 : i32
    return %arg1, %c0_i32, %c0_i32_0 : i32, i32, i32
  }
  func.func @transform_11(%arg0: i32, %arg1: i32) -> (i32, i32, i32) {
    %c0_i32 = arith.constant 0 : i32
    %c0_i32_0 = arith.constant 0 : i32
    %c0_i32_1 = arith.constant 0 : i32
    return %arg1, %c0_i32, %c0_i32_0 : i32, i32, i32
  }
  func.func @transform_12(%arg0: i32, %arg1: i32) -> (i32, i32, i32) {
    %c0_i32 = arith.constant 0 : i32
    %c0_i32_0 = arith.constant 0 : i32
    %c0_i32_1 = arith.constant 0 : i32
    return %arg1, %c0_i32, %c0_i32_0 : i32, i32, i32
  }
  func.func @transform_13(%arg0: i32, %arg1: i32) -> (i32, i32, i32) {
    %c0_i32 = arith.constant 0 : i32
    %c0_i32_0 = arith.constant 0 : i32
    %c0_i32_1 = arith.constant 0 : i32
    return %arg1, %c0_i32, %c0_i32_0 : i32, i32, i32
  }
  func.func @transform_14(%arg0: i32, %arg1: i32) -> (i32, i32, i32) {
    %c0_i32 = arith.constant 0 : i32
    %c0_i32_0 = arith.constant 0 : i32
    %c0_i32_1 = arith.constant 0 : i32
    return %arg1, %c0_i32, %c0_i32_0 : i32, i32, i32
  }
  func.func @transform_15(%arg0: i32, %arg1: i32) -> (i32, i32, i32) {
    %c0_i32 = arith.constant 0 : i32
    %c0_i32_0 = arith.constant 0 : i32
    %c0_i32_1 = arith.constant 0 : i32
    return %arg1, %c0_i32, %c0_i32_0 : i32, i32, i32
  }
  func.func @transform_16(%arg0: i32, %arg1: i32) -> (i32, i32, i32) {
    %c0_i32 = arith.constant 0 : i32
    %c0_i32_0 = arith.constant 0 : i32
    %c0_i32_1 = arith.constant 0 : i32
    return %arg1, %c0_i32, %c0_i32_0 : i32, i32, i32
  }
  func.func @transform_17(%arg0: i32, %arg1: i32) -> (i32, i32, i32) {
    %c0_i32 = arith.constant 0 : i32
    %c0_i32_0 = arith.constant 0 : i32
    %c0_i32_1 = arith.constant 0 : i32
    return %arg1, %c0_i32, %c0_i32_0 : i32, i32, i32
  }
  func.func @transform_18(%arg0: i32, %arg1: i32) -> (i32, i32, i32) {
    %c0_i32 = arith.constant 0 : i32
    %c0_i32_0 = arith.constant 0 : i32
    %c0_i32_1 = arith.constant 0 : i32
    return %arg1, %c0_i32, %c0_i32_0 : i32, i32, i32
  }
  func.func @transform_19(%arg0: i32, %arg1: i32) -> (i32, i32, i32) {
    %c0_i32 = arith.constant 0 : i32
    %c0_i32_0 = arith.constant 0 : i32
    %c0_i32_1 = arith.constant 0 : i32
    return %arg1, %c0_i32, %c0_i32_0 : i32, i32, i32
  }
  func.func @transform_20(%arg0: i32, %arg1: i32) -> (i32, i32, i32) {
    %c0_i32 = arith.constant 0 : i32
    %c0_i32_0 = arith.constant 0 : i32
    %c0_i32_1 = arith.constant 0 : i32
    return %arg1, %c0_i32, %c0_i32_0 : i32, i32, i32
  }
  func.func @transform_21(%arg0: i32, %arg1: i32) -> (i32, i32, i32) {
    %c0_i32 = arith.constant 0 : i32
    %c0_i32_0 = arith.constant 0 : i32
    %c0_i32_1 = arith.constant 0 : i32
    return %arg1, %c0_i32, %c0_i32_0 : i32, i32, i32
  }
  func.func @transform_22(%arg0: i32, %arg1: i32) -> (i32, i32, i32) {
    %c0_i32 = arith.constant 0 : i32
    %c0_i32_0 = arith.constant 0 : i32
    %c0_i32_1 = arith.constant 0 : i32
    return %arg1, %c0_i32, %c0_i32_0 : i32, i32, i32
  }
  func.func @transform_23(%arg0: i32, %arg1: i32) -> (i32, i32, i32) {
    %c0_i32 = arith.constant 0 : i32
    %c0_i32_0 = arith.constant 0 : i32
    %c0_i32_1 = arith.constant 0 : i32
    return %arg1, %c0_i32, %c0_i32_0 : i32, i32, i32
  }
  func.func @transform_24(%arg0: i32, %arg1: i32) -> (i32, i32, i32) {
    %c0_i32 = arith.constant 0 : i32
    %c0_i32_0 = arith.constant 0 : i32
    %c0_i32_1 = arith.constant 0 : i32
    return %arg1, %c0_i32, %c0_i32_0 : i32, i32, i32
  }
  func.func @transform_25(%arg0: i32, %arg1: i32) -> (i32, i32, i32) {
    %c0_i32 = arith.constant 0 : i32
    %c0_i32_0 = arith.constant 0 : i32
    %c0_i32_1 = arith.constant 0 : i32
    return %arg1, %c0_i32, %c0_i32_0 : i32, i32, i32
  }
  func.func @transform_26(%arg0: i32, %arg1: i32) -> (i32, i32, i32) {
    %c0_i32 = arith.constant 0 : i32
    %c0_i32_0 = arith.constant 0 : i32
    %c0_i32_1 = arith.constant 0 : i32
    return %arg1, %c0_i32, %c0_i32_0 : i32, i32, i32
  }
  func.func @transform_27(%arg0: i32, %arg1: i32) -> (i32, i32, i32) {
    %c0_i32 = arith.constant 0 : i32
    %c0_i32_0 = arith.constant 0 : i32
    %c0_i32_1 = arith.constant 0 : i32
    return %arg1, %c0_i32, %c0_i32_0 : i32, i32, i32
  }
  func.func @transform_28(%arg0: i32, %arg1: i32) -> (i32, i32) {
    %c0_i32 = arith.constant 0 : i32
    %c0_i32_0 = arith.constant 0 : i32
    return %arg0, %c0_i32 : i32, i32
  }
  func.func @transform_29(%arg0: i32, %arg1: i32) -> (i32, i32, i32, i32) {
    %c0_i32 = arith.constant 0 : i32
    %c0_i32_0 = arith.constant 0 : i32
    %c0_i32_1 = arith.constant 0 : i32
    return %arg1, %arg0, %c0_i32, %c0_i32_0 : i32, i32, i32, i32
  }
  func.func @transform_30(%arg0: i32, %arg1: i32) -> (i32, i32, i32, i32) {
    %c0_i32 = arith.constant 0 : i32
    %c0_i32_0 = arith.constant 0 : i32
    %c0_i32_1 = arith.constant 0 : i32
    return %arg1, %arg0, %c0_i32, %c0_i32_0 : i32, i32, i32, i32
  }
}

</mosaic_0001>

<llo_original>
// kernel: tpu_custom_call.1
$region0: #{tpu_custom_call.1}
  #allocation0 [shape = 'u32[]', space=smem, size = 0x4, offset = 0x4, fixed_abs, tag = 'smem constant byte address 0x4 - core index']
  #allocation1 [shape = 'u32[72,128]{1,0:T(1,128)}', space=vmem, size = 0x9000, scoped, tag = 'internal scratch']
  %s0 = inlined_call_operand.smem [shape: u32[31], index: -1, kind: input, shape index: {}]
  %s1 = sld [smem:[%s0]]
  %s2 = scalar_lea.smem %s0, 1
  %s3 = sld [smem:[%s2]]
  %s4 = scalar_lea.smem %s0, 2
  %s5 = sld [smem:[%s4]]
  %s6 = scalar_lea.smem %s0, 3
  %s7 = sld [smem:[%s6]]
  %s8 = scalar_lea.smem %s0, 4
  %s9 = sld [smem:[%s8]]
  %s10 = scalar_lea.smem %s0, 5
  %s11 = sld [smem:[%s10]]
  %s12 = scalar_lea.smem %s0, 6
  %s13 = sld [smem:[%s12]]
  %s14 = scalar_lea.smem %s0, 7
  %s15 = sld [smem:[%s14]]
  %s16 = scalar_lea.smem %s0, 8
  %s17 = sld [smem:[%s16]]
  %s18 = scalar_lea.smem %s0, 9
  %s19 = sld [smem:[%s18]]
  %s20 = scalar_lea.smem %s0, 10
  %s21 = sld [smem:[%s20]]
  %s22 = scalar_lea.smem %s0, 11
  %s23 = sld [smem:[%s22]]
  %s24 = scalar_lea.smem %s0, 12
  %s25 = sld [smem:[%s24]]
  %s26 = scalar_lea.smem %s0, 13
  %s27 = sld [smem:[%s26]]
  %s28 = scalar_lea.smem %s0, 14
  %s29 = sld [smem:[%s28]]
  %s30 = scalar_lea.smem %s0, 15
  %s31 = sld [smem:[%s30]]
  %s32 = scalar_lea.smem %s0, 16
  %s33 = sld [smem:[%s32]]
  %s34 = scalar_lea.smem %s0, 17
  %s35 = sld [smem:[%s34]]
  %s36 = scalar_lea.smem %s0, 18
  %s37 = sld [smem:[%s36]]
  %s38 = scalar_lea.smem %s0, 19
  %s39 = sld [smem:[%s38]]
  %s40 = scalar_lea.smem %s0, 20
  %s41 = sld [smem:[%s40]]
  %s42 = scalar_lea.smem %s0, 21
  %s43 = sld [smem:[%s42]]
  %s44 = scalar_lea.smem %s0, 22
  %s45 = sld [smem:[%s44]]
  %s46 = scalar_lea.smem %s0, 23
  %s47 = sld [smem:[%s46]]
  %s48 = scalar_lea.smem %s0, 24
  %s49 = sld [smem:[%s48]]
  %s50 = scalar_lea.smem %s0, 25
  %s51 = sld [smem:[%s50]]
  %s52 = scalar_lea.smem %s0, 26
  %s53 = sld [smem:[%s52]]
  %s54 = scalar_lea.smem %s0, 27
  %s55 = sld [smem:[%s54]]
  %s56 = scalar_lea.smem %s0, 28
  %s57 = sld [smem:[%s56]]
  %s58 = scalar_lea.smem %s0, 29
  %s59 = sld [smem:[%s58]]
  %s60 = scalar_lea.smem %s0, 30
  %s61 = sld [smem:[%s60]]
  %62 = xla_tuple %s57, %s59, %s61
  %s63 = sld [smem:[#allocation0]]
  $region213: #{tpu_custom_call.1} parent=0
    _
  %s65 = ssub.s32 1, %s63
  %s66 = scalar_select 0, %s65, %s63
  $region1: #{tpu_custom_call.1} parent=0
    #allocation2 [shape = 'u8[8192]{0}', space=vmem, size = 0x2000, scoped, tag = 'input window, operand 0, single buffered']
    #allocation3 [shape = 's32[2]{0}', space=sflag, size = 0x8, scoped, tag = 'scoped memory for tpu_custom_call.1']
    #allocation4 [shape = 's32[2]{0}', space=sflag, size = 0x8, scoped, tag = 'scoped memory for tpu_custom_call.1']
    #allocation5 [shape = 'u8[8192]{0}', space=vmem, size = 0x2000, scoped, tag = 'input window, operand 1, single buffered']
    #allocation6 [shape = 's32[1]{0}', space=sflag, size = 0x4, scoped, tag = 'scoped memory for tpu_custom_call.1']
    #allocation7 [shape = 'u8[1024]{0}', space=vmem, size = 0x400, scoped, tag = 'input window, operand 3']
    #allocation8 [shape = 'u8[16384]{0}', space=vmem, size = 0x4000, scoped, tag = 'input window, operand 8']
    #allocation9 [shape = 'u8[16384]{0}', space=vmem, size = 0x4000, scoped, tag = 'input window, operand 10']
    #allocation10 [shape = 'u8[16384]{0}', space=vmem, size = 0x4000, scoped, tag = 'input window, operand 12']
    #allocation11 [shape = 'u8[16384]{0}', space=vmem, size = 0x4000, scoped, tag = 'input window, operand 14']
    #allocation12 [shape = 'u8[16384]{0}', space=vmem, size = 0x4000, scoped, tag = 'input window, operand 16']
    #allocation13 [shape = 'u8[16384]{0}', space=vmem, size = 0x4000, scoped, tag = 'input window, operand 18']
    #allocation14 [shape = 'u8[1024]{0}', space=vmem, size = 0x400, scoped, tag = 'input window, operand 23']
    #allocation15 [shape = 'u8[1024]{0}', space=vmem, size = 0x400, scoped, tag = 'input window, operand 25']
    #allocation16 [shape = 'u8[1024]{0}', space=vmem, size = 0x400, scoped, tag = 'input window, operand 27']
    #allocation17 [shape = 'u8[8192]{0}', space=vmem, size = 0x2000, scoped, tag = 'output window, operand 0, single buffered']
    #allocation18 [shape = 'u8[65536]{0}', space=vmem, size = 0x10000, scoped, tag = 'output window, operand 1']
    #allocation19 [shape = 's32[2]{0}', space=sflag, size = 0x8, scoped, tag = 'scoped memory for tpu_custom_call.1']
    #allocation20 [shape = 'u8[65536]{0}', space=vmem, size = 0x10000, scoped, tag = 'output window, operand 2']
    %67 = vsyncpa [#allocation3], 0
    %68 = vsyncpa [#allocation6], 0
    %69 = vsyncpa [#allocation4], 0
    %70 = vsyncpa [#allocation19], 0
    %s71 = scalar_lea.sflag [#allocation19], 1
    %72 = vsyncpa %s71, 0
    loop: start=0, step=1, limit=4
    $region2: #{tpu_custom_call.1} parent=1 // loop_pre_header
      _
    $region3: #{tpu_custom_call.1} parent=1 // loop_header
      %s74 = sphi 0, %s78
      %p75 = scmp.ge.s32.totalorder %s74, 4
      %s81 = sphi 0, %s93
      %s82 = sphi 0, %s89
      %s83 = sphi 0, %s81
      %s84 = sphi 0, %s82
      %s85 = sphi 0, %s83
      %s86 = sphi 0, %s84
      %s96 = sphi 0, %s98
      %s99 = sphi 0, %s96
      %s100 = sphi 0, %s99
      %s116 = sphi 0, %s100
      %s122 = sphi 0, %s124
      %s125 = sphi 0, %s122
      %s126 = sphi 0, %s125
      %s142 = sphi 0, %s126
      %s148 = sphi 0, %s150
      %s151 = sphi 0, %s148
      %s152 = sphi 0, %s151
      %s168 = sphi 0, %s152
      %s174 = sphi 0, %s176
      %s177 = sphi 0, %s174
      %s178 = sphi 0, %s177
      %s194 = sphi 0, %s178
      %s200 = sphi 0, %s202
      %s203 = sphi 0, %s200
      %s204 = sphi 0, %s203
      %s220 = sphi 0, %s204
      %s226 = sphi 0, %s228
      %s229 = sphi 0, %s226
      %s230 = sphi 0, %s229
      %s246 = sphi 0, %s230
      %s252 = sphi 0, %s254
      %s255 = sphi 0, %s252
      %s256 = sphi 0, %s255
      %s272 = sphi 0, %s256
      %s278 = sphi 0, %s280
      %s281 = sphi 0, %s278
      %s282 = sphi 0, %s281
      %s298 = sphi 0, %s282
      %s304 = sphi 0, %s306
      %s307 = sphi 0, %s304
      %s308 = sphi 0, %s307
      %s324 = sphi 0, %s308
      %s330 = sphi 0, %s332
      %s333 = sphi 0, %s330
      %s334 = sphi 0, %s333
      %s350 = sphi 0, %s334
      %s356 = sphi 0, %s358
      %s359 = sphi 0, %s356
      %s360 = sphi 0, %s359
      %s376 = sphi 0, %s360
      %s382 = sphi 0, %s384
      %s385 = sphi 0, %s382
      %s386 = sphi 0, %s385
      %s402 = sphi 0, %s386
      %s408 = sphi 0, %s410
      %s411 = sphi 0, %s408
      %s412 = sphi 0, %s411
      %s428 = sphi 0, %s412
      %s434 = sphi 0, %s436
      %s437 = sphi 0, %s434
      %s438 = sphi 0, %s437
      %s454 = sphi 0, %s438
      %s460 = sphi 0, %s462
      %s463 = sphi 0, %s460
      %s464 = sphi 0, %s463
      %s480 = sphi 0, %s464
      %s486 = sphi 0, %s488
      %s489 = sphi 0, %s486
      %s490 = sphi 0, %s489
      %s506 = sphi 0, %s490
      %s512 = sphi 0, %s514
      %s515 = sphi 0, %s512
      %s516 = sphi 0, %s515
      %s532 = sphi 0, %s516
      %s538 = sphi 0, %s540
      %s541 = sphi 0, %s538
      %s542 = sphi 0, %s541
      %s558 = sphi 0, %s542
      %s564 = sphi 0, %s566
      %s567 = sphi 0, %s564
      %s568 = sphi 0, %s567
      %s584 = sphi 0, %s568
      %s590 = sphi 0, %s592
      %s593 = sphi 0, %s590
      %s594 = sphi 0, %s593
      %s610 = sphi 0, %s594
      %s616 = sphi 0, %s618
      %s619 = sphi 0, %s616
      %s620 = sphi 0, %s619
      %s636 = sphi 0, %s620
      %s642 = sphi 0, %s644
      %s645 = sphi 0, %s642
      %s646 = sphi 0, %s645
      %s662 = sphi 0, %s646
      %s668 = sphi 0, %s670
      %s671 = sphi 0, %s668
      %s672 = sphi 0, %s671
      %s688 = sphi 0, %s672
      %s694 = sphi 0, %s696
      %s697 = sphi 0, %s694
      %s698 = sphi 0, %s697
      %s714 = sphi 0, %s698
      %s720 = sphi 0, %s722
      %s723 = sphi 0, %s720
      %s724 = sphi 0, %s723
      %s740 = sphi 0, %s724
      %s746 = sphi 0, %s748
      %s749 = sphi 0, %s746
      %s750 = sphi 0, %s749
      %s766 = sphi 0, %s750
      %s772 = sphi 0, %s774
      %s775 = sphi 0, %s772
      %s776 = sphi 0, %s775
      %s792 = sphi 0, %s776
      %s798 = sphi 0, %s800
      %s801 = sphi 0, %s798
      %s802 = sphi 0, %s801
      %s818 = sphi 0, %s802
      %s824 = sphi 0, %s826
      %s827 = sphi 0, %s824
      %s828 = sphi 0, %s827
      %s844 = sphi 0, %s828
      %s852 = sphi 0, %s854
      %s855 = sphi 0, %s852
      %s856 = sphi 0, %s855
      %s872 = sphi 0, %s856
      %s880 = sphi 0, %s882
      %s883 = sphi 0, %s880
      %s884 = sphi 0, %s883
      %s900 = sphi 0, %s884
    $region4: #{tpu_custom_call.1} parent=1 // loop_header_branch
      %77 = sbr.rel (%p75) target = $region8
    $region5: #{tpu_custom_call.1} parent=1 // loop_body
      %s79 = ssub.s32 %s74, 1
      %s80 = ssub.s32 %s74, 2
      %s87 = sadd.s32 1, %s82
      %p88 = scmp.ge.s32.totalorder %s87, 2
      %s89 = scalar_select %p88, 0, %s87
      %s90 = sadd.s32 1, %s81
      %s91 = scalar_select %p88, %s90, %s81
      %p92 = scmp.ge.s32.totalorder %s91, 1
      %s93 = scalar_select %p92, 0, %s91
      %s94 = ssub.s32 %s81, %s93
      %p95 = scmp.eq.s32.totalorder %s94, 0
      %s97 = sadd.s32 %s96, 1
      %s98 = scalar_select %p95, %s96, %s97
      %p101 = pneg %p95
      %p102 = scmp.eq.s32.totalorder %s74, 1
      %p103 = por %p101, %p102
      %p104 = scmp.ne.s32.totalorder %s96, %s99
      %p105 = scmp.eq.s32.totalorder %s74, 0
      %p106 = por %p104, %p105
      %p107 = scmp.ne.s32.totalorder %s96, %s99
      %p108 = scmp.eq.s32.totalorder %s79, 1
      %p109 = por %p107, %p108
      %p110 = scmp.ne.s32.totalorder %s99, %s100
      %p111 = scmp.eq.s32.totalorder %s79, 0
      %p112 = por %p110, %p111
      %p113 = scmp.ne.s32.totalorder %s99, %s100
      %p114 = scmp.eq.s32.totalorder %s80, 1
      %p115 = por %p113, %p114
      %p117 = scmp.ne.s32.totalorder %s100, %s116
      %p118 = scmp.eq.s32.totalorder %s80, 0
      %p119 = por %p117, %p118
      %s120 = ssub.s32 %s81, %s93
      %p121 = scmp.eq.s32.totalorder %s120, 0
      %s123 = sadd.s32 %s122, 1
      %s124 = scalar_select %p121, %s122, %s123
      %p127 = pneg %p121
      %p128 = scmp.eq.s32.totalorder %s74, 1
      %p129 = por %p127, %p128
      %p130 = scmp.ne.s32.totalorder %s122, %s125
      %p131 = scmp.eq.s32.totalorder %s74, 0
      %p132 = por %p130, %p131
      %p133 = scmp.ne.s32.totalorder %s122, %s125
      %p134 = scmp.eq.s32.totalorder %s79, 1
      %p135 = por %p133, %p134
      %p136 = scmp.ne.s32.totalorder %s125, %s126
      %p137 = scmp.eq.s32.totalorder %s79, 0
      %p138 = por %p136, %p137
      %p139 = scmp.ne.s32.totalorder %s125, %s126
      %p140 = scmp.eq.s32.totalorder %s80, 1
      %p141 = por %p139, %p140
      %p143 = scmp.ne.s32.totalorder %s126, %s142
      %p144 = scmp.eq.s32.totalorder %s80, 0
      %p145 = por %p143, %p144
      %s146 = ssub.s32 %s82, %s89
      %p147 = scmp.eq.s32.totalorder %s146, 0
      %s149 = sadd.s32 %s148, 1
      %s150 = scalar_select %p147, %s148, %s149
      %p153 = pneg %p147
      %p154 = scmp.eq.s32.totalorder %s74, 1
      %p155 = por %p153, %p154
      %p156 = scmp.ne.s32.totalorder %s148, %s151
      %p157 = scmp.eq.s32.totalorder %s74, 0
      %p158 = por %p156, %p157
      %p159 = scmp.ne.s32.totalorder %s148, %s151
      %p160 = scmp.eq.s32.totalorder %s79, 1
      %p161 = por %p159, %p160
      %p162 = scmp.ne.s32.totalorder %s151, %s152
      %p163 = scmp.eq.s32.totalorder %s79, 0
      %p164 = por %p162, %p163
      %p165 = scmp.ne.s32.totalorder %s151, %s152
      %p166 = scmp.eq.s32.totalorder %s80, 1
      %p167 = por %p165, %p166
      %p169 = scmp.ne.s32.totalorder %s152, %s168
      %p170 = scmp.eq.s32.totalorder %s80, 0
      %p171 = por %p169, %p170
      %s172 = ssub.s32 %s82, %s89
      %p173 = scmp.eq.s32.totalorder %s172, 0
      %s175 = sadd.s32 %s174, 1
      %s176 = scalar_select %p173, %s174, %s175
      %p179 = pneg %p173
      %p180 = scmp.eq.s32.totalorder %s74, 1
      %p181 = por %p179, %p180
      %p182 = scmp.ne.s32.totalorder %s174, %s177
      %p183 = scmp.eq.s32.totalorder %s74, 0
      %p184 = por %p182, %p183
      %p185 = scmp.ne.s32.totalorder %s174, %s177
      %p186 = scmp.eq.s32.totalorder %s79, 1
      %p187 = por %p185, %p186
      %p188 = scmp.ne.s32.totalorder %s177, %s178
      %p189 = scmp.eq.s32.totalorder %s79, 0
      %p190 = por %p188, %p189
      %p191 = scmp.ne.s32.totalorder %s177, %s178
      %p192 = scmp.eq.s32.totalorder %s80, 1
      %p193 = por %p191, %p192
      %p195 = scmp.ne.s32.totalorder %s178, %s194
      %p196 = scmp.eq.s32.totalorder %s80, 0
      %p197 = por %p195, %p196
      %s198 = ssub.s32 %s82, %s89
      %p199 = scmp.eq.s32.totalorder %s198, 0
      %s201 = sadd.s32 %s200, 1
      %s202 = scalar_select %p199, %s200, %s201
      %p205 = pneg %p199
      %p206 = scmp.eq.s32.totalorder %s74, 1
      %p207 = por %p205, %p206
      %p208 = scmp.ne.s32.totalorder %s200, %s203
      %p209 = scmp.eq.s32.totalorder %s74, 0
      %p210 = por %p208, %p209
      %p211 = scmp.ne.s32.totalorder %s200, %s203
      %p212 = scmp.eq.s32.totalorder %s79, 1
      %p213 = por %p211, %p212
      %p214 = scmp.ne.s32.totalorder %s203, %s204
      %p215 = scmp.eq.s32.totalorder %s79, 0
      %p216 = por %p214, %p215
      %p217 = scmp.ne.s32.totalorder %s203, %s204
      %p218 = scmp.eq.s32.totalorder %s80, 1
      %p219 = por %p217, %p218
      %p221 = scmp.ne.s32.totalorder %s204, %s220
      %p222 = scmp.eq.s32.totalorder %s80, 0
      %p223 = por %p221, %p222
      %s224 = ssub.s32 %s82, %s89
      %p225 = scmp.eq.s32.totalorder %s224, 0
      %s227 = sadd.s32 %s226, 1
      %s228 = scalar_select %p225, %s226, %s227
      %p231 = pneg %p225
      %p232 = scmp.eq.s32.totalorder %s74, 1
      %p233 = por %p231, %p232
      %p234 = scmp.ne.s32.totalorder %s226, %s229
      %p235 = scmp.eq.s32.totalorder %s74, 0
      %p236 = por %p234, %p235
      %p237 = scmp.ne.s32.totalorder %s226, %s229
      %p238 = scmp.eq.s32.totalorder %s79, 1
      %p239 = por %p237, %p238
      %p240 = scmp.ne.s32.totalorder %s229, %s230
      %p241 = scmp.eq.s32.totalorder %s79, 0
      %p242 = por %p240, %p241
      %p243 = scmp.ne.s32.totalorder %s229, %s230
      %p244 = scmp.eq.s32.totalorder %s80, 1
      %p245 = por %p243, %p244
      %p247 = scmp.ne.s32.totalorder %s230, %s246
      %p248 = scmp.eq.s32.totalorder %s80, 0
      %p249 = por %p247, %p248
      %s250 = ssub.s32 %s82, %s89
      %p251 = scmp.eq.s32.totalorder %s250, 0
      %s253 = sadd.s32 %s252, 1
      %s254 = scalar_select %p251, %s252, %s253
      %p257 = pneg %p251
      %p258 = scmp.eq.s32.totalorder %s74, 1
      %p259 = por %p257, %p258
      %p260 = scmp.ne.s32.totalorder %s252, %s255
      %p261 = scmp.eq.s32.totalorder %s74, 0
      %p262 = por %p260, %p261
      %p263 = scmp.ne.s32.totalorder %s252, %s255
      %p264 = scmp.eq.s32.totalorder %s79, 1
      %p265 = por %p263, %p264
      %p266 = scmp.ne.s32.totalorder %s255, %s256
      %p267 = scmp.eq.s32.totalorder %s79, 0
      %p268 = por %p266, %p267
      %p269 = scmp.ne.s32.totalorder %s255, %s256
      %p270 = scmp.eq.s32.totalorder %s80, 1
      %p271 = por %p269, %p270
      %p273 = scmp.ne.s32.totalorder %s256, %s272
      %p274 = scmp.eq.s32.totalorder %s80, 0
      %p275 = por %p273, %p274
      %s276 = ssub.s32 %s82, %s89
      %p277 = scmp.eq.s32.totalorder %s276, 0
      %s279 = sadd.s32 %s278, 1
      %s280 = scalar_select %p277, %s278, %s279
      %p283 = pneg %p277
      %p284 = scmp.eq.s32.totalorder %s74, 1
      %p285 = por %p283, %p284
      %p286 = scmp.ne.s32.totalorder %s278, %s281
      %p287 = scmp.eq.s32.totalorder %s74, 0
      %p288 = por %p286, %p287
      %p289 = scmp.ne.s32.totalorder %s278, %s281
      %p290 = scmp.eq.s32.totalorder %s79, 1
      %p291 = por %p289, %p290
      %p292 = scmp.ne.s32.totalorder %s281, %s282
      %p293 = scmp.eq.s32.totalorder %s79, 0
      %p294 = por %p292, %p293
      %p295 = scmp.ne.s32.totalorder %s281, %s282
      %p296 = scmp.eq.s32.totalorder %s80, 1
      %p297 = por %p295, %p296
      %p299 = scmp.ne.s32.totalorder %s282, %s298
      %p300 = scmp.eq.s32.totalorder %s80, 0
      %p301 = por %p299, %p300
      %s302 = ssub.s32 %s82, %s89
      %p303 = scmp.eq.s32.totalorder %s302, 0
      %s305 = sadd.s32 %s304, 1
      %s306 = scalar_select %p303, %s304, %s305
      %p309 = pneg %p303
      %p310 = scmp.eq.s32.totalorder %s74, 1
      %p311 = por %p309, %p310
      %p312 = scmp.ne.s32.totalorder %s304, %s307
      %p313 = scmp.eq.s32.totalorder %s74, 0
      %p314 = por %p312, %p313
      %p315 = scmp.ne.s32.totalorder %s304, %s307
      %p316 = scmp.eq.s32.totalorder %s79, 1
      %p317 = por %p315, %p316
      %p318 = scmp.ne.s32.totalorder %s307, %s308
      %p319 = scmp.eq.s32.totalorder %s79, 0
      %p320 = por %p318, %p319
      %p321 = scmp.ne.s32.totalorder %s307, %s308
      %p322 = scmp.eq.s32.totalorder %s80, 1
      %p323 = por %p321, %p322
      %p325 = scmp.ne.s32.totalorder %s308, %s324
      %p326 = scmp.eq.s32.totalorder %s80, 0
      %p327 = por %p325, %p326
      %s328 = ssub.s32 %s82, %s89
      %p329 = scmp.eq.s32.totalorder %s328, 0
      %s331 = sadd.s32 %s330, 1
      %s332 = scalar_select %p329, %s330, %s331
      %p335 = pneg %p329
      %p336 = scmp.eq.s32.totalorder %s74, 1
      %p337 = por %p335, %p336
      %p338 = scmp.ne.s32.totalorder %s330, %s333
      %p339 = scmp.eq.s32.totalorder %s74, 0
      %p340 = por %p338, %p339
      %p341 = scmp.ne.s32.totalorder %s330, %s333
      %p342 = scmp.eq.s32.totalorder %s79, 1
      %p343 = por %p341, %p342
      %p344 = scmp.ne.s32.totalorder %s333, %s334
      %p345 = scmp.eq.s32.totalorder %s79, 0
      %p346 = por %p344, %p345
      %p347 = scmp.ne.s32.totalorder %s333, %s334
      %p348 = scmp.eq.s32.totalorder %s80, 1
      %p349 = por %p347, %p348
      %p351 = scmp.ne.s32.totalorder %s334, %s350
      %p352 = scmp.eq.s32.totalorder %s80, 0
      %p353 = por %p351, %p352
      %s354 = ssub.s32 %s82, %s89
      %p355 = scmp.eq.s32.totalorder %s354, 0
      %s357 = sadd.s32 %s356, 1
      %s358 = scalar_select %p355, %s356, %s357
      %p361 = pneg %p355
      %p362 = scmp.eq.s32.totalorder %s74, 1
      %p363 = por %p361, %p362
      %p364 = scmp.ne.s32.totalorder %s356, %s359
      %p365 = scmp.eq.s32.totalorder %s74, 0
      %p366 = por %p364, %p365
      %p367 = scmp.ne.s32.totalorder %s356, %s359
      %p368 = scmp.eq.s32.totalorder %s79, 1
      %p369 = por %p367, %p368
      %p370 = scmp.ne.s32.totalorder %s359, %s360
      %p371 = scmp.eq.s32.totalorder %s79, 0
      %p372 = por %p370, %p371
      %p373 = scmp.ne.s32.totalorder %s359, %s360
      %p374 = scmp.eq.s32.totalorder %s80, 1
      %p375 = por %p373, %p374
      %p377 = scmp.ne.s32.totalorder %s360, %s376
      %p378 = scmp.eq.s32.totalorder %s80, 0
      %p379 = por %p377, %p378
      %s380 = ssub.s32 %s82, %s89
      %p381 = scmp.eq.s32.totalorder %s380, 0
      %s383 = sadd.s32 %s382, 1
      %s384 = scalar_select %p381, %s382, %s383
      %p387 = pneg %p381
      %p388 = scmp.eq.s32.totalorder %s74, 1
      %p389 = por %p387, %p388
      %p390 = scmp.ne.s32.totalorder %s382, %s385
      %p391 = scmp.eq.s32.totalorder %s74, 0
      %p392 = por %p390, %p391
      %p393 = scmp.ne.s32.totalorder %s382, %s385
      %p394 = scmp.eq.s32.totalorder %s79, 1
      %p395 = por %p393, %p394
      %p396 = scmp.ne.s32.totalorder %s385, %s386
      %p397 = scmp.eq.s32.totalorder %s79, 0
      %p398 = por %p396, %p397
      %p399 = scmp.ne.s32.totalorder %s385, %s386
      %p400 = scmp.eq.s32.totalorder %s80, 1
      %p401 = por %p399, %p400
      %p403 = scmp.ne.s32.totalorder %s386, %s402
      %p404 = scmp.eq.s32.totalorder %s80, 0
      %p405 = por %p403, %p404
      %s406 = ssub.s32 %s82, %s89
      %p407 = scmp.eq.s32.totalorder %s406, 0
      %s409 = sadd.s32 %s408, 1
      %s410 = scalar_select %p407, %s408, %s409
      %p413 = pneg %p407
      %p414 = scmp.eq.s32.totalorder %s74, 1
      %p415 = por %p413, %p414
      %p416 = scmp.ne.s32.totalorder %s408, %s411
      %p417 = scmp.eq.s32.totalorder %s74, 0
      %p418 = por %p416, %p417
      %p419 = scmp.ne.s32.totalorder %s408, %s411
      %p420 = scmp.eq.s32.totalorder %s79, 1
      %p421 = por %p419, %p420
      %p422 = scmp.ne.s32.totalorder %s411, %s412
      %p423 = scmp.eq.s32.totalorder %s79, 0
      %p424 = por %p422, %p423
      %p425 = scmp.ne.s32.totalorder %s411, %s412
      %p426 = scmp.eq.s32.totalorder %s80, 1
      %p427 = por %p425, %p426
      %p429 = scmp.ne.s32.totalorder %s412, %s428
      %p430 = scmp.eq.s32.totalorder %s80, 0
      %p431 = por %p429, %p430
      %s432 = ssub.s32 %s82, %s89
      %p433 = scmp.eq.s32.totalorder %s432, 0
      %s435 = sadd.s32 %s434, 1
      %s436 = scalar_select %p433, %s434, %s435
      %p439 = pneg %p433
      %p440 = scmp.eq.s32.totalorder %s74, 1
      %p441 = por %p439, %p440
      %p442 = scmp.ne.s32.totalorder %s434, %s437
      %p443 = scmp.eq.s32.totalorder %s74, 0
      %p444 = por %p442, %p443
      %p445 = scmp.ne.s32.totalorder %s434, %s437
      %p446 = scmp.eq.s32.totalorder %s79, 1
      %p447 = por %p445, %p446
      %p448 = scmp.ne.s32.totalorder %s437, %s438
      %p449 = scmp.eq.s32.totalorder %s79, 0
      %p450 = por %p448, %p449
      %p451 = scmp.ne.s32.totalorder %s437, %s438
      %p452 = scmp.eq.s32.totalorder %s80, 1
      %p453 = por %p451, %p452
      %p455 = scmp.ne.s32.totalorder %s438, %s454
      %p456 = scmp.eq.s32.totalorder %s80, 0
      %p457 = por %p455, %p456
      %s458 = ssub.s32 %s82, %s89
      %p459 = scmp.eq.s32.totalorder %s458, 0
      %s461 = sadd.s32 %s460, 1
      %s462 = scalar_select %p459, %s460, %s461
      %p465 = pneg %p459
      %p466 = scmp.eq.s32.totalorder %s74, 1
      %p467 = por %p465, %p466
      %p468 = scmp.ne.s32.totalorder %s460, %s463
      %p469 = scmp.eq.s32.totalorder %s74, 0
      %p470 = por %p468, %p469
      %p471 = scmp.ne.s32.totalorder %s460, %s463
      %p472 = scmp.eq.s32.totalorder %s79, 1
      %p473 = por %p471, %p472
      %p474 = scmp.ne.s32.totalorder %s463, %s464
      %p475 = scmp.eq.s32.totalorder %s79, 0
      %p476 = por %p474, %p475
      %p477 = scmp.ne.s32.totalorder %s463, %s464
      %p478 = scmp.eq.s32.totalorder %s80, 1
      %p479 = por %p477, %p478
      %p481 = scmp.ne.s32.totalorder %s464, %s480
      %p482 = scmp.eq.s32.totalorder %s80, 0
      %p483 = por %p481, %p482
      %s484 = ssub.s32 %s82, %s89
      %p485 = scmp.eq.s32.totalorder %s484, 0
      %s487 = sadd.s32 %s486, 1
      %s488 = scalar_select %p485, %s486, %s487
      %p491 = pneg %p485
      %p492 = scmp.eq.s32.totalorder %s74, 1
      %p493 = por %p491, %p492
      %p494 = scmp.ne.s32.totalorder %s486, %s489
      %p495 = scmp.eq.s32.totalorder %s74, 0
      %p496 = por %p494, %p495
      %p497 = scmp.ne.s32.totalorder %s486, %s489
      %p498 = scmp.eq.s32.totalorder %s79, 1
      %p499 = por %p497, %p498
      %p500 = scmp.ne.s32.totalorder %s489, %s490
      %p501 = scmp.eq.s32.totalorder %s79, 0
      %p502 = por %p500, %p501
      %p503 = scmp.ne.s32.totalorder %s489, %s490
      %p504 = scmp.eq.s32.totalorder %s80, 1
      %p505 = por %p503, %p504
      %p507 = scmp.ne.s32.totalorder %s490, %s506
      %p508 = scmp.eq.s32.totalorder %s80, 0
      %p509 = por %p507, %p508
      %s510 = ssub.s32 %s82, %s89
      %p511 = scmp.eq.s32.totalorder %s510, 0
      %s513 = sadd.s32 %s512, 1
      %s514 = scalar_select %p511, %s512, %s513
      %p517 = pneg %p511
      %p518 = scmp.eq.s32.totalorder %s74, 1
      %p519 = por %p517, %p518
      %p520 = scmp.ne.s32.totalorder %s512, %s515
      %p521 = scmp.eq.s32.totalorder %s74, 0
      %p522 = por %p520, %p521
      %p523 = scmp.ne.s32.totalorder %s512, %s515
      %p524 = scmp.eq.s32.totalorder %s79, 1
      %p525 = por %p523, %p524
      %p526 = scmp.ne.s32.totalorder %s515, %s516
      %p527 = scmp.eq.s32.totalorder %s79, 0
      %p528 = por %p526, %p527
      %p529 = scmp.ne.s32.totalorder %s515, %s516
      %p530 = scmp.eq.s32.totalorder %s80, 1
      %p531 = por %p529, %p530
      %p533 = scmp.ne.s32.totalorder %s516, %s532
      %p534 = scmp.eq.s32.totalorder %s80, 0
      %p535 = por %p533, %p534
      %s536 = ssub.s32 %s82, %s89
      %p537 = scmp.eq.s32.totalorder %s536, 0
      %s539 = sadd.s32 %s538, 1
      %s540 = scalar_select %p537, %s538, %s539
      %p543 = pneg %p537
      %p544 = scmp.eq.s32.totalorder %s74, 1
      %p545 = por %p543, %p544
      %p546 = scmp.ne.s32.totalorder %s538, %s541
      %p547 = scmp.eq.s32.totalorder %s74, 0
      %p548 = por %p546, %p547
      %p549 = scmp.ne.s32.totalorder %s538, %s541
      %p550 = scmp.eq.s32.totalorder %s79, 1
      %p551 = por %p549, %p550
      %p552 = scmp.ne.s32.totalorder %s541, %s542
      %p553 = scmp.eq.s32.totalorder %s79, 0
      %p554 = por %p552, %p553
      %p555 = scmp.ne.s32.totalorder %s541, %s542
      %p556 = scmp.eq.s32.totalorder %s80, 1
      %p557 = por %p555, %p556
      %p559 = scmp.ne.s32.totalorder %s542, %s558
      %p560 = scmp.eq.s32.totalorder %s80, 0
      %p561 = por %p559, %p560
      %s562 = ssub.s32 %s82, %s89
      %p563 = scmp.eq.s32.totalorder %s562, 0
      %s565 = sadd.s32 %s564, 1
      %s566 = scalar_select %p563, %s564, %s565
      %p569 = pneg %p563
      %p570 = scmp.eq.s32.totalorder %s74, 1
      %p571 = por %p569, %p570
      %p572 = scmp.ne.s32.totalorder %s564, %s567
      %p573 = scmp.eq.s32.totalorder %s74, 0
      %p574 = por %p572, %p573
      %p575 = scmp.ne.s32.totalorder %s564, %s567
      %p576 = scmp.eq.s32.totalorder %s79, 1
      %p577 = por %p575, %p576
      %p578 = scmp.ne.s32.totalorder %s567, %s568
      %p579 = scmp.eq.s32.totalorder %s79, 0
      %p580 = por %p578, %p579
      %p581 = scmp.ne.s32.totalorder %s567, %s568
      %p582 = scmp.eq.s32.totalorder %s80, 1
      %p583 = por %p581, %p582
      %p585 = scmp.ne.s32.totalorder %s568, %s584
      %p586 = scmp.eq.s32.totalorder %s80, 0
      %p587 = por %p585, %p586
      %s588 = ssub.s32 %s82, %s89
      %p589 = scmp.eq.s32.totalorder %s588, 0
      %s591 = sadd.s32 %s590, 1
      %s592 = scalar_select %p589, %s590, %s591
      %p595 = pneg %p589
      %p596 = scmp.eq.s32.totalorder %s74, 1
      %p597 = por %p595, %p596
      %p598 = scmp.ne.s32.totalorder %s590, %s593
      %p599 = scmp.eq.s32.totalorder %s74, 0
      %p600 = por %p598, %p599
      %p601 = scmp.ne.s32.totalorder %s590, %s593
      %p602 = scmp.eq.s32.totalorder %s79, 1
      %p603 = por %p601, %p602
      %p604 = scmp.ne.s32.totalorder %s593, %s594
      %p605 = scmp.eq.s32.totalorder %s79, 0
      %p606 = por %p604, %p605
      %p607 = scmp.ne.s32.totalorder %s593, %s594
      %p608 = scmp.eq.s32.totalorder %s80, 1
      %p609 = por %p607, %p608
      %p611 = scmp.ne.s32.totalorder %s594, %s610
      %p612 = scmp.eq.s32.totalorder %s80, 0
      %p613 = por %p611, %p612
      %s614 = ssub.s32 %s82, %s89
      %p615 = scmp.eq.s32.totalorder %s614, 0
      %s617 = sadd.s32 %s616, 1
      %s618 = scalar_select %p615, %s616, %s617
      %p621 = pneg %p615
      %p622 = scmp.eq.s32.totalorder %s74, 1
      %p623 = por %p621, %p622
      %p624 = scmp.ne.s32.totalorder %s616, %s619
      %p625 = scmp.eq.s32.totalorder %s74, 0
      %p626 = por %p624, %p625
      %p627 = scmp.ne.s32.totalorder %s616, %s619
      %p628 = scmp.eq.s32.totalorder %s79, 1
      %p629 = por %p627, %p628
      %p630 = scmp.ne.s32.totalorder %s619, %s620
      %p631 = scmp.eq.s32.totalorder %s79, 0
      %p632 = por %p630, %p631
      %p633 = scmp.ne.s32.totalorder %s619, %s620
      %p634 = scmp.eq.s32.totalorder %s80, 1
      %p635 = por %p633, %p634
      %p637 = scmp.ne.s32.totalorder %s620, %s636
      %p638 = scmp.eq.s32.totalorder %s80, 0
      %p639 = por %p637, %p638
      %s640 = ssub.s32 %s82, %s89
      %p641 = scmp.eq.s32.totalorder %s640, 0
      %s643 = sadd.s32 %s642, 1
      %s644 = scalar_select %p641, %s642, %s643
      %p647 = pneg %p641
      %p648 = scmp.eq.s32.totalorder %s74, 1
      %p649 = por %p647, %p648
      %p650 = scmp.ne.s32.totalorder %s642, %s645
      %p651 = scmp.eq.s32.totalorder %s74, 0
      %p652 = por %p650, %p651
      %p653 = scmp.ne.s32.totalorder %s642, %s645
      %p654 = scmp.eq.s32.totalorder %s79, 1
      %p655 = por %p653, %p654
      %p656 = scmp.ne.s32.totalorder %s645, %s646
      %p657 = scmp.eq.s32.totalorder %s79, 0
      %p658 = por %p656, %p657
      %p659 = scmp.ne.s32.totalorder %s645, %s646
      %p660 = scmp.eq.s32.totalorder %s80, 1
      %p661 = por %p659, %p660
      %p663 = scmp.ne.s32.totalorder %s646, %s662
      %p664 = scmp.eq.s32.totalorder %s80, 0
      %p665 = por %p663, %p664
      %s666 = ssub.s32 %s82, %s89
      %p667 = scmp.eq.s32.totalorder %s666, 0
      %s669 = sadd.s32 %s668, 1
      %s670 = scalar_select %p667, %s668, %s669
      %p673 = pneg %p667
      %p674 = scmp.eq.s32.totalorder %s74, 1
      %p675 = por %p673, %p674
      %p676 = scmp.ne.s32.totalorder %s668, %s671
      %p677 = scmp.eq.s32.totalorder %s74, 0
      %p678 = por %p676, %p677
      %p679 = scmp.ne.s32.totalorder %s668, %s671
      %p680 = scmp.eq.s32.totalorder %s79, 1
      %p681 = por %p679, %p680
      %p682 = scmp.ne.s32.totalorder %s671, %s672
      %p683 = scmp.eq.s32.totalorder %s79, 0
      %p684 = por %p682, %p683
      %p685 = scmp.ne.s32.totalorder %s671, %s672
      %p686 = scmp.eq.s32.totalorder %s80, 1
      %p687 = por %p685, %p686
      %p689 = scmp.ne.s32.totalorder %s672, %s688
      %p690 = scmp.eq.s32.totalorder %s80, 0
      %p691 = por %p689, %p690
      %s692 = ssub.s32 %s82, %s89
      %p693 = scmp.eq.s32.totalorder %s692, 0
      %s695 = sadd.s32 %s694, 1
      %s696 = scalar_select %p693, %s694, %s695
      %p699 = pneg %p693
      %p700 = scmp.eq.s32.totalorder %s74, 1
      %p701 = por %p699, %p700
      %p702 = scmp.ne.s32.totalorder %s694, %s697
      %p703 = scmp.eq.s32.totalorder %s74, 0
      %p704 = por %p702, %p703
      %p705 = scmp.ne.s32.totalorder %s694, %s697
      %p706 = scmp.eq.s32.totalorder %s79, 1
      %p707 = por %p705, %p706
      %p708 = scmp.ne.s32.totalorder %s697, %s698
      %p709 = scmp.eq.s32.totalorder %s79, 0
      %p710 = por %p708, %p709
      %p711 = scmp.ne.s32.totalorder %s697, %s698
      %p712 = scmp.eq.s32.totalorder %s80, 1
      %p713 = por %p711, %p712
      %p715 = scmp.ne.s32.totalorder %s698, %s714
      %p716 = scmp.eq.s32.totalorder %s80, 0
      %p717 = por %p715, %p716
      %s718 = ssub.s32 %s82, %s89
      %p719 = scmp.eq.s32.totalorder %s718, 0
      %s721 = sadd.s32 %s720, 1
      %s722 = scalar_select %p719, %s720, %s721
      %p725 = pneg %p719
      %p726 = scmp.eq.s32.totalorder %s74, 1
      %p727 = por %p725, %p726
      %p728 = scmp.ne.s32.totalorder %s720, %s723
      %p729 = scmp.eq.s32.totalorder %s74, 0
      %p730 = por %p728, %p729
      %p731 = scmp.ne.s32.totalorder %s720, %s723
      %p732 = scmp.eq.s32.totalorder %s79, 1
      %p733 = por %p731, %p732
      %p734 = scmp.ne.s32.totalorder %s723, %s724
      %p735 = scmp.eq.s32.totalorder %s79, 0
      %p736 = por %p734, %p735
      %p737 = scmp.ne.s32.totalorder %s723, %s724
      %p738 = scmp.eq.s32.totalorder %s80, 1
      %p739 = por %p737, %p738
      %p741 = scmp.ne.s32.totalorder %s724, %s740
      %p742 = scmp.eq.s32.totalorder %s80, 0
      %p743 = por %p741, %p742
      %s744 = ssub.s32 %s82, %s89
      %p745 = scmp.eq.s32.totalorder %s744, 0
      %s747 = sadd.s32 %s746, 1
      %s748 = scalar_select %p745, %s746, %s747
      %p751 = pneg %p745
      %p752 = scmp.eq.s32.totalorder %s74, 1
      %p753 = por %p751, %p752
      %p754 = scmp.ne.s32.totalorder %s746, %s749
      %p755 = scmp.eq.s32.totalorder %s74, 0
      %p756 = por %p754, %p755
      %p757 = scmp.ne.s32.totalorder %s746, %s749
      %p758 = scmp.eq.s32.totalorder %s79, 1
      %p759 = por %p757, %p758
      %p760 = scmp.ne.s32.totalorder %s749, %s750
      %p761 = scmp.eq.s32.totalorder %s79, 0
      %p762 = por %p760, %p761
      %p763 = scmp.ne.s32.totalorder %s749, %s750
      %p764 = scmp.eq.s32.totalorder %s80, 1
      %p765 = por %p763, %p764
      %p767 = scmp.ne.s32.totalorder %s750, %s766
      %p768 = scmp.eq.s32.totalorder %s80, 0
      %p769 = por %p767, %p768
      %s770 = ssub.s32 %s82, %s89
      %p771 = scmp.eq.s32.totalorder %s770, 0
      %s773 = sadd.s32 %s772, 1
      %s774 = scalar_select %p771, %s772, %s773
      %p777 = pneg %p771
      %p778 = scmp.eq.s32.totalorder %s74, 1
      %p779 = por %p777, %p778
      %p780 = scmp.ne.s32.totalorder %s772, %s775
      %p781 = scmp.eq.s32.totalorder %s74, 0
      %p782 = por %p780, %p781
      %p783 = scmp.ne.s32.totalorder %s772, %s775
      %p784 = scmp.eq.s32.totalorder %s79, 1
      %p785 = por %p783, %p784
      %p786 = scmp.ne.s32.totalorder %s775, %s776
      %p787 = scmp.eq.s32.totalorder %s79, 0
      %p788 = por %p786, %p787
      %p789 = scmp.ne.s32.totalorder %s775, %s776
      %p790 = scmp.eq.s32.totalorder %s80, 1
      %p791 = por %p789, %p790
      %p793 = scmp.ne.s32.totalorder %s776, %s792
      %p794 = scmp.eq.s32.totalorder %s80, 0
      %p795 = por %p793, %p794
      %s796 = ssub.s32 %s82, %s89
      %p797 = scmp.eq.s32.totalorder %s796, 0
      %s799 = sadd.s32 %s798, 1
      %s800 = scalar_select %p797, %s798, %s799
      %p803 = pneg %p797
      %p804 = scmp.eq.s32.totalorder %s74, 1
      %p805 = por %p803, %p804
      %p806 = scmp.ne.s32.totalorder %s798, %s801
      %p807 = scmp.eq.s32.totalorder %s74, 0
      %p808 = por %p806, %p807
      %p809 = scmp.ne.s32.totalorder %s798, %s801
      %p810 = scmp.eq.s32.totalorder %s79, 1
      %p811 = por %p809, %p810
      %p812 = scmp.ne.s32.totalorder %s801, %s802
      %p813 = scmp.eq.s32.totalorder %s79, 0
      %p814 = por %p812, %p813
      %p815 = scmp.ne.s32.totalorder %s801, %s802
      %p816 = scmp.eq.s32.totalorder %s80, 1
      %p817 = por %p815, %p816
      %p819 = scmp.ne.s32.totalorder %s802, %s818
      %p820 = scmp.eq.s32.totalorder %s80, 0
      %p821 = por %p819, %p820
      %s822 = ssub.s32 %s81, %s93
      %p823 = scmp.eq.s32.totalorder %s822, 0
      %s825 = sadd.s32 %s824, 1
      %s826 = scalar_select %p823, %s824, %s825
      %p829 = pneg %p823
      %p830 = scmp.eq.s32.totalorder %s74, 1
      %p831 = por %p829, %p830
      %p832 = scmp.ne.s32.totalorder %s824, %s827
      %p833 = scmp.eq.s32.totalorder %s74, 0
      %p834 = por %p832, %p833
      %p835 = scmp.ne.s32.totalorder %s824, %s827
      %p836 = scmp.eq.s32.totalorder %s79, 1
      %p837 = por %p835, %p836
      %p838 = scmp.ne.s32.totalorder %s827, %s828
      %p839 = scmp.eq.s32.totalorder %s79, 0
      %p840 = por %p838, %p839
      %p841 = scmp.ne.s32.totalorder %s827, %s828
      %p842 = scmp.eq.s32.totalorder %s80, 1
      %p843 = por %p841, %p842
      %p845 = scmp.ne.s32.totalorder %s828, %s844
      %p846 = scmp.eq.s32.totalorder %s80, 0
      %p847 = por %p845, %p846
      %s848 = ssub.s32 %s82, %s89
      %s849 = ssub.s32 %s81, %s93
      %s850 = sor.u32 %s848, %s849
      %p851 = scmp.eq.s32.totalorder %s850, 0
      %s853 = sadd.s32 %s852, 1
      %s854 = scalar_select %p851, %s852, %s853
      %p857 = pneg %p851
      %p858 = scmp.eq.s32.totalorder %s74, 1
      %p859 = por %p857, %p858
      %p860 = scmp.ne.s32.totalorder %s852, %s855
      %p861 = scmp.eq.s32.totalorder %s74, 0
      %p862 = por %p860, %p861
      %p863 = scmp.ne.s32.totalorder %s852, %s855
      %p864 = scmp.eq.s32.totalorder %s79, 1
      %p865 = por %p863, %p864
      %p866 = scmp.ne.s32.totalorder %s855, %s856
      %p867 = scmp.eq.s32.totalorder %s79, 0
      %p868 = por %p866, %p867
      %p869 = scmp.ne.s32.totalorder %s855, %s856
      %p870 = scmp.eq.s32.totalorder %s80, 1
      %p871 = por %p869, %p870
      %p873 = scmp.ne.s32.totalorder %s856, %s872
      %p874 = scmp.eq.s32.totalorder %s80, 0
      %p875 = por %p873, %p874
      %s876 = ssub.s32 %s82, %s89
      %s877 = ssub.s32 %s81, %s93
      %s878 = sor.u32 %s876, %s877
      %p879 = scmp.eq.s32.totalorder %s878, 0
      %s881 = sadd.s32 %s880, 1
      %s882 = scalar_select %p879, %s880, %s881
      %p885 = pneg %p879
      %p886 = scmp.eq.s32.totalorder %s74, 1
      %p887 = por %p885, %p886
      %p888 = scmp.ne.s32.totalorder %s880, %s883
      %p889 = scmp.eq.s32.totalorder %s74, 0
      %p890 = por %p888, %p889
      %p891 = scmp.ne.s32.totalorder %s880, %s883
      %p892 = scmp.eq.s32.totalorder %s79, 1
      %p893 = por %p891, %p892
      %p894 = scmp.ne.s32.totalorder %s883, %s884
      %p895 = scmp.eq.s32.totalorder %s79, 0
      %p896 = por %p894, %p895
      %p897 = scmp.ne.s32.totalorder %s883, %s884
      %p898 = scmp.eq.s32.totalorder %s80, 1
      %p899 = por %p897, %p898
      %p901 = scmp.ne.s32.totalorder %s884, %s900
      %p902 = scmp.eq.s32.totalorder %s80, 0
      %p903 = por %p901, %p902
      %p904 = scmp.le.s32.totalorder 1, %s74
      %p905 = scmp.lt.s32.totalorder %s74, 3
      %p906 = pnand %p904, %p905
      %p907 = pneg %p906
      // Predicated region
      $region9: #{tpu_custom_call.1} parent=5 // pred_check
        _
      $region10: #{tpu_custom_call.1} parent=5 // pred_check_branch
        %909 = sbr.rel (%p906) target = $region12
      $region11: #{tpu_custom_call.1} parent=5 // pred_region
        %s910 = ssub.s32 %s74, 1
        // Predicated region
        $region13: #{tpu_custom_call.1} parent=11 // pred_check
          %p911 = pneg %p112
        $region14: #{tpu_custom_call.1} parent=11 // pred_check_branch
          %913 = sbr.rel (%p911) target = $region16
        $region15: #{tpu_custom_call.1} parent=11 // pred_region
          %s914 = smul.u32 2, %s83
          %916 = vsyncadd [#allocation3], 0
          %s917 = smul.addr %s914, 8
          %s918 = scalar_lea.hbm %s1, %s917
          %s919 = sshll.u32 %s918, 4
          %s920 = int_to_ptr.hbm [resolvable:$true] %s919
          %s921 = sshll.u32 [#allocation2], 4
          %s922 = int_to_ptr.vmem [resolvable:$true] %s921
          %927 = dma.hbm_to_vmem [thread:$0]  %s920, 256, %s922, [#allocation3], 128, 128, 8
        $region16: #{tpu_custom_call.1} parent=11 // pred_fallthru
          _
        // Predicated region
        $region17: #{tpu_custom_call.1} parent=11 // pred_check
          %p928 = pneg %p138
        $region18: #{tpu_custom_call.1} parent=11 // pred_check_branch
          %930 = sbr.rel (%p928) target = $region20
        $region19: #{tpu_custom_call.1} parent=11 // pred_region
          %s931 = smul.u32 2, %s83
          %933 = vsyncadd [#allocation6], 0
          %s934 = smul.addr %s931, 8
          %s935 = scalar_lea.hbm %s3, %s934
          %s936 = sshll.u32 %s935, 4
          %s937 = int_to_ptr.hbm [resolvable:$true] %s936
          %s938 = sshll.u32 [#allocation5], 4
          %s939 = int_to_ptr.vmem [resolvable:$true] %s938
          %944 = dma.hbm_to_vmem [thread:$0]  %s937, 256, %s939, [#allocation6], 128, 128, 8
        $region20: #{tpu_custom_call.1} parent=11 // pred_fallthru
          _
      $region12: #{tpu_custom_call.1} parent=5 // pred_fallthru
        _
      %p945 = scmp.lt.s32.totalorder %s74, 2
      // Predicated region
      $region21: #{tpu_custom_call.1} parent=5 // pred_check
        %p946 = pneg %p945
      $region22: #{tpu_custom_call.1} parent=5 // pred_check_branch
        %948 = sbr.rel (%p946) target = $region24
      $region23: #{tpu_custom_call.1} parent=5 // pred_region
        // Predicated region
        $region25: #{tpu_custom_call.1} parent=23 // pred_check
          %p949 = pneg %p158
        $region26: #{tpu_custom_call.1} parent=23 // pred_check_branch
          %951 = sbr.rel (%p949) target = $region28
        $region27: #{tpu_custom_call.1} parent=23 // pred_region
          %p952 = scmp.lt.s32.totalorder %s82, 1
          %s953 = scalar_select %p952, %s82, 1
          %s954 = smul.addr %s953, 4
          %s955 = smul.addr %s954, 4
          %s956 = scalar_lea.vmem %s5, %s955
        $region28: #{tpu_custom_call.1} parent=23 // pred_fallthru
          _
        // Predicated region
        $region29: #{tpu_custom_call.1} parent=23 // pred_check
          %p957 = pneg %p184
        $region30: #{tpu_custom_call.1} parent=23 // pred_check_branch
          %959 = sbr.rel (%p957) target = $region32
        $region31: #{tpu_custom_call.1} parent=23 // pred_region
          %s960 = sand.u32 %s74, 1
          %s961 = scalar_lea.sflag [#allocation3], %s960
          %s962 = sand.u32 %s174, 1
          %s963 = scalar_lea.vmem [#allocation7], %s962
          %965 = vsyncadd %s961, 0
          %s966 = scalar_lea.hbm %s7, %s82
          %s968 = sshll.u32 %s966, 4
          %s969 = int_to_ptr.hbm [resolvable:$true] %s968
          %s970 = sshll.u32 %s963, 4
          %s971 = int_to_ptr.vmem [resolvable:$true] %s970
          %973 = dma.hbm_to_vmem [thread:$0]  %s969, 16, %s971, %s961
        $region32: #{tpu_custom_call.1} parent=23 // pred_fallthru
          _
        // Predicated region
        $region33: #{tpu_custom_call.1} parent=23 // pred_check
          %p974 = pneg %p210
        $region34: #{tpu_custom_call.1} parent=23 // pred_check_branch
          %976 = sbr.rel (%p974) target = $region36
        $region35: #{tpu_custom_call.1} parent=23 // pred_region
          %p977 = scmp.lt.s32.totalorder %s82, 1
          %s978 = scalar_select %p977, %s82, 1
          %s979 = smul.addr %s978, 4
          %s980 = smul.addr %s979, 4
          %s981 = scalar_lea.vmem %s9, %s980
        $region36: #{tpu_custom_call.1} parent=23 // pred_fallthru
          _
        // Predicated region
        $region37: #{tpu_custom_call.1} parent=23 // pred_check
          %p982 = pneg %p236
        $region38: #{tpu_custom_call.1} parent=23 // pred_check_branch
          %984 = sbr.rel (%p982) target = $region40
        $region39: #{tpu_custom_call.1} parent=23 // pred_region
          %p985 = scmp.lt.s32.totalorder %s82, 1
          %s986 = scalar_select %p985, %s82, 1
          %s987 = scalar_lea.vmem %s11, %s986
        $region40: #{tpu_custom_call.1} parent=23 // pred_fallthru
          _
        // Predicated region
        $region41: #{tpu_custom_call.1} parent=23 // pred_check
          %p988 = pneg %p262
        $region42: #{tpu_custom_call.1} parent=23 // pred_check_branch
          %990 = sbr.rel (%p988) target = $region44
        $region43: #{tpu_custom_call.1} parent=23 // pred_region
          %p991 = scmp.lt.s32.totalorder %s82, 1
          %s992 = scalar_select %p991, %s82, 1
          %s993 = smul.addr %s992, 4
          %s994 = smul.addr %s993, 4
          %s995 = scalar_lea.vmem %s13, %s994
        $region44: #{tpu_custom_call.1} parent=23 // pred_fallthru
          _
        // Predicated region
        $region45: #{tpu_custom_call.1} parent=23 // pred_check
          %p996 = pneg %p288
        $region46: #{tpu_custom_call.1} parent=23 // pred_check_branch
          %998 = sbr.rel (%p996) target = $region48
        $region47: #{tpu_custom_call.1} parent=23 // pred_region
          %p999 = scmp.lt.s32.totalorder %s82, 1
          %s1000 = scalar_select %p999, %s82, 1
          %s1001 = scalar_lea.vmem %s15, %s1000
        $region48: #{tpu_custom_call.1} parent=23 // pred_fallthru
          _
        // Predicated region
        $region49: #{tpu_custom_call.1} parent=23 // pred_check
          %p1002 = pneg %p314
        $region50: #{tpu_custom_call.1} parent=23 // pred_check_branch
          %1004 = sbr.rel (%p1002) target = $region52
        $region51: #{tpu_custom_call.1} parent=23 // pred_region
          %s1005 = sand.u32 %s74, 1
          %s1006 = scalar_lea.sflag [#allocation3], %s1005
          %s1007 = sand.u32 %s304, 1
          %s1008 = smul.addr %s1007, 16
          %s1009 = scalar_lea.vmem [#allocation8], %s1008
          %1011 = vsyncadd %s1006, 0
          %s1012 = smul.addr %s82, 4
          %s1013 = smul.addr %s1012, 4
          %s1014 = scalar_lea.hbm %s17, %s1013
          %s1015 = sshll.u32 %s1014, 4
          %s1016 = int_to_ptr.hbm [resolvable:$true] %s1015
          %s1017 = sshll.u32 %s1009, 4
          %s1018 = int_to_ptr.vmem [resolvable:$true] %s1017
          %1023 = dma.hbm_to_vmem [thread:$0]  %s1016, 256, %s1018, %s1006, 64, 64, 4
        $region52: #{tpu_custom_call.1} parent=23 // pred_fallthru
          _
        // Predicated region
        $region53: #{tpu_custom_call.1} parent=23 // pred_check
          %p1024 = pneg %p340
        $region54: #{tpu_custom_call.1} parent=23 // pred_check_branch
          %1026 = sbr.rel (%p1024) target = $region56
        $region55: #{tpu_custom_call.1} parent=23 // pred_region
          %p1027 = scmp.lt.s32.totalorder %s82, 1
          %s1028 = scalar_select %p1027, %s82, 1
          %s1029 = scalar_lea.vmem %s19, %s1028
        $region56: #{tpu_custom_call.1} parent=23 // pred_fallthru
          _
        // Predicated region
        $region57: #{tpu_custom_call.1} parent=23 // pred_check
          %p1030 = pneg %p366
        $region58: #{tpu_custom_call.1} parent=23 // pred_check_branch
          %1032 = sbr.rel (%p1030) target = $region60
        $region59: #{tpu_custom_call.1} parent=23 // pred_region
          %s1033 = sand.u32 %s74, 1
          %s1034 = scalar_lea.sflag [#allocation3], %s1033
          %s1035 = sand.u32 %s356, 1
          %s1036 = smul.addr %s1035, 16
          %s1037 = scalar_lea.vmem [#allocation9], %s1036
          %1039 = vsyncadd %s1034, 0
          %s1040 = smul.addr %s82, 4
          %s1041 = smul.addr %s1040, 4
          %s1042 = scalar_lea.hbm %s21, %s1041
          %s1043 = sshll.u32 %s1042, 4
          %s1044 = int_to_ptr.hbm [resolvable:$true] %s1043
          %s1045 = sshll.u32 %s1037, 4
          %s1046 = int_to_ptr.vmem [resolvable:$true] %s1045
          %1051 = dma.hbm_to_vmem [thread:$0]  %s1044, 256, %s1046, %s1034, 64, 64, 4
        $region60: #{tpu_custom_call.1} parent=23 // pred_fallthru
          _
        // Predicated region
        $region61: #{tpu_custom_call.1} parent=23 // pred_check
          %p1052 = pneg %p392
        $region62: #{tpu_custom_call.1} parent=23 // pred_check_branch
          %1054 = sbr.rel (%p1052) target = $region64
        $region63: #{tpu_custom_call.1} parent=23 // pred_region
          %p1055 = scmp.lt.s32.totalorder %s82, 1
          %s1056 = scalar_select %p1055, %s82, 1
          %s1057 = scalar_lea.vmem %s23, %s1056
        $region64: #{tpu_custom_call.1} parent=23 // pred_fallthru
          _
        // Predicated region
        $region65: #{tpu_custom_call.1} parent=23 // pred_check
          %p1058 = pneg %p418
        $region66: #{tpu_custom_call.1} parent=23 // pred_check_branch
          %1060 = sbr.rel (%p1058) target = $region68
        $region67: #{tpu_custom_call.1} parent=23 // pred_region
          %s1061 = sand.u32 %s74, 1
          %s1062 = scalar_lea.sflag [#allocation3], %s1061
          %s1063 = sand.u32 %s408, 1
          %s1064 = smul.addr %s1063, 16
          %s1065 = scalar_lea.vmem [#allocation10], %s1064
          %1067 = vsyncadd %s1062, 0
          %s1068 = smul.addr %s82, 4
          %s1069 = smul.addr %s1068, 4
          %s1070 = scalar_lea.hbm %s25, %s1069
          %s1071 = sshll.u32 %s1070, 4
          %s1072 = int_to_ptr.hbm [resolvable:$true] %s1071
          %s1073 = sshll.u32 %s1065, 4
          %s1074 = int_to_ptr.vmem [resolvable:$true] %s1073
          %1079 = dma.hbm_to_vmem [thread:$0]  %s1072, 256, %s1074, %s1062, 64, 64, 4
        $region68: #{tpu_custom_call.1} parent=23 // pred_fallthru
          _
        // Predicated region
        $region69: #{tpu_custom_call.1} parent=23 // pred_check
          %p1080 = pneg %p444
        $region70: #{tpu_custom_call.1} parent=23 // pred_check_branch
          %1082 = sbr.rel (%p1080) target = $region72
        $region71: #{tpu_custom_call.1} parent=23 // pred_region
          %p1083 = scmp.lt.s32.totalorder %s82, 1
          %s1084 = scalar_select %p1083, %s82, 1
          %s1085 = scalar_lea.vmem %s27, %s1084
        $region72: #{tpu_custom_call.1} parent=23 // pred_fallthru
          _
        // Predicated region
        $region73: #{tpu_custom_call.1} parent=23 // pred_check
          %p1086 = pneg %p470
        $region74: #{tpu_custom_call.1} parent=23 // pred_check_branch
          %1088 = sbr.rel (%p1086) target = $region76
        $region75: #{tpu_custom_call.1} parent=23 // pred_region
          %s1089 = sand.u32 %s74, 1
          %s1090 = scalar_lea.sflag [#allocation3], %s1089
          %s1091 = sand.u32 %s460, 1
          %s1092 = smul.addr %s1091, 16
          %s1093 = scalar_lea.vmem [#allocation11], %s1092
          %1095 = vsyncadd %s1090, 0
          %s1096 = smul.addr %s82, 4
          %s1097 = smul.addr %s1096, 4
          %s1098 = scalar_lea.hbm %s29, %s1097
          %s1099 = sshll.u32 %s1098, 4
          %s1100 = int_to_ptr.hbm [resolvable:$true] %s1099
          %s1101 = sshll.u32 %s1093, 4
          %s1102 = int_to_ptr.vmem [resolvable:$true] %s1101
          %1107 = dma.hbm_to_vmem [thread:$0]  %s1100, 256, %s1102, %s1090, 64, 64, 4
        $region76: #{tpu_custom_call.1} parent=23 // pred_fallthru
          _
        // Predicated region
        $region77: #{tpu_custom_call.1} parent=23 // pred_check
          %p1108 = pneg %p496
        $region78: #{tpu_custom_call.1} parent=23 // pred_check_branch
          %1110 = sbr.rel (%p1108) target = $region80
        $region79: #{tpu_custom_call.1} parent=23 // pred_region
          %p1111 = scmp.lt.s32.totalorder %s82, 1
          %s1112 = scalar_select %p1111, %s82, 1
          %s1113 = scalar_lea.vmem %s31, %s1112
        $region80: #{tpu_custom_call.1} parent=23 // pred_fallthru
          _
        // Predicated region
        $region81: #{tpu_custom_call.1} parent=23 // pred_check
          %p1114 = pneg %p522
        $region82: #{tpu_custom_call.1} parent=23 // pred_check_branch
          %1116 = sbr.rel (%p1114) target = $region84
        $region83: #{tpu_custom_call.1} parent=23 // pred_region
          %s1117 = sand.u32 %s74, 1
          %s1118 = scalar_lea.sflag [#allocation3], %s1117
          %s1119 = sand.u32 %s512, 1
          %s1120 = smul.addr %s1119, 16
          %s1121 = scalar_lea.vmem [#allocation12], %s1120
          %1123 = vsyncadd %s1118, 0
          %s1124 = smul.addr %s82, 4
          %s1125 = smul.addr %s1124, 4
          %s1126 = scalar_lea.hbm %s33, %s1125
          %s1127 = sshll.u32 %s1126, 4
          %s1128 = int_to_ptr.hbm [resolvable:$true] %s1127
          %s1129 = sshll.u32 %s1121, 4
          %s1130 = int_to_ptr.vmem [resolvable:$true] %s1129
          %1135 = dma.hbm_to_vmem [thread:$0]  %s1128, 256, %s1130, %s1118, 64, 64, 4
        $region84: #{tpu_custom_call.1} parent=23 // pred_fallthru
          _
        // Predicated region
        $region85: #{tpu_custom_call.1} parent=23 // pred_check
          %p1136 = pneg %p548
        $region86: #{tpu_custom_call.1} parent=23 // pred_check_branch
          %1138 = sbr.rel (%p1136) target = $region88
        $region87: #{tpu_custom_call.1} parent=23 // pred_region
          %p1139 = scmp.lt.s32.totalorder %s82, 1
          %s1140 = scalar_select %p1139, %s82, 1
          %s1141 = scalar_lea.vmem %s35, %s1140
        $region88: #{tpu_custom_call.1} parent=23 // pred_fallthru
          _
        // Predicated region
        $region89: #{tpu_custom_call.1} parent=23 // pred_check
          %p1142 = pneg %p574
        $region90: #{tpu_custom_call.1} parent=23 // pred_check_branch
          %1144 = sbr.rel (%p1142) target = $region92
        $region91: #{tpu_custom_call.1} parent=23 // pred_region
          %s1145 = sand.u32 %s74, 1
          %s1146 = scalar_lea.sflag [#allocation3], %s1145
          %s1147 = sand.u32 %s564, 1
          %s1148 = smul.addr %s1147, 16
          %s1149 = scalar_lea.vmem [#allocation13], %s1148
          %1151 = vsyncadd %s1146, 0
          %s1152 = smul.addr %s82, 4
          %s1153 = smul.addr %s1152, 4
          %s1154 = scalar_lea.hbm %s37, %s1153
          %s1155 = sshll.u32 %s1154, 4
          %s1156 = int_to_ptr.hbm [resolvable:$true] %s1155
          %s1157 = sshll.u32 %s1149, 4
          %s1158 = int_to_ptr.vmem [resolvable:$true] %s1157
          %1163 = dma.hbm_to_vmem [thread:$0]  %s1156, 256, %s1158, %s1146, 64, 64, 4
        $region92: #{tpu_custom_call.1} parent=23 // pred_fallthru
          _
        // Predicated region
        $region93: #{tpu_custom_call.1} parent=23 // pred_check
          %p1164 = pneg %p600
        $region94: #{tpu_custom_call.1} parent=23 // pred_check_branch
          %1166 = sbr.rel (%p1164) target = $region96
        $region95: #{tpu_custom_call.1} parent=23 // pred_region
          %p1167 = scmp.lt.s32.totalorder %s82, 1
          %s1168 = scalar_select %p1167, %s82, 1
          %s1169 = scalar_lea.vmem %s39, %s1168
        $region96: #{tpu_custom_call.1} parent=23 // pred_fallthru
          _
        // Predicated region
        $region97: #{tpu_custom_call.1} parent=23 // pred_check
          %p1170 = pneg %p626
        $region98: #{tpu_custom_call.1} parent=23 // pred_check_branch
          %1172 = sbr.rel (%p1170) target = $region100
        $region99: #{tpu_custom_call.1} parent=23 // pred_region
          %p1173 = scmp.lt.s32.totalorder %s82, 1
          %s1174 = scalar_select %p1173, %s82, 1
          %s1175 = smul.addr %s1174, 8
          %s1176 = smul.addr %s1175, 4
          %s1177 = scalar_lea.vmem %s41, %s1176
        $region100: #{tpu_custom_call.1} parent=23 // pred_fallthru
          _
        // Predicated region
        $region101: #{tpu_custom_call.1} parent=23 // pred_check
          %p1178 = pneg %p652
        $region102: #{tpu_custom_call.1} parent=23 // pred_check_branch
          %1180 = sbr.rel (%p1178) target = $region104
        $region103: #{tpu_custom_call.1} parent=23 // pred_region
          %p1181 = scmp.lt.s32.totalorder %s82, 1
          %s1182 = scalar_select %p1181, %s82, 1
          %s1183 = scalar_lea.vmem %s43, %s1182
        $region104: #{tpu_custom_call.1} parent=23 // pred_fallthru
          _
        // Predicated region
        $region105: #{tpu_custom_call.1} parent=23 // pred_check
          %p1184 = pneg %p678
        $region106: #{tpu_custom_call.1} parent=23 // pred_check_branch
          %1186 = sbr.rel (%p1184) target = $region108
        $region107: #{tpu_custom_call.1} parent=23 // pred_region
          %p1187 = scmp.lt.s32.totalorder %s82, 1
          %s1188 = scalar_select %p1187, %s82, 1
          %s1189 = scalar_lea.vmem %s45, %s1188
        $region108: #{tpu_custom_call.1} parent=23 // pred_fallthru
          _
        // Predicated region
        $region109: #{tpu_custom_call.1} parent=23 // pred_check
          %p1190 = pneg %p704
        $region110: #{tpu_custom_call.1} parent=23 // pred_check_branch
          %1192 = sbr.rel (%p1190) target = $region112
        $region111: #{tpu_custom_call.1} parent=23 // pred_region
          %s1193 = sand.u32 %s74, 1
          %s1194 = scalar_lea.sflag [#allocation3], %s1193
          %s1195 = sand.u32 %s694, 1
          %s1196 = scalar_lea.vmem [#allocation14], %s1195
          %1198 = vsyncadd %s1194, 0
          %s1199 = scalar_lea.hbm %s47, %s82
          %s1201 = sshll.u32 %s1199, 4
          %s1202 = int_to_ptr.hbm [resolvable:$true] %s1201
          %s1203 = sshll.u32 %s1196, 4
          %s1204 = int_to_ptr.vmem [resolvable:$true] %s1203
          %1206 = dma.hbm_to_vmem [thread:$0]  %s1202, 16, %s1204, %s1194
        $region112: #{tpu_custom_call.1} parent=23 // pred_fallthru
          _
        // Predicated region
        $region113: #{tpu_custom_call.1} parent=23 // pred_check
          %p1207 = pneg %p730
        $region114: #{tpu_custom_call.1} parent=23 // pred_check_branch
          %1209 = sbr.rel (%p1207) target = $region116
        $region115: #{tpu_custom_call.1} parent=23 // pred_region
          %p1210 = scmp.lt.s32.totalorder %s82, 1
          %s1211 = scalar_select %p1210, %s82, 1
          %s1212 = scalar_lea.vmem %s49, %s1211
        $region116: #{tpu_custom_call.1} parent=23 // pred_fallthru
          _
        // Predicated region
        $region117: #{tpu_custom_call.1} parent=23 // pred_check
          %p1213 = pneg %p756
        $region118: #{tpu_custom_call.1} parent=23 // pred_check_branch
          %1215 = sbr.rel (%p1213) target = $region120
        $region119: #{tpu_custom_call.1} parent=23 // pred_region
          %s1216 = sand.u32 %s74, 1
          %s1217 = scalar_lea.sflag [#allocation3], %s1216
          %s1218 = sand.u32 %s746, 1
          %s1219 = scalar_lea.vmem [#allocation15], %s1218
          %1221 = vsyncadd %s1217, 0
          %s1222 = scalar_lea.hbm %s51, %s82
          %s1224 = sshll.u32 %s1222, 4
          %s1225 = int_to_ptr.hbm [resolvable:$true] %s1224
          %s1226 = sshll.u32 %s1219, 4
          %s1227 = int_to_ptr.vmem [resolvable:$true] %s1226
          %1229 = dma.hbm_to_vmem [thread:$0]  %s1225, 16, %s1227, %s1217
        $region120: #{tpu_custom_call.1} parent=23 // pred_fallthru
          _
        // Predicated region
        $region121: #{tpu_custom_call.1} parent=23 // pred_check
          %p1230 = pneg %p782
        $region122: #{tpu_custom_call.1} parent=23 // pred_check_branch
          %1232 = sbr.rel (%p1230) target = $region124
        $region123: #{tpu_custom_call.1} parent=23 // pred_region
          %p1233 = scmp.lt.s32.totalorder %s82, 1
          %s1234 = scalar_select %p1233, %s82, 1
          %s1235 = scalar_lea.vmem %s53, %s1234
        $region124: #{tpu_custom_call.1} parent=23 // pred_fallthru
          _
        // Predicated region
        $region125: #{tpu_custom_call.1} parent=23 // pred_check
          %p1236 = pneg %p808
        $region126: #{tpu_custom_call.1} parent=23 // pred_check_branch
          %1238 = sbr.rel (%p1236) target = $region128
        $region127: #{tpu_custom_call.1} parent=23 // pred_region
          %s1239 = sand.u32 %s74, 1
          %s1240 = scalar_lea.sflag [#allocation3], %s1239
          %s1241 = sand.u32 %s798, 1
          %s1242 = scalar_lea.vmem [#allocation16], %s1241
          %1244 = vsyncadd %s1240, 0
          %s1245 = scalar_lea.hbm %s55, %s82
          %s1247 = sshll.u32 %s1245, 4
          %s1248 = int_to_ptr.hbm [resolvable:$true] %s1247
          %s1249 = sshll.u32 %s1242, 4
          %s1250 = int_to_ptr.vmem [resolvable:$true] %s1249
          %1252 = dma.hbm_to_vmem [thread:$0]  %s1248, 16, %s1250, %s1240
        $region128: #{tpu_custom_call.1} parent=23 // pred_fallthru
          _
      $region24: #{tpu_custom_call.1} parent=5 // pred_fallthru
        _
      %p1253 = scmp.le.s32.totalorder 1, %s74
      %p1254 = scmp.lt.s32.totalorder %s74, 3
      %p1255 = pnand %p1253, %p1254
      %p1256 = pneg %p1255
      // Predicated region
      $region129: #{tpu_custom_call.1} parent=5 // pred_check
        _
      $region130: #{tpu_custom_call.1} parent=5 // pred_check_branch
        %1258 = sbr.rel (%p1255) target = $region132
      $region131: #{tpu_custom_call.1} parent=5 // pred_region
        %s1259 = ssub.s32 %s74, 1
        // Predicated region
        $region133: #{tpu_custom_call.1} parent=131 // pred_check
          %p1260 = pneg %p112
        $region134: #{tpu_custom_call.1} parent=131 // pred_check_branch
          %1262 = sbr.rel (%p1260) target = $region136
        $region135: #{tpu_custom_call.1} parent=131 // pred_region
          %1264 = dma.done [#allocation3], 256
        $region136: #{tpu_custom_call.1} parent=131 // pred_fallthru
          _
        // Predicated region
        $region137: #{tpu_custom_call.1} parent=131 // pred_check
          %p1265 = pneg %p138
        $region138: #{tpu_custom_call.1} parent=131 // pred_check_branch
          %1267 = sbr.rel (%p1265) target = $region140
        $region139: #{tpu_custom_call.1} parent=131 // pred_region
          %1269 = dma.done [#allocation6], 256
        $region140: #{tpu_custom_call.1} parent=131 // pred_fallthru
          _
        %s1270 = sand.u32 %s79, 1
        %s1271 = scalar_lea.sflag [#allocation3], %s1270
        %s1272 = sand.u32 %s177, 1
        %s1273 = scalar_lea.vmem [#allocation7], %s1272
        // Predicated region
        $region141: #{tpu_custom_call.1} parent=131 // pred_check
          %p1274 = pneg %p190
        $region142: #{tpu_custom_call.1} parent=131 // pred_check_branch
          %1276 = sbr.rel (%p1274) target = $region144
        $region143: #{tpu_custom_call.1} parent=131 // pred_region
          %1278 = dma.done %s1271, 16
        $region144: #{tpu_custom_call.1} parent=131 // pred_fallthru
          _
        %s1279 = sand.u32 %s79, 1
        %s1280 = scalar_lea.sflag [#allocation3], %s1279
        %s1281 = sand.u32 %s307, 1
        %s1282 = smul.addr %s1281, 16
        %s1283 = scalar_lea.vmem [#allocation8], %s1282
        // Predicated region
        $region145: #{tpu_custom_call.1} parent=131 // pred_check
          %p1284 = pneg %p320
        $region146: #{tpu_custom_call.1} parent=131 // pred_check_branch
          %1286 = sbr.rel (%p1284) target = $region148
        $region147: #{tpu_custom_call.1} parent=131 // pred_region
          %1288 = dma.done %s1280, 256
        $region148: #{tpu_custom_call.1} parent=131 // pred_fallthru
          _
        %s1289 = sand.u32 %s79, 1
        %s1290 = scalar_lea.sflag [#allocation3], %s1289
        %s1291 = sand.u32 %s359, 1
        %s1292 = smul.addr %s1291, 16
        %s1293 = scalar_lea.vmem [#allocation9], %s1292
        // Predicated region
        $region149: #{tpu_custom_call.1} parent=131 // pred_check
          %p1294 = pneg %p372
        $region150: #{tpu_custom_call.1} parent=131 // pred_check_branch
          %1296 = sbr.rel (%p1294) target = $region152
        $region151: #{tpu_custom_call.1} parent=131 // pred_region
          %1298 = dma.done %s1290, 256
        $region152: #{tpu_custom_call.1} parent=131 // pred_fallthru
          _
        %s1299 = sand.u32 %s79, 1
        %s1300 = scalar_lea.sflag [#allocation3], %s1299
        %s1301 = sand.u32 %s411, 1
        %s1302 = smul.addr %s1301, 16
        %s1303 = scalar_lea.vmem [#allocation10], %s1302
        // Predicated region
        $region153: #{tpu_custom_call.1} parent=131 // pred_check
          %p1304 = pneg %p424
        $region154: #{tpu_custom_call.1} parent=131 // pred_check_branch
          %1306 = sbr.rel (%p1304) target = $region156
        $region155: #{tpu_custom_call.1} parent=131 // pred_region
          %1308 = dma.done %s1300, 256
        $region156: #{tpu_custom_call.1} parent=131 // pred_fallthru
          _
        %s1309 = sand.u32 %s79, 1
        %s1310 = scalar_lea.sflag [#allocation3], %s1309
        %s1311 = sand.u32 %s463, 1
        %s1312 = smul.addr %s1311, 16
        %s1313 = scalar_lea.vmem [#allocation11], %s1312
        // Predicated region
        $region157: #{tpu_custom_call.1} parent=131 // pred_check
          %p1314 = pneg %p476
        $region158: #{tpu_custom_call.1} parent=131 // pred_check_branch
          %1316 = sbr.rel (%p1314) target = $region160
        $region159: #{tpu_custom_call.1} parent=131 // pred_region
          %1318 = dma.done %s1310, 256
        $region160: #{tpu_custom_call.1} parent=131 // pred_fallthru
          _
        %s1319 = sand.u32 %s79, 1
        %s1320 = scalar_lea.sflag [#allocation3], %s1319
        %s1321 = sand.u32 %s515, 1
        %s1322 = smul.addr %s1321, 16
        %s1323 = scalar_lea.vmem [#allocation12], %s1322
        // Predicated region
        $region161: #{tpu_custom_call.1} parent=131 // pred_check
          %p1324 = pneg %p528
        $region162: #{tpu_custom_call.1} parent=131 // pred_check_branch
          %1326 = sbr.rel (%p1324) target = $region164
        $region163: #{tpu_custom_call.1} parent=131 // pred_region
          %1328 = dma.done %s1320, 256
        $region164: #{tpu_custom_call.1} parent=131 // pred_fallthru
          _
        %s1329 = sand.u32 %s79, 1
        %s1330 = scalar_lea.sflag [#allocation3], %s1329
        %s1331 = sand.u32 %s567, 1
        %s1332 = smul.addr %s1331, 16
        %s1333 = scalar_lea.vmem [#allocation13], %s1332
        // Predicated region
        $region165: #{tpu_custom_call.1} parent=131 // pred_check
          %p1334 = pneg %p580
        $region166: #{tpu_custom_call.1} parent=131 // pred_check_branch
          %1336 = sbr.rel (%p1334) target = $region168
        $region167: #{tpu_custom_call.1} parent=131 // pred_region
          %1338 = dma.done %s1330, 256
        $region168: #{tpu_custom_call.1} parent=131 // pred_fallthru
          _
        %s1339 = sand.u32 %s79, 1
        %s1340 = scalar_lea.sflag [#allocation3], %s1339
        %s1341 = sand.u32 %s697, 1
        %s1342 = scalar_lea.vmem [#allocation14], %s1341
        // Predicated region
        $region169: #{tpu_custom_call.1} parent=131 // pred_check
          %p1343 = pneg %p710
        $region170: #{tpu_custom_call.1} parent=131 // pred_check_branch
          %1345 = sbr.rel (%p1343) target = $region172
        $region171: #{tpu_custom_call.1} parent=131 // pred_region
          %1347 = dma.done %s1340, 16
        $region172: #{tpu_custom_call.1} parent=131 // pred_fallthru
          _
        %s1348 = sand.u32 %s79, 1
        %s1349 = scalar_lea.sflag [#allocation3], %s1348
        %s1350 = sand.u32 %s749, 1
        %s1351 = scalar_lea.vmem [#allocation15], %s1350
        // Predicated region
        $region173: #{tpu_custom_call.1} parent=131 // pred_check
          %p1352 = pneg %p762
        $region174: #{tpu_custom_call.1} parent=131 // pred_check_branch
          %1354 = sbr.rel (%p1352) target = $region176
        $region175: #{tpu_custom_call.1} parent=131 // pred_region
          %1356 = dma.done %s1349, 16
        $region176: #{tpu_custom_call.1} parent=131 // pred_fallthru
          _
        %s1357 = sand.u32 %s79, 1
        %s1358 = scalar_lea.sflag [#allocation3], %s1357
        %s1359 = sand.u32 %s801, 1
        %s1360 = scalar_lea.vmem [#allocation16], %s1359
        // Predicated region
        $region177: #{tpu_custom_call.1} parent=131 // pred_check
          %p1361 = pneg %p814
        $region178: #{tpu_custom_call.1} parent=131 // pred_check_branch
          %1363 = sbr.rel (%p1361) target = $region180
        $region179: #{tpu_custom_call.1} parent=131 // pred_region
          %1365 = dma.done %s1358, 16
        $region180: #{tpu_custom_call.1} parent=131 // pred_fallthru
          _
        %p1366 = pneg %p112
        %p1367 = pneg %p109
        %p1368 = pneg %p138
        %p1369 = pneg %p135
        %p1370 = scmp.lt.s32.totalorder %s84, 1
        %s1371 = scalar_select %p1370, %s84, 1
        %s1372 = smul.addr %s1371, 4
        %s1373 = smul.addr %s1372, 4
        %s1374 = scalar_lea.vmem %s5, %s1373
        %p1375 = pneg %p164
        %p1376 = pneg %p161
        %s1377 = sand.u32 %s79, 1
        %s1378 = scalar_lea.sflag [#allocation3], %s1377
        %s1379 = sand.u32 %s177, 1
        %s1380 = scalar_lea.vmem [#allocation7], %s1379
        %p1381 = pneg %p190
        %p1382 = pneg %p187
        %p1383 = scmp.lt.s32.totalorder %s84, 1
        %s1384 = scalar_select %p1383, %s84, 1
        %s1385 = smul.addr %s1384, 4
        %s1386 = smul.addr %s1385, 4
        %s1387 = scalar_lea.vmem %s9, %s1386
        %p1388 = pneg %p216
        %p1389 = pneg %p213
        %p1390 = scmp.lt.s32.totalorder %s84, 1
        %s1391 = scalar_select %p1390, %s84, 1
        %s1392 = scalar_lea.vmem %s11, %s1391
        %p1393 = pneg %p242
        %p1394 = pneg %p239
        %p1395 = scmp.lt.s32.totalorder %s84, 1
        %s1396 = scalar_select %p1395, %s84, 1
        %s1397 = smul.addr %s1396, 4
        %s1398 = smul.addr %s1397, 4
        %s1399 = scalar_lea.vmem %s13, %s1398
        %p1400 = pneg %p268
        %p1401 = pneg %p265
        %p1402 = scmp.lt.s32.totalorder %s84, 1
        %s1403 = scalar_select %p1402, %s84, 1
        %s1404 = scalar_lea.vmem %s15, %s1403
        %p1405 = pneg %p294
        %p1406 = pneg %p291
        %s1407 = sand.u32 %s79, 1
        %s1408 = scalar_lea.sflag [#allocation3], %s1407
        %s1409 = sand.u32 %s307, 1
        %s1410 = smul.addr %s1409, 16
        %s1411 = scalar_lea.vmem [#allocation8], %s1410
        %p1412 = pneg %p320
        %p1413 = pneg %p317
        %p1414 = scmp.lt.s32.totalorder %s84, 1
        %s1415 = scalar_select %p1414, %s84, 1
        %s1416 = scalar_lea.vmem %s19, %s1415
        %p1417 = pneg %p346
        %p1418 = pneg %p343
        %s1419 = sand.u32 %s79, 1
        %s1420 = scalar_lea.sflag [#allocation3], %s1419
        %s1421 = sand.u32 %s359, 1
        %s1422 = smul.addr %s1421, 16
        %s1423 = scalar_lea.vmem [#allocation9], %s1422
        %p1424 = pneg %p372
        %p1425 = pneg %p369
        %p1426 = scmp.lt.s32.totalorder %s84, 1
        %s1427 = scalar_select %p1426, %s84, 1
        %s1428 = scalar_lea.vmem %s23, %s1427
        %p1429 = pneg %p398
        %p1430 = pneg %p395
        %s1431 = sand.u32 %s79, 1
        %s1432 = scalar_lea.sflag [#allocation3], %s1431
        %s1433 = sand.u32 %s411, 1
        %s1434 = smul.addr %s1433, 16
        %s1435 = scalar_lea.vmem [#allocation10], %s1434
        %p1436 = pneg %p424
        %p1437 = pneg %p421
        %p1438 = scmp.lt.s32.totalorder %s84, 1
        %s1439 = scalar_select %p1438, %s84, 1
        %s1440 = scalar_lea.vmem %s27, %s1439
        %p1441 = pneg %p450
        %p1442 = pneg %p447
        %s1443 = sand.u32 %s79, 1
        %s1444 = scalar_lea.sflag [#allocation3], %s1443
        %s1445 = sand.u32 %s463, 1
        %s1446 = smul.addr %s1445, 16
        %s1447 = scalar_lea.vmem [#allocation11], %s1446
        %p1448 = pneg %p476
        %p1449 = pneg %p473
        %p1450 = scmp.lt.s32.totalorder %s84, 1
        %s1451 = scalar_select %p1450, %s84, 1
        %s1452 = scalar_lea.vmem %s31, %s1451
        %p1453 = pneg %p502
        %p1454 = pneg %p499
        %s1455 = sand.u32 %s79, 1
        %s1456 = scalar_lea.sflag [#allocation3], %s1455
        %s1457 = sand.u32 %s515, 1
        %s1458 = smul.addr %s1457, 16
        %s1459 = scalar_lea.vmem [#allocation12], %s1458
        %p1460 = pneg %p528
        %p1461 = pneg %p525
        %p1462 = scmp.lt.s32.totalorder %s84, 1
        %s1463 = scalar_select %p1462, %s84, 1
        %s1464 = scalar_lea.vmem %s35, %s1463
        %p1465 = pneg %p554
        %p1466 = pneg %p551
        %s1467 = sand.u32 %s79, 1
        %s1468 = scalar_lea.sflag [#allocation3], %s1467
        %s1469 = sand.u32 %s567, 1
        %s1470 = smul.addr %s1469, 16
        %s1471 = scalar_lea.vmem [#allocation13], %s1470
        %p1472 = pneg %p580
        %p1473 = pneg %p577
        %p1474 = scmp.lt.s32.totalorder %s84, 1
        %s1475 = scalar_select %p1474, %s84, 1
        %s1476 = scalar_lea.vmem %s39, %s1475
        %p1477 = pneg %p606
        %p1478 = pneg %p603
        %p1479 = scmp.lt.s32.totalorder %s84, 1
        %s1480 = scalar_select %p1479, %s84, 1
        %s1481 = smul.addr %s1480, 8
        %s1482 = smul.addr %s1481, 4
        %s1483 = scalar_lea.vmem %s41, %s1482
        %p1484 = pneg %p632
        %p1485 = pneg %p629
        %p1486 = scmp.lt.s32.totalorder %s84, 1
        %s1487 = scalar_select %p1486, %s84, 1
        %s1488 = scalar_lea.vmem %s43, %s1487
        %p1489 = pneg %p658
        %p1490 = pneg %p655
        %p1491 = scmp.lt.s32.totalorder %s84, 1
        %s1492 = scalar_select %p1491, %s84, 1
        %s1493 = scalar_lea.vmem %s45, %s1492
        %p1494 = pneg %p684
        %p1495 = pneg %p681
        %s1496 = sand.u32 %s79, 1
        %s1497 = scalar_lea.sflag [#allocation3], %s1496
        %s1498 = sand.u32 %s697, 1
        %s1499 = scalar_lea.vmem [#allocation14], %s1498
        %p1500 = pneg %p710
        %p1501 = pneg %p707
        %p1502 = scmp.lt.s32.totalorder %s84, 1
        %s1503 = scalar_select %p1502, %s84, 1
        %s1504 = scalar_lea.vmem %s49, %s1503
        %p1505 = pneg %p736
        %p1506 = pneg %p733
        %s1507 = sand.u32 %s79, 1
        %s1508 = scalar_lea.sflag [#allocation3], %s1507
        %s1509 = sand.u32 %s749, 1
        %s1510 = scalar_lea.vmem [#allocation15], %s1509
        %p1511 = pneg %p762
        %p1512 = pneg %p759
        %p1513 = scmp.lt.s32.totalorder %s84, 1
        %s1514 = scalar_select %p1513, %s84, 1
        %s1515 = scalar_lea.vmem %s53, %s1514
        %p1516 = pneg %p788
        %p1517 = pneg %p785
        %s1518 = sand.u32 %s79, 1
        %s1519 = scalar_lea.sflag [#allocation3], %s1518
        %s1520 = sand.u32 %s801, 1
        %s1521 = scalar_lea.vmem [#allocation16], %s1520
        %p1522 = pneg %p814
        %p1523 = pneg %p811
        %p1524 = pneg %p840
        %p1525 = pneg %p837
        %p1526 = pneg %p868
        %p1527 = pneg %p865
        %s1528 = sand.u32 %s79, 1
        %s1529 = scalar_lea.sflag [#allocation19], %s1528
        %s1530 = sand.u32 %s855, 1
        %s1531 = smul.addr %s1530, 64
        %s1532 = scalar_lea.vmem [#allocation18], %s1531
        %p1533 = pneg %p896
        %p1534 = pneg %p893
        %s1535 = sand.u32 %s79, 1
        %s1536 = scalar_lea.sflag [#allocation19], %s1535
        %s1537 = sand.u32 %s883, 1
        %s1538 = smul.addr %s1537, 64
        %s1539 = scalar_lea.vmem [#allocation20], %s1538
        %s1540 = smul.u32 2, %s83
        %s1541 = smul.u32 2, %s83
        %p1542 = scmp.lt.s32.totalorder %s84, 1
        %s1543 = scalar_select %p1542, %s84, 1
        %s1544 = smul.addr %s1543, 4
        %s1545 = smul.addr %s1544, 4
        %s1546 = scalar_lea.vmem %s5, %s1545
        %p1547 = scmp.lt.s32.totalorder %s84, 1
        %s1548 = scalar_select %p1547, %s84, 1
        %s1549 = smul.addr %s1548, 4
        %s1550 = smul.addr %s1549, 4
        %s1551 = scalar_lea.vmem %s9, %s1550
        %p1552 = scmp.lt.s32.totalorder %s84, 1
        %s1553 = scalar_select %p1552, %s84, 1
        %s1554 = scalar_lea.vmem %s11, %s1553
        %p1555 = scmp.lt.s32.totalorder %s84, 1
        %s1556 = scalar_select %p1555, %s84, 1
        %s1557 = smul.addr %s1556, 4
        %s1558 = smul.addr %s1557, 4
        %s1559 = scalar_lea.vmem %s13, %s1558
        %p1560 = scmp.lt.s32.totalorder %s84, 1
        %s1561 = scalar_select %p1560, %s84, 1
        %s1562 = scalar_lea.vmem %s15, %s1561
        %p1563 = scmp.lt.s32.totalorder %s84, 1
        %s1564 = scalar_select %p1563, %s84, 1
        %s1565 = scalar_lea.vmem %s19, %s1564
        %p1566 = scmp.lt.s32.totalorder %s84, 1
        %s1567 = scalar_select %p1566, %s84, 1
        %s1568 = scalar_lea.vmem %s23, %s1567
        %p1569 = scmp.lt.s32.totalorder %s84, 1
        %s1570 = scalar_select %p1569, %s84, 1
        %s1571 = scalar_lea.vmem %s27, %s1570
        %p1572 = scmp.lt.s32.totalorder %s84, 1
        %s1573 = scalar_select %p1572, %s84, 1
        %s1574 = scalar_lea.vmem %s31, %s1573
        %p1575 = scmp.lt.s32.totalorder %s84, 1
        %s1576 = scalar_select %p1575, %s84, 1
        %s1577 = scalar_lea.vmem %s35, %s1576
        %p1578 = scmp.lt.s32.totalorder %s84, 1
        %s1579 = scalar_select %p1578, %s84, 1
        %s1580 = scalar_lea.vmem %s39, %s1579
        %p1581 = scmp.lt.s32.totalorder %s84, 1
        %s1582 = scalar_select %p1581, %s84, 1
        %s1583 = smul.addr %s1582, 8
        %s1584 = smul.addr %s1583, 4
        %s1585 = scalar_lea.vmem %s41, %s1584
        %p1586 = scmp.lt.s32.totalorder %s84, 1
        %s1587 = scalar_select %p1586, %s84, 1
        %s1588 = scalar_lea.vmem %s43, %s1587
        %p1589 = scmp.lt.s32.totalorder %s84, 1
        %s1590 = scalar_select %p1589, %s84, 1
        %s1591 = scalar_lea.vmem %s45, %s1590
        %p1592 = scmp.lt.s32.totalorder %s84, 1
        %s1593 = scalar_select %p1592, %s84, 1
        %s1594 = scalar_lea.vmem %s49, %s1593
        %p1595 = scmp.lt.s32.totalorder %s84, 1
        %s1596 = scalar_select %p1595, %s84, 1
        %s1597 = scalar_lea.vmem %s53, %s1596
        %s1598 = smul.u32 2, %s83
        %s1599 = smul.u32 8, %s83
        %s1600 = smul.u32 8, %s83
        %p1602 = scmp.eq.s32.totalorder %s84, 0
        // Predicated region
        $region181: #{tpu_custom_call.1} parent=131 // pred_check
          %p1603 = pneg %p1602
        $region182: #{tpu_custom_call.1} parent=131 // pred_check_branch
          %1605 = sbr.rel (%p1603) target = $region184
        $region183: #{tpu_custom_call.1} parent=131 // pred_region
          %v1606 = vld [vmem:[#allocation2] sm:$0xff]
          %v1607 = vld [vmem:[#allocation2 + $0x8] sm:$0xff]
          %vm1608 = vcmask 261120
          %1609 = vst.msk [vmem:[#allocation17] sm:$0xff] %vm1608, %v1606
          %1610 = vst.msk [vmem:[#allocation17 + $0x8] sm:$0xff] %vm1608, %v1607
        $region184: #{tpu_custom_call.1} parent=131 // pred_fallthru
          _
        %v1611 = vld [vmem:[#allocation17] sm:$0xff]
        %v1612 = vld [vmem:[#allocation17 + $0x8] sm:$0xff]
        %v1613 = vld [vmem:[#allocation5] sm:$0xff]
        %v1614 = vld [vmem:[#allocation5 + $0x8] sm:$0xff]
        %v1615 = vpack.c.bf16 %v1614, %v1613
        %v1616 = vpack.c.bf16 %v1612, %v1611
        %v1617 = vld [vmem:[%s1546] sm:$0xf]
        %v1618 = vld [vmem:[%s1546 + $0x4] sm:$0xf]
        %v1619 = vld [vmem:[%s1546 + $0x8] sm:$0xf]
        %v1620 = vld [vmem:[%s1546 + $0xc] sm:$0xf]
        %v1621 = vld [vmem:[%s1273] sm:$0x1]
        %v1623 = vperm.slane %v1621, 0
        %v1629 = vunpack.c.l.b16 %v1617
        %v1630 = vunpack.c.l.b16 %v1618
        %v1631 = vunpack.c.l.b16 %v1619
        %v1632 = vunpack.c.l.b16 %v1620
        %v1633 = vpack.c.b16 %v1630, %v1629
        %v1634 = vpack.c.b16 %v1632, %v1631
        %vm1637 = vcmask 261120
        %v1639 = vsel %vm1637, %v1616, 0
        %1641 = vmatpush.bf16.msra.mxu0 0
        %1642 = vmatpush.bf16.msra.mxu0 0
        %1643 = vmatpush.bf16.msra.mxu0 0
        %1644 = vmatpush.bf16.msra.mxu0 0
        %1645 = vmatpush.bf16.msra.mxu0 0
        %1646 = vmatpush.bf16.msra.mxu0 0
        %1647 = vmatpush.bf16.msra.mxu0 %v1634
        %1648 = vmatpush.bf16.msra.mxu0 %v1633
        %1649 = vmatmul.bf16.gmra.mxu0 %v1639
        %v1650 = vpop.f32.mrf.mxu0
        %v1651 = vadd.f32 %v1623, %v1650
        %v1652 = vpop.f32.mrf.mxu0
        %v1653 = vadd.f32 %v1623, %v1652
        %1654 = vdwg.mxu0
        %v1655 = vmul.f32 %v1651, 0.35355338
        %v1656 = vmul.f32 %v1653, 0.35355338
        %v1657 = vld [vmem:[%s1551] sm:$0xf]
        %v1658 = vld [vmem:[%s1551 + $0x4] sm:$0xf]
        %v1659 = vld [vmem:[%s1551 + $0x8] sm:$0xf]
        %v1660 = vld [vmem:[%s1551 + $0xc] sm:$0xf]
        %v1661 = vld [vmem:[%s1554] sm:$0x1]
        %v1663 = vperm.slane %v1661, 0
        %v1669 = vunpack.c.l.b16 %v1657
        %v1670 = vunpack.c.l.b16 %v1658
        %v1671 = vunpack.c.l.b16 %v1659
        %v1672 = vunpack.c.l.b16 %v1660
        %v1673 = vpack.c.b16 %v1670, %v1669
        %v1674 = vpack.c.b16 %v1672, %v1671
        %1677 = vmatpush.bf16.msra.mxu0 0
        %1678 = vmatpush.bf16.msra.mxu0 0
        %1679 = vmatpush.bf16.msra.mxu0 0
        %1680 = vmatpush.bf16.msra.mxu0 0
        %1681 = vmatpush.bf16.msra.mxu0 0
        %1682 = vmatpush.bf16.msra.mxu0 0
        %1683 = vmatpush.bf16.msra.mxu0 %v1674
        %1684 = vmatpush.bf16.msra.mxu0 %v1673
        %1685 = vmatmul.bf16.gmra.mxu0 %v1639
        %v1686 = vpop.f32.mrf.mxu0
        %v1687 = vadd.f32 %v1663, %v1686
        %v1688 = vpop.f32.mrf.mxu0
        %v1689 = vadd.f32 %v1663, %v1688
        %1690 = vdwg.mxu0
        %v1691 = vld [vmem:[%s1559] sm:$0xf]
        %v1692 = vld [vmem:[%s1559 + $0x4] sm:$0xf]
        %v1693 = vld [vmem:[%s1559 + $0x8] sm:$0xf]
        %v1694 = vld [vmem:[%s1559 + $0xc] sm:$0xf]
        %v1695 = vld [vmem:[%s1562] sm:$0x1]
        %v1697 = vperm.slane %v1695, 0
        %v1703 = vunpack.c.l.b16 %v1691
        %v1704 = vunpack.c.l.b16 %v1692
        %v1705 = vunpack.c.l.b16 %v1693
        %v1706 = vunpack.c.l.b16 %v1694
        %v1707 = vpack.c.b16 %v1704, %v1703
        %v1708 = vpack.c.b16 %v1706, %v1705
        %1711 = vmatpush.bf16.msra.mxu0 0
        %1712 = vmatpush.bf16.msra.mxu0 0
        %1713 = vmatpush.bf16.msra.mxu0 0
        %1714 = vmatpush.bf16.msra.mxu0 0
        %1715 = vmatpush.bf16.msra.mxu0 0
        %1716 = vmatpush.bf16.msra.mxu0 0
        %1717 = vmatpush.bf16.msra.mxu0 %v1708
        %1718 = vmatpush.bf16.msra.mxu0 %v1707
        %1719 = vmatmul.bf16.gmra.mxu0 %v1639
        %v1720 = vpop.f32.mrf.mxu0
        %v1721 = vadd.f32 %v1697, %v1720
        %v1722 = vpop.f32.mrf.mxu0
        %v1723 = vadd.f32 %v1697, %v1722
        %1724 = vdwg.mxu0
        %1726 = vrot.lane.b32.xlu0 %v1655, 120
        %v1727 = vpop.permute.xlu0 %1726
        %1729 = vrot.lane.b32.xlu0 %v1655, 112
        %v1730 = vpop.permute.xlu0 %1729
        %1732 = vrot.lane.b32.xlu0 %v1655, 104
        %v1733 = vpop.permute.xlu0 %1732
        %1736 = vrot.lane.b32.xlu0 %v1656, 120
        %v1737 = vpop.permute.xlu0 %1736
        %1739 = vrot.lane.b32.xlu0 %v1656, 112
        %v1740 = vpop.permute.xlu0 %1739
        %1742 = vrot.lane.b32.xlu0 %v1656, 104
        %v1743 = vpop.permute.xlu0 %1742
        %v1745 = vpack.c.bf16 %v1655, %v1655
        %v1746 = vpack.c.bf16 %v1727, %v1727
        %v1747 = vpack.c.bf16 %v1730, %v1730
        %v1748 = vpack.c.bf16 %v1733, %v1733
        %v1749 = vpack.c.bf16 %v1656, %v1656
        %v1750 = vpack.c.bf16 %v1737, %v1737
        %v1751 = vpack.c.bf16 %v1740, %v1740
        %v1752 = vpack.c.bf16 %v1743, %v1743
        %1754 = vrot.lane.b32.xlu0 %v1687, 120
        %v1755 = vpop.permute.xlu0 %1754
        %1757 = vrot.lane.b32.xlu0 %v1687, 112
        %v1758 = vpop.permute.xlu0 %1757
        %1760 = vrot.lane.b32.xlu0 %v1687, 104
        %v1761 = vpop.permute.xlu0 %1760
        %1764 = vrot.lane.b32.xlu0 %v1689, 120
        %v1765 = vpop.permute.xlu0 %1764
        %1767 = vrot.lane.b32.xlu0 %v1689, 112
        %v1768 = vpop.permute.xlu0 %1767
        %1770 = vrot.lane.b32.xlu0 %v1689, 104
        %v1771 = vpop.permute.xlu0 %1770
        %v1773 = vpack.c.bf16 %v1687, %v1687
        %v1774 = vpack.c.bf16 %v1755, %v1755
        %v1775 = vpack.c.bf16 %v1758, %v1758
        %v1776 = vpack.c.bf16 %v1761, %v1761
        %v1777 = vpack.c.bf16 %v1689, %v1689
        %v1778 = vpack.c.bf16 %v1765, %v1765
        %v1779 = vpack.c.bf16 %v1768, %v1768
        %v1780 = vpack.c.bf16 %v1771, %v1771
        %1782 = vrot.lane.b32.xlu0 %v1721, 120
        %v1783 = vpop.permute.xlu0 %1782
        %1785 = vrot.lane.b32.xlu0 %v1721, 112
        %v1786 = vpop.permute.xlu0 %1785
        %1788 = vrot.lane.b32.xlu0 %v1721, 104
        %v1789 = vpop.permute.xlu0 %1788
        %1792 = vrot.lane.b32.xlu0 %v1723, 120
        %v1793 = vpop.permute.xlu0 %1792
        %1795 = vrot.lane.b32.xlu0 %v1723, 112
        %v1796 = vpop.permute.xlu0 %1795
        %1798 = vrot.lane.b32.xlu0 %v1723, 104
        %v1799 = vpop.permute.xlu0 %1798
        %v1801 = vpack.c.bf16 %v1721, %v1721
        %v1802 = vpack.c.bf16 %v1783, %v1783
        %v1803 = vpack.c.bf16 %v1786, %v1786
        %v1804 = vpack.c.bf16 %v1789, %v1789
        %v1805 = vpack.c.bf16 %v1723, %v1723
        %v1806 = vpack.c.bf16 %v1793, %v1793
        %v1807 = vpack.c.bf16 %v1796, %v1796
        %v1808 = vpack.c.bf16 %v1799, %v1799
        %vm1809 = vcmask 64512
        %v1811 = vsel %vm1809, %v1745, 0
        %v1814 = vsel %vm1809, %v1773, 0
        %1816 = vmatpush.bf16.xpose.msra.mxu0 0
        %1817 = vmatpush.bf16.xpose.msra.mxu0 0
        %1818 = vmatpush.bf16.xpose.msra.mxu0 0
        %1819 = vmatpush.bf16.xpose.msra.mxu0 0
        %1820 = vmatpush.bf16.xpose.msra.mxu0 0
        %1821 = vmatpush.bf16.xpose.msra.mxu0 0
        %1822 = vmatpush.bf16.xpose.msra.mxu0 0
        %1823 = vmatpush.bf16.xpose.msra.mxu0 %v1814
        %1824 = vmatmul.bf16.gmra.mxu0 %v1811
        %v1825 = vpop.f32.mrf.mxu0
        %v1826 = vadd.f32 0.0, %v1825
        %v1827 = vpop.f32.mrf.mxu0
        %1828 = vdwg.mxu0
        %v1830 = vsel %vm1809, %v1746, 0
        %v1833 = vsel %vm1809, %v1774, 0
        %1835 = vmatpush.bf16.xpose.msra.mxu0 0
        %1836 = vmatpush.bf16.xpose.msra.mxu0 0
        %1837 = vmatpush.bf16.xpose.msra.mxu0 0
        %1838 = vmatpush.bf16.xpose.msra.mxu0 0
        %1839 = vmatpush.bf16.xpose.msra.mxu0 0
        %1840 = vmatpush.bf16.xpose.msra.mxu0 0
        %1841 = vmatpush.bf16.xpose.msra.mxu0 0
        %1842 = vmatpush.bf16.xpose.msra.mxu0 %v1833
        %1843 = vmatmul.bf16.gmra.mxu0 %v1830
        %v1844 = vpop.f32.mrf.mxu0
        %v1845 = vadd.f32 0.0, %v1844
        %v1846 = vpop.f32.mrf.mxu0
        %1847 = vdwg.mxu0
        %v1849 = vsel %vm1809, %v1747, 0
        %v1852 = vsel %vm1809, %v1775, 0
        %1854 = vmatpush.bf16.xpose.msra.mxu0 0
        %1855 = vmatpush.bf16.xpose.msra.mxu0 0
        %1856 = vmatpush.bf16.xpose.msra.mxu0 0
        %1857 = vmatpush.bf16.xpose.msra.mxu0 0
        %1858 = vmatpush.bf16.xpose.msra.mxu0 0
        %1859 = vmatpush.bf16.xpose.msra.mxu0 0
        %1860 = vmatpush.bf16.xpose.msra.mxu0 0
        %1861 = vmatpush.bf16.xpose.msra.mxu0 %v1852
        %1862 = vmatmul.bf16.gmra.mxu0 %v1849
        %v1863 = vpop.f32.mrf.mxu0
        %v1864 = vadd.f32 0.0, %v1863
        %v1865 = vpop.f32.mrf.mxu0
        %1866 = vdwg.mxu0
        %v1868 = vsel %vm1809, %v1748, 0
        %v1871 = vsel %vm1809, %v1776, 0
        %1873 = vmatpush.bf16.xpose.msra.mxu0 0
        %1874 = vmatpush.bf16.xpose.msra.mxu0 0
        %1875 = vmatpush.bf16.xpose.msra.mxu0 0
        %1876 = vmatpush.bf16.xpose.msra.mxu0 0
        %1877 = vmatpush.bf16.xpose.msra.mxu0 0
        %1878 = vmatpush.bf16.xpose.msra.mxu0 0
        %1879 = vmatpush.bf16.xpose.msra.mxu0 0
        %1880 = vmatpush.bf16.xpose.msra.mxu0 %v1871
        %1881 = vmatmul.bf16.gmra.mxu0 %v1868
        %v1882 = vpop.f32.mrf.mxu0
        %v1883 = vadd.f32 0.0, %v1882
        %v1884 = vpop.f32.mrf.mxu0
        %1885 = vdwg.mxu0
        %v1887 = vsel %vm1809, %v1749, 0
        %v1890 = vsel %vm1809, %v1777, 0
        %1892 = vmatpush.bf16.xpose.msra.mxu0 0
        %1893 = vmatpush.bf16.xpose.msra.mxu0 0
        %1894 = vmatpush.bf16.xpose.msra.mxu0 0
        %1895 = vmatpush.bf16.xpose.msra.mxu0 0
        %1896 = vmatpush.bf16.xpose.msra.mxu0 0
        %1897 = vmatpush.bf16.xpose.msra.mxu0 0
        %1898 = vmatpush.bf16.xpose.msra.mxu0 0
        %1899 = vmatpush.bf16.xpose.msra.mxu0 %v1890
        %1900 = vmatmul.bf16.gmra.mxu0 %v1887
        %v1901 = vpop.f32.mrf.mxu0
        %v1902 = vadd.f32 0.0, %v1901
        %v1903 = vpop.f32.mrf.mxu0
        %1904 = vdwg.mxu0
        %v1906 = vsel %vm1809, %v1750, 0
        %v1909 = vsel %vm1809, %v1778, 0
        %1911 = vmatpush.bf16.xpose.msra.mxu0 0
        %1912 = vmatpush.bf16.xpose.msra.mxu0 0
        %1913 = vmatpush.bf16.xpose.msra.mxu0 0
        %1914 = vmatpush.bf16.xpose.msra.mxu0 0
        %1915 = vmatpush.bf16.xpose.msra.mxu0 0
        %1916 = vmatpush.bf16.xpose.msra.mxu0 0
        %1917 = vmatpush.bf16.xpose.msra.mxu0 0
        %1918 = vmatpush.bf16.xpose.msra.mxu0 %v1909
        %1919 = vmatmul.bf16.gmra.mxu0 %v1906
        %v1920 = vpop.f32.mrf.mxu0
        %v1921 = vadd.f32 0.0, %v1920
        %v1922 = vpop.f32.mrf.mxu0
        %1923 = vdwg.mxu0
        %v1925 = vsel %vm1809, %v1751, 0
        %v1928 = vsel %vm1809, %v1779, 0
        %1930 = vmatpush.bf16.xpose.msra.mxu0 0
        %1931 = vmatpush.bf16.xpose.msra.mxu0 0
        %1932 = vmatpush.bf16.xpose.msra.mxu0 0
        %1933 = vmatpush.bf16.xpose.msra.mxu0 0
        %1934 = vmatpush.bf16.xpose.msra.mxu0 0
        %1935 = vmatpush.bf16.xpose.msra.mxu0 0
        %1936 = vmatpush.bf16.xpose.msra.mxu0 0
        %1937 = vmatpush.bf16.xpose.msra.mxu0 %v1928
        %1938 = vmatmul.bf16.gmra.mxu0 %v1925
        %v1939 = vpop.f32.mrf.mxu0
        %v1940 = vadd.f32 0.0, %v1939
        %v1941 = vpop.f32.mrf.mxu0
        %1942 = vdwg.mxu0
        %v1944 = vsel %vm1809, %v1752, 0
        %v1947 = vsel %vm1809, %v1780, 0
        %1949 = vmatpush.bf16.xpose.msra.mxu0 0
        %1950 = vmatpush.bf16.xpose.msra.mxu0 0
        %1951 = vmatpush.bf16.xpose.msra.mxu0 0
        %1952 = vmatpush.bf16.xpose.msra.mxu0 0
        %1953 = vmatpush.bf16.xpose.msra.mxu0 0
        %1954 = vmatpush.bf16.xpose.msra.mxu0 0
        %1955 = vmatpush.bf16.xpose.msra.mxu0 0
        %1956 = vmatpush.bf16.xpose.msra.mxu0 %v1947
        %1957 = vmatmul.bf16.gmra.mxu0 %v1944
        %v1958 = vpop.f32.mrf.mxu0
        %v1959 = vadd.f32 0.0, %v1958
        %v1960 = vpop.f32.mrf.mxu0
        %1961 = vdwg.mxu0
        %v1962 = vsel %vm1809, %v1826, -inf
        %1963 = vmax.xlane.f32.xlu0 %v1962
        %v1964 = vpop.xlane.xlu0 %1963
        %v1965 = vsel %vm1809, %v1845, -inf
        %1966 = vmax.xlane.f32.xlu0 %v1965
        %v1967 = vpop.xlane.xlu0 %1966
        %v1968 = vsel %vm1809, %v1864, -inf
        %1969 = vmax.xlane.f32.xlu0 %v1968
        %v1970 = vpop.xlane.xlu0 %1969
        %v1971 = vsel %vm1809, %v1883, -inf
        %1972 = vmax.xlane.f32.xlu0 %v1971
        %v1973 = vpop.xlane.xlu0 %1972
        %v1974 = vsel %vm1809, %v1902, -inf
        %1975 = vmax.xlane.f32.xlu0 %v1974
        %v1976 = vpop.xlane.xlu0 %1975
        %v1977 = vsel %vm1809, %v1921, -inf
        %1978 = vmax.xlane.f32.xlu0 %v1977
        %v1979 = vpop.xlane.xlu0 %1978
        %v1980 = vsel %vm1809, %v1940, -inf
        %1981 = vmax.xlane.f32.xlu0 %v1980
        %v1982 = vpop.xlane.xlu0 %1981
        %v1983 = vsel %vm1809, %v1959, -inf
        %1984 = vmax.xlane.f32.xlu0 %v1983
        %v1985 = vpop.xlane.xlu0 %1984
        %v1986 = vsub.f32 %v1826, %v1964
        %v1987 = vsub.f32 %v1845, %v1967
        %v1988 = vsub.f32 %v1864, %v1970
        %v1989 = vsub.f32 %v1883, %v1973
        %v1990 = vsub.f32 %v1902, %v1976
        %v1991 = vsub.f32 %v1921, %v1979
        %v1992 = vsub.f32 %v1940, %v1982
        %v1993 = vsub.f32 %v1959, %v1985
        %v1994 = vmul.f32 %v1986, 1.442695
        %v1995 = vpow.pop %v1994
        %v1996 = vmul.f32 %v1987, 1.442695
        %v1997 = vpow.pop %v1996
        %v1998 = vmul.f32 %v1988, 1.442695
        %v1999 = vpow.pop %v1998
        %v2000 = vmul.f32 %v1989, 1.442695
        %v2001 = vpow.pop %v2000
        %v2002 = vmul.f32 %v1990, 1.442695
        %v2003 = vpow.pop %v2002
        %v2004 = vmul.f32 %v1991, 1.442695
        %v2005 = vpow.pop %v2004
        %v2006 = vmul.f32 %v1992, 1.442695
        %v2007 = vpow.pop %v2006
        %v2008 = vmul.f32 %v1993, 1.442695
        %v2009 = vpow.pop %v2008
        %v2010 = vsel %vm1809, %v1995, 0.0
        %2011 = vadd.xlane.f32.xlu0 %v2010
        %v2012 = vpop.xlane.xlu0 %2011
        %v2013 = vsel %vm1809, %v1997, 0.0
        %2014 = vadd.xlane.f32.xlu0 %v2013
        %v2015 = vpop.xlane.xlu0 %2014
        %v2016 = vsel %vm1809, %v1999, 0.0
        %2017 = vadd.xlane.f32.xlu0 %v2016
        %v2018 = vpop.xlane.xlu0 %2017
        %v2019 = vsel %vm1809, %v2001, 0.0
        %2020 = vadd.xlane.f32.xlu0 %v2019
        %v2021 = vpop.xlane.xlu0 %2020
        %v2022 = vsel %vm1809, %v2003, 0.0
        %2023 = vadd.xlane.f32.xlu0 %v2022
        %v2024 = vpop.xlane.xlu0 %2023
        %v2025 = vsel %vm1809, %v2005, 0.0
        %2026 = vadd.xlane.f32.xlu0 %v2025
        %v2027 = vpop.xlane.xlu0 %2026
        %v2028 = vsel %vm1809, %v2007, 0.0
        %2029 = vadd.xlane.f32.xlu0 %v2028
        %v2030 = vpop.xlane.xlu0 %2029
        %v2031 = vsel %vm1809, %v2009, 0.0
        %2032 = vadd.xlane.f32.xlu0 %v2031
        %v2033 = vpop.xlane.xlu0 %2032
        %v2034 = vrcp.pop %v2012
        %v2035 = vrcp.pop %v2015
        %v2036 = vrcp.pop %v2018
        %v2037 = vrcp.pop %v2021
        %v2038 = vrcp.pop %v2024
        %v2039 = vrcp.pop %v2027
        %v2040 = vrcp.pop %v2030
        %v2041 = vrcp.pop %v2033
        %v2042 = vmul.f32 %v1995, %v2034
        %v2043 = vmul.f32 %v1997, %v2035
        %v2044 = vmul.f32 %v1999, %v2036
        %v2045 = vmul.f32 %v2001, %v2037
        %v2046 = vmul.f32 %v2003, %v2038
        %v2047 = vmul.f32 %v2005, %v2039
        %v2048 = vmul.f32 %v2007, %v2040
        %v2049 = vmul.f32 %v2009, %v2041
        %2050 = vst.msk [vmem:[%s1532] sm:$0xff] %vm1809, %v2042
        %2051 = vst.msk [vmem:[%s1532 + $0x8] sm:$0xff] %vm1809, %v2043
        %2052 = vst.msk [vmem:[%s1532 + $0x10] sm:$0xff] %vm1809, %v2044
        %2053 = vst.msk [vmem:[%s1532 + $0x18] sm:$0xff] %vm1809, %v2045
        %2054 = vst.msk [vmem:[%s1532 + $0x20] sm:$0xff] %vm1809, %v2046
        %2055 = vst.msk [vmem:[%s1532 + $0x28] sm:$0xff] %vm1809, %v2047
        %2056 = vst.msk [vmem:[%s1532 + $0x30] sm:$0xff] %vm1809, %v2048
        %2057 = vst.msk [vmem:[%s1532 + $0x38] sm:$0xff] %vm1809, %v2049
        %v2058 = vpack.c.bf16 %v2042, %v2042
        %v2059 = vpack.c.bf16 %v2043, %v2043
        %v2060 = vpack.c.bf16 %v2044, %v2044
        %v2061 = vpack.c.bf16 %v2045, %v2045
        %v2062 = vpack.c.bf16 %v2046, %v2046
        %v2063 = vpack.c.bf16 %v2047, %v2047
        %v2064 = vpack.c.bf16 %v2048, %v2048
        %v2065 = vpack.c.bf16 %v2049, %v2049
        %v2067 = vsel %vm1809, %v2058, 0
        %vm2069 = vcmask 1043456
        %v2071 = vsel %vm2069, %v1801, 0
        %2073 = vmatpush.bf16.msra.mxu0 0
        %2074 = vmatpush.bf16.msra.mxu0 0
        %2075 = vmatpush.bf16.msra.mxu0 0
        %2076 = vmatpush.bf16.msra.mxu0 0
        %2077 = vmatpush.bf16.msra.mxu0 0
        %2078 = vmatpush.bf16.msra.mxu0 0
        %2079 = vmatpush.bf16.msra.mxu0 0
        %2080 = vmatpush.bf16.msra.mxu0 %v2071
        %2081 = vmatmul.bf16.gmra.mxu0 %v2067
        %v2082 = vpop.f32.mrf.mxu0
        %v2083 = vadd.f32 0.0, %v2082
        %v2084 = vpop.f32.mrf.mxu0
        %2085 = vdwg.mxu0
        %v2087 = vsel %vm1809, %v2059, 0
        %v2090 = vsel %vm2069, %v1802, 0
        %2092 = vmatpush.bf16.msra.mxu0 0
        %2093 = vmatpush.bf16.msra.mxu0 0
        %2094 = vmatpush.bf16.msra.mxu0 0
        %2095 = vmatpush.bf16.msra.mxu0 0
        %2096 = vmatpush.bf16.msra.mxu0 0
        %2097 = vmatpush.bf16.msra.mxu0 0
        %2098 = vmatpush.bf16.msra.mxu0 0
        %2099 = vmatpush.bf16.msra.mxu0 %v2090
        %2100 = vmatmul.bf16.gmra.mxu0 %v2087
        %v2101 = vpop.f32.mrf.mxu0
        %v2102 = vadd.f32 0.0, %v2101
        %v2103 = vpop.f32.mrf.mxu0
        %2104 = vdwg.mxu0
        %v2106 = vsel %vm1809, %v2060, 0
        %v2109 = vsel %vm2069, %v1803, 0
        %2111 = vmatpush.bf16.msra.mxu0 0
        %2112 = vmatpush.bf16.msra.mxu0 0
        %2113 = vmatpush.bf16.msra.mxu0 0
        %2114 = vmatpush.bf16.msra.mxu0 0
        %2115 = vmatpush.bf16.msra.mxu0 0
        %2116 = vmatpush.bf16.msra.mxu0 0
        %2117 = vmatpush.bf16.msra.mxu0 0
        %2118 = vmatpush.bf16.msra.mxu0 %v2109
        %2119 = vmatmul.bf16.gmra.mxu0 %v2106
        %v2120 = vpop.f32.mrf.mxu0
        %v2121 = vadd.f32 0.0, %v2120
        %v2122 = vpop.f32.mrf.mxu0
        %2123 = vdwg.mxu0
        %v2125 = vsel %vm1809, %v2061, 0
        %v2128 = vsel %vm2069, %v1804, 0
        %2130 = vmatpush.bf16.msra.mxu0 0
        %2131 = vmatpush.bf16.msra.mxu0 0
        %2132 = vmatpush.bf16.msra.mxu0 0
        %2133 = vmatpush.bf16.msra.mxu0 0
        %2134 = vmatpush.bf16.msra.mxu0 0
        %2135 = vmatpush.bf16.msra.mxu0 0
        %2136 = vmatpush.bf16.msra.mxu0 0
        %2137 = vmatpush.bf16.msra.mxu0 %v2128
        %2138 = vmatmul.bf16.gmra.mxu0 %v2125
        %v2139 = vpop.f32.mrf.mxu0
        %v2140 = vadd.f32 0.0, %v2139
        %v2141 = vpop.f32.mrf.mxu0
        %2142 = vdwg.mxu0
        %v2144 = vsel %vm1809, %v2062, 0
        %v2147 = vsel %vm2069, %v1805, 0
        %2149 = vmatpush.bf16.msra.mxu0 0
        %2150 = vmatpush.bf16.msra.mxu0 0
        %2151 = vmatpush.bf16.msra.mxu0 0
        %2152 = vmatpush.bf16.msra.mxu0 0
        %2153 = vmatpush.bf16.msra.mxu0 0
        %2154 = vmatpush.bf16.msra.mxu0 0
        %2155 = vmatpush.bf16.msra.mxu0 0
        %2156 = vmatpush.bf16.msra.mxu0 %v2147
        %2157 = vmatmul.bf16.gmra.mxu0 %v2144
        %v2158 = vpop.f32.mrf.mxu0
        %v2159 = vadd.f32 0.0, %v2158
        %v2160 = vpop.f32.mrf.mxu0
        %2161 = vdwg.mxu0
        %v2163 = vsel %vm1809, %v2063, 0
        %v2166 = vsel %vm2069, %v1806, 0
        %2168 = vmatpush.bf16.msra.mxu0 0
        %2169 = vmatpush.bf16.msra.mxu0 0
        %2170 = vmatpush.bf16.msra.mxu0 0
        %2171 = vmatpush.bf16.msra.mxu0 0
        %2172 = vmatpush.bf16.msra.mxu0 0
        %2173 = vmatpush.bf16.msra.mxu0 0
        %2174 = vmatpush.bf16.msra.mxu0 0
        %2175 = vmatpush.bf16.msra.mxu0 %v2166
        %2176 = vmatmul.bf16.gmra.mxu0 %v2163
        %v2177 = vpop.f32.mrf.mxu0
        %v2178 = vadd.f32 0.0, %v2177
        %v2179 = vpop.f32.mrf.mxu0
        %2180 = vdwg.mxu0
        %v2182 = vsel %vm1809, %v2064, 0
        %v2185 = vsel %vm2069, %v1807, 0
        %2187 = vmatpush.bf16.msra.mxu0 0
        %2188 = vmatpush.bf16.msra.mxu0 0
        %2189 = vmatpush.bf16.msra.mxu0 0
        %2190 = vmatpush.bf16.msra.mxu0 0
        %2191 = vmatpush.bf16.msra.mxu0 0
        %2192 = vmatpush.bf16.msra.mxu0 0
        %2193 = vmatpush.bf16.msra.mxu0 0
        %2194 = vmatpush.bf16.msra.mxu0 %v2185
        %2195 = vmatmul.bf16.gmra.mxu0 %v2182
        %v2196 = vpop.f32.mrf.mxu0
        %v2197 = vadd.f32 0.0, %v2196
        %v2198 = vpop.f32.mrf.mxu0
        %2199 = vdwg.mxu0
        %v2201 = vsel %vm1809, %v2065, 0
        %v2204 = vsel %vm2069, %v1808, 0
        %2206 = vmatpush.bf16.msra.mxu0 0
        %2207 = vmatpush.bf16.msra.mxu0 0
        %2208 = vmatpush.bf16.msra.mxu0 0
        %2209 = vmatpush.bf16.msra.mxu0 0
        %2210 = vmatpush.bf16.msra.mxu0 0
        %2211 = vmatpush.bf16.msra.mxu0 0
        %2212 = vmatpush.bf16.msra.mxu0 0
        %2213 = vmatpush.bf16.msra.mxu0 %v2204
        %2214 = vmatmul.bf16.gmra.mxu0 %v2201
        %v2215 = vpop.f32.mrf.mxu0
        %v2216 = vadd.f32 0.0, %v2215
        %v2217 = vpop.f32.mrf.mxu0
        %2218 = vdwg.mxu0
        %2220 = vrot.lane.b32.xlu0 %v2102, 8
        %v2221 = vpop.permute.xlu0 %2220
        %2224 = vrot.lane.b32.xlu0 %v2121, 16
        %v2225 = vpop.permute.xlu0 %2224
        %2228 = vrot.lane.b32.xlu0 %v2140, 24
        %v2229 = vpop.permute.xlu0 %2228
        %v2231 = vsel %vm1809, %v2083, %v2221
        %vm2232 = vcmask 130048
        %v2233 = vsel %vm2232, %v2231, %v2225
        %vm2234 = vcmask 195584
        %v2235 = vsel %vm2234, %v2233, %v2229
        %2237 = vrot.lane.b32.xlu0 %v2178, 8
        %v2238 = vpop.permute.xlu0 %2237
        %2241 = vrot.lane.b32.xlu0 %v2197, 16
        %v2242 = vpop.permute.xlu0 %2241
        %2245 = vrot.lane.b32.xlu0 %v2216, 24
        %v2246 = vpop.permute.xlu0 %2245
        %v2248 = vsel %vm1809, %v2159, %v2238
        %v2249 = vsel %vm2232, %v2248, %v2242
        %v2250 = vsel %vm2234, %v2249, %v2246
        %v2251 = vpack.c.bf16 %v2250, %v2235
        %v2252 = vld [vmem:[%s1283] sm:$0xf]
        %v2253 = vld [vmem:[%s1283 + $0x4] sm:$0xf]
        %v2254 = vld [vmem:[%s1283 + $0x8] sm:$0xf]
        %v2255 = vld [vmem:[%s1283 + $0xc] sm:$0xf]
        %v2256 = vld [vmem:[%s1565] sm:$0x1]
        %v2258 = vperm.slane %v2256, 0
        %v2264 = vunpack.c.l.b16 %v2252
        %v2265 = vunpack.c.l.b16 %v2253
        %v2266 = vunpack.c.l.b16 %v2254
        %v2267 = vunpack.c.l.b16 %v2255
        %v2268 = vpack.c.b16 %v2265, %v2264
        %v2269 = vpack.c.b16 %v2267, %v2266
        %v2273 = vsel %vm1637, %v2251, 0
        %2275 = vmatpush.bf16.msra.mxu0 0
        %2276 = vmatpush.bf16.msra.mxu0 0
        %2277 = vmatpush.bf16.msra.mxu0 0
        %2278 = vmatpush.bf16.msra.mxu0 0
        %2279 = vmatpush.bf16.msra.mxu0 0
        %2280 = vmatpush.bf16.msra.mxu0 0
        %2281 = vmatpush.bf16.msra.mxu0 %v2269
        %2282 = vmatpush.bf16.msra.mxu0 %v2268
        %2283 = vmatmul.bf16.gmra.mxu0 %v2273
        %v2284 = vpop.f32.mrf.mxu0
        %v2285 = vadd.f32 %v2258, %v2284
        %v2286 = vpop.f32.mrf.mxu0
        %v2287 = vadd.f32 %v2258, %v2286
        %2288 = vdwg.mxu0
        %v2289 = vadd.f32 %v1611, %v2285
        %v2290 = vadd.f32 %v1612, %v2287
        %v2291 = vsel %vm1637, %v2289, 0.0
        %2292 = vadd.xlane.f32.xlu0 %v2291
        %v2293 = vpop.xlane.xlu0 %2292
        %v2294 = vsel %vm1637, %v2290, 0.0
        %2295 = vadd.xlane.f32.xlu0 %v2294
        %v2296 = vpop.xlane.xlu0 %2295
        %v2297 = vrcp.pop 32.0
        %v2298 = vmul.f32 32.0, %v2297
        %v2299 = vsub.f32 1.0, %v2298
        %v2300 = vmul.f32 %v2297, %v2299
        %v2301 = vadd.f32 %v2297, %v2300
        %vm2302 = vweird.f32 %v2297
        %v2303 = vsel %vm2302, %v2297, %v2301
        %v2304 = vmul.f32 %v2293, %v2303
        %v2305 = vmul.f32 %v2296, %v2303
        %v2306 = vmul.f32 %v2289, %v2289
        %v2307 = vmul.f32 %v2290, %v2290
        %v2308 = vsel %vm1637, %v2306, 0.0
        %2309 = vadd.xlane.f32.xlu0 %v2308
        %v2310 = vpop.xlane.xlu0 %2309
        %v2311 = vsel %vm1637, %v2307, 0.0
        %2312 = vadd.xlane.f32.xlu0 %v2311
        %v2313 = vpop.xlane.xlu0 %2312
        %v2314 = vmul.f32 %v2310, %v2303
        %v2315 = vmul.f32 %v2313, %v2303
        %v2316 = vmul.f32 %v2304, %v2304
        %v2317 = vmul.f32 %v2305, %v2305
        %v2318 = vsub.f32 %v2314, %v2316
        %v2319 = vsub.f32 %v2315, %v2317
        %v2320 = vsub.f32 %v2289, %v2304
        %v2321 = vsub.f32 %v2290, %v2305
        %v2322 = vadd.f32 %v2318, 1e-05
        %v2323 = vadd.f32 %v2319, 1e-05
        %v2324 = vrsqrt.pop %v2322
        %v2325 = vmul.f32 %v2324, %v2322
        %v2326 = vmul.f32 %v2325, %v2324
        %v2327 = vmul.f32 0.5, %v2326
        %v2328 = vsub.f32 1.5, %v2327
        %v2329 = vmul.f32 %v2324, %v2328
        %vm2330 = vweird.f32 %v2322
        %vm2331 = vweird.f32 %v2324
        %vm2332 = vmor %vm2330, %vm2331
        %v2333 = vsel %vm2332, %v2324, %v2329
        %v2334 = vrsqrt.pop %v2323
        %v2335 = vmul.f32 %v2334, %v2323
        %v2336 = vmul.f32 %v2335, %v2334
        %v2337 = vmul.f32 0.5, %v2336
        %v2338 = vsub.f32 1.5, %v2337
        %v2339 = vmul.f32 %v2334, %v2338
        %vm2340 = vweird.f32 %v2323
        %vm2341 = vweird.f32 %v2334
        %vm2342 = vmor %vm2340, %vm2341
        %v2343 = vsel %vm2342, %v2334, %v2339
        %v2344 = vmul.f32 %v2320, %v2333
        %v2345 = vmul.f32 %v2321, %v2343
        %v2346 = vld [vmem:[%s1591] sm:$0x1]
        %v2348 = vperm.slane %v2346, 0
        %v2350 = vmul.f32 %v2344, %v2348
        %v2351 = vmul.f32 %v2345, %v2348
        %v2352 = vld [vmem:[%s1342] sm:$0x1]
        %v2354 = vperm.slane %v2352, 0
        %v2356 = vadd.f32 %v2350, %v2354
        %v2357 = vadd.f32 %v2351, %v2354
        %v2358 = vpack.c.bf16 %v2357, %v2356
        %v2359 = vld [vmem:[%s1293] sm:$0xf]
        %v2360 = vld [vmem:[%s1293 + $0x4] sm:$0xf]
        %v2361 = vld [vmem:[%s1293 + $0x8] sm:$0xf]
        %v2362 = vld [vmem:[%s1293 + $0xc] sm:$0xf]
        %v2363 = vld [vmem:[%s1568] sm:$0x1]
        %v2365 = vperm.slane %v2363, 0
        %v2371 = vunpack.c.l.b16 %v2359
        %v2372 = vunpack.c.l.b16 %v2360
        %v2373 = vunpack.c.l.b16 %v2361
        %v2374 = vunpack.c.l.b16 %v2362
        %v2375 = vpack.c.b16 %v2372, %v2371
        %v2376 = vpack.c.b16 %v2374, %v2373
        %v2380 = vsel %vm1637, %v2358, 0
        %2382 = vmatpush.bf16.msra.mxu0 0
        %2383 = vmatpush.bf16.msra.mxu0 0
        %2384 = vmatpush.bf16.msra.mxu0 0
        %2385 = vmatpush.bf16.msra.mxu0 0
        %2386 = vmatpush.bf16.msra.mxu0 0
        %2387 = vmatpush.bf16.msra.mxu0 0
        %2388 = vmatpush.bf16.msra.mxu0 %v2376
        %2389 = vmatpush.bf16.msra.mxu0 %v2375
        %2390 = vmatmul.bf16.gmra.mxu0 %v2380
        %v2391 = vpop.f32.mrf.mxu0
        %v2392 = vadd.f32 %v2365, %v2391
        %v2393 = vpop.f32.mrf.mxu0
        %v2394 = vadd.f32 %v2365, %v2393
        %2395 = vdwg.mxu0
        %v2396 = vmul.f32 %v2392, 0.35355338
        %v2397 = vmul.f32 %v2394, 0.35355338
        %v2398 = vld [vmem:[%s1303] sm:$0xf]
        %v2399 = vld [vmem:[%s1303 + $0x4] sm:$0xf]
        %v2400 = vld [vmem:[%s1303 + $0x8] sm:$0xf]
        %v2401 = vld [vmem:[%s1303 + $0xc] sm:$0xf]
        %v2402 = vld [vmem:[%s1571] sm:$0x1]
        %v2404 = vperm.slane %v2402, 0
        %v2410 = vunpack.c.l.b16 %v2398
        %v2411 = vunpack.c.l.b16 %v2399
        %v2412 = vunpack.c.l.b16 %v2400
        %v2413 = vunpack.c.l.b16 %v2401
        %v2414 = vpack.c.b16 %v2411, %v2410
        %v2415 = vpack.c.b16 %v2413, %v2412
        %v2419 = vsel %vm1637, %v1615, 0
        %2421 = vmatpush.bf16.msra.mxu0 0
        %2422 = vmatpush.bf16.msra.mxu0 0
        %2423 = vmatpush.bf16.msra.mxu0 0
        %2424 = vmatpush.bf16.msra.mxu0 0
        %2425 = vmatpush.bf16.msra.mxu0 0
        %2426 = vmatpush.bf16.msra.mxu0 0
        %2427 = vmatpush.bf16.msra.mxu0 %v2415
        %2428 = vmatpush.bf16.msra.mxu0 %v2414
        %2429 = vmatmul.bf16.gmra.mxu0 %v2419
        %v2430 = vpop.f32.mrf.mxu0
        %v2431 = vadd.f32 %v2404, %v2430
        %v2432 = vpop.f32.mrf.mxu0
        %v2433 = vadd.f32 %v2404, %v2432
        %2434 = vdwg.mxu0
        %v2435 = vld [vmem:[%s1313] sm:$0xf]
        %v2436 = vld [vmem:[%s1313 + $0x4] sm:$0xf]
        %v2437 = vld [vmem:[%s1313 + $0x8] sm:$0xf]
        %v2438 = vld [vmem:[%s1313 + $0xc] sm:$0xf]
        %v2439 = vld [vmem:[%s1574] sm:$0x1]
        %v2441 = vperm.slane %v2439, 0
        %v2447 = vunpack.c.l.b16 %v2435
        %v2448 = vunpack.c.l.b16 %v2436
        %v2449 = vunpack.c.l.b16 %v2437
        %v2450 = vunpack.c.l.b16 %v2438
        %v2451 = vpack.c.b16 %v2448, %v2447
        %v2452 = vpack.c.b16 %v2450, %v2449
        %2455 = vmatpush.bf16.msra.mxu0 0
        %2456 = vmatpush.bf16.msra.mxu0 0
        %2457 = vmatpush.bf16.msra.mxu0 0
        %2458 = vmatpush.bf16.msra.mxu0 0
        %2459 = vmatpush.bf16.msra.mxu0 0
        %2460 = vmatpush.bf16.msra.mxu0 0
        %2461 = vmatpush.bf16.msra.mxu0 %v2452
        %2462 = vmatpush.bf16.msra.mxu0 %v2451
        %2463 = vmatmul.bf16.gmra.mxu0 %v2419
        %v2464 = vpop.f32.mrf.mxu0
        %v2465 = vadd.f32 %v2441, %v2464
        %v2466 = vpop.f32.mrf.mxu0
        %v2467 = vadd.f32 %v2441, %v2466
        %2468 = vdwg.mxu0
        %2470 = vrot.lane.b32.xlu0 %v2396, 120
        %v2471 = vpop.permute.xlu0 %2470
        %2473 = vrot.lane.b32.xlu0 %v2396, 112
        %v2474 = vpop.permute.xlu0 %2473
        %2476 = vrot.lane.b32.xlu0 %v2396, 104
        %v2477 = vpop.permute.xlu0 %2476
        %2480 = vrot.lane.b32.xlu0 %v2397, 120
        %v2481 = vpop.permute.xlu0 %2480
        %2483 = vrot.lane.b32.xlu0 %v2397, 112
        %v2484 = vpop.permute.xlu0 %2483
        %2486 = vrot.lane.b32.xlu0 %v2397, 104
        %v2487 = vpop.permute.xlu0 %2486
        %v2489 = vpack.c.bf16 %v2396, %v2396
        %v2490 = vpack.c.bf16 %v2471, %v2471
        %v2491 = vpack.c.bf16 %v2474, %v2474
        %v2492 = vpack.c.bf16 %v2477, %v2477
        %v2493 = vpack.c.bf16 %v2397, %v2397
        %v2494 = vpack.c.bf16 %v2481, %v2481
        %v2495 = vpack.c.bf16 %v2484, %v2484
        %v2496 = vpack.c.bf16 %v2487, %v2487
        %2498 = vrot.lane.b32.xlu0 %v2431, 120
        %v2499 = vpop.permute.xlu0 %2498
        %2501 = vrot.lane.b32.xlu0 %v2431, 112
        %v2502 = vpop.permute.xlu0 %2501
        %2504 = vrot.lane.b32.xlu0 %v2431, 104
        %v2505 = vpop.permute.xlu0 %2504
        %2508 = vrot.lane.b32.xlu0 %v2433, 120
        %v2509 = vpop.permute.xlu0 %2508
        %2511 = vrot.lane.b32.xlu0 %v2433, 112
        %v2512 = vpop.permute.xlu0 %2511
        %2514 = vrot.lane.b32.xlu0 %v2433, 104
        %v2515 = vpop.permute.xlu0 %2514
        %v2517 = vpack.c.bf16 %v2431, %v2431
        %v2518 = vpack.c.bf16 %v2499, %v2499
        %v2519 = vpack.c.bf16 %v2502, %v2502
        %v2520 = vpack.c.bf16 %v2505, %v2505
        %v2521 = vpack.c.bf16 %v2433, %v2433
        %v2522 = vpack.c.bf16 %v2509, %v2509
        %v2523 = vpack.c.bf16 %v2512, %v2512
        %v2524 = vpack.c.bf16 %v2515, %v2515
        %2526 = vrot.lane.b32.xlu0 %v2465, 120
        %v2527 = vpop.permute.xlu0 %2526
        %2529 = vrot.lane.b32.xlu0 %v2465, 112
        %v2530 = vpop.permute.xlu0 %2529
        %2532 = vrot.lane.b32.xlu0 %v2465, 104
        %v2533 = vpop.permute.xlu0 %2532
        %2536 = vrot.lane.b32.xlu0 %v2467, 120
        %v2537 = vpop.permute.xlu0 %2536
        %2539 = vrot.lane.b32.xlu0 %v2467, 112
        %v2540 = vpop.permute.xlu0 %2539
        %2542 = vrot.lane.b32.xlu0 %v2467, 104
        %v2543 = vpop.permute.xlu0 %2542
        %v2545 = vpack.c.bf16 %v2465, %v2465
        %v2546 = vpack.c.bf16 %v2527, %v2527
        %v2547 = vpack.c.bf16 %v2530, %v2530
        %v2548 = vpack.c.bf16 %v2533, %v2533
        %v2549 = vpack.c.bf16 %v2467, %v2467
        %v2550 = vpack.c.bf16 %v2537, %v2537
        %v2551 = vpack.c.bf16 %v2540, %v2540
        %v2552 = vpack.c.bf16 %v2543, %v2543
        %v2554 = vsel %vm1809, %v2489, 0
        %v2557 = vsel %vm1809, %v2517, 0
        %2559 = vmatpush.bf16.xpose.msra.mxu0 0
        %2560 = vmatpush.bf16.xpose.msra.mxu0 0
        %2561 = vmatpush.bf16.xpose.msra.mxu0 0
        %2562 = vmatpush.bf16.xpose.msra.mxu0 0
        %2563 = vmatpush.bf16.xpose.msra.mxu0 0
        %2564 = vmatpush.bf16.xpose.msra.mxu0 0
        %2565 = vmatpush.bf16.xpose.msra.mxu0 0
        %2566 = vmatpush.bf16.xpose.msra.mxu0 %v2557
        %2567 = vmatmul.bf16.gmra.mxu0 %v2554
        %v2568 = vpop.f32.mrf.mxu0
        %v2569 = vadd.f32 0.0, %v2568
        %v2570 = vpop.f32.mrf.mxu0
        %2571 = vdwg.mxu0
        %v2573 = vsel %vm1809, %v2490, 0
        %v2576 = vsel %vm1809, %v2518, 0
        %2578 = vmatpush.bf16.xpose.msra.mxu0 0
        %2579 = vmatpush.bf16.xpose.msra.mxu0 0
        %2580 = vmatpush.bf16.xpose.msra.mxu0 0
        %2581 = vmatpush.bf16.xpose.msra.mxu0 0
        %2582 = vmatpush.bf16.xpose.msra.mxu0 0
        %2583 = vmatpush.bf16.xpose.msra.mxu0 0
        %2584 = vmatpush.bf16.xpose.msra.mxu0 0
        %2585 = vmatpush.bf16.xpose.msra.mxu0 %v2576
        %2586 = vmatmul.bf16.gmra.mxu0 %v2573
        %v2587 = vpop.f32.mrf.mxu0
        %v2588 = vadd.f32 0.0, %v2587
        %v2589 = vpop.f32.mrf.mxu0
        %2590 = vdwg.mxu0
        %v2592 = vsel %vm1809, %v2491, 0
        %v2595 = vsel %vm1809, %v2519, 0
        %2597 = vmatpush.bf16.xpose.msra.mxu0 0
        %2598 = vmatpush.bf16.xpose.msra.mxu0 0
        %2599 = vmatpush.bf16.xpose.msra.mxu0 0
        %2600 = vmatpush.bf16.xpose.msra.mxu0 0
        %2601 = vmatpush.bf16.xpose.msra.mxu0 0
        %2602 = vmatpush.bf16.xpose.msra.mxu0 0
        %2603 = vmatpush.bf16.xpose.msra.mxu0 0
        %2604 = vmatpush.bf16.xpose.msra.mxu0 %v2595
        %2605 = vmatmul.bf16.gmra.mxu0 %v2592
        %v2606 = vpop.f32.mrf.mxu0
        %v2607 = vadd.f32 0.0, %v2606
        %v2608 = vpop.f32.mrf.mxu0
        %2609 = vdwg.mxu0
        %v2611 = vsel %vm1809, %v2492, 0
        %v2614 = vsel %vm1809, %v2520, 0
        %2616 = vmatpush.bf16.xpose.msra.mxu0 0
        %2617 = vmatpush.bf16.xpose.msra.mxu0 0
        %2618 = vmatpush.bf16.xpose.msra.mxu0 0
        %2619 = vmatpush.bf16.xpose.msra.mxu0 0
        %2620 = vmatpush.bf16.xpose.msra.mxu0 0
        %2621 = vmatpush.bf16.xpose.msra.mxu0 0
        %2622 = vmatpush.bf16.xpose.msra.mxu0 0
        %2623 = vmatpush.bf16.xpose.msra.mxu0 %v2614
        %2624 = vmatmul.bf16.gmra.mxu0 %v2611
        %v2625 = vpop.f32.mrf.mxu0
        %v2626 = vadd.f32 0.0, %v2625
        %v2627 = vpop.f32.mrf.mxu0
        %2628 = vdwg.mxu0
        %v2630 = vsel %vm1809, %v2493, 0
        %v2633 = vsel %vm1809, %v2521, 0
        %2635 = vmatpush.bf16.xpose.msra.mxu0 0
        %2636 = vmatpush.bf16.xpose.msra.mxu0 0
        %2637 = vmatpush.bf16.xpose.msra.mxu0 0
        %2638 = vmatpush.bf16.xpose.msra.mxu0 0
        %2639 = vmatpush.bf16.xpose.msra.mxu0 0
        %2640 = vmatpush.bf16.xpose.msra.mxu0 0
        %2641 = vmatpush.bf16.xpose.msra.mxu0 0
        %2642 = vmatpush.bf16.xpose.msra.mxu0 %v2633
        %2643 = vmatmul.bf16.gmra.mxu0 %v2630
        %v2644 = vpop.f32.mrf.mxu0
        %v2645 = vadd.f32 0.0, %v2644
        %v2646 = vpop.f32.mrf.mxu0
        %2647 = vdwg.mxu0
        %v2649 = vsel %vm1809, %v2494, 0
        %v2652 = vsel %vm1809, %v2522, 0
        %2654 = vmatpush.bf16.xpose.msra.mxu0 0
        %2655 = vmatpush.bf16.xpose.msra.mxu0 0
        %2656 = vmatpush.bf16.xpose.msra.mxu0 0
        %2657 = vmatpush.bf16.xpose.msra.mxu0 0
        %2658 = vmatpush.bf16.xpose.msra.mxu0 0
        %2659 = vmatpush.bf16.xpose.msra.mxu0 0
        %2660 = vmatpush.bf16.xpose.msra.mxu0 0
        %2661 = vmatpush.bf16.xpose.msra.mxu0 %v2652
        %2662 = vmatmul.bf16.gmra.mxu0 %v2649
        %v2663 = vpop.f32.mrf.mxu0
        %v2664 = vadd.f32 0.0, %v2663
        %v2665 = vpop.f32.mrf.mxu0
        %2666 = vdwg.mxu0
        %v2668 = vsel %vm1809, %v2495, 0
        %v2671 = vsel %vm1809, %v2523, 0
        %2673 = vmatpush.bf16.xpose.msra.mxu0 0
        %2674 = vmatpush.bf16.xpose.msra.mxu0 0
        %2675 = vmatpush.bf16.xpose.msra.mxu0 0
        %2676 = vmatpush.bf16.xpose.msra.mxu0 0
        %2677 = vmatpush.bf16.xpose.msra.mxu0 0
        %2678 = vmatpush.bf16.xpose.msra.mxu0 0
        %2679 = vmatpush.bf16.xpose.msra.mxu0 0
        %2680 = vmatpush.bf16.xpose.msra.mxu0 %v2671
        %2681 = vmatmul.bf16.gmra.mxu0 %v2668
        %v2682 = vpop.f32.mrf.mxu0
        %v2683 = vadd.f32 0.0, %v2682
        %v2684 = vpop.f32.mrf.mxu0
        %2685 = vdwg.mxu0
        %v2687 = vsel %vm1809, %v2496, 0
        %v2690 = vsel %vm1809, %v2524, 0
        %2692 = vmatpush.bf16.xpose.msra.mxu0 0
        %2693 = vmatpush.bf16.xpose.msra.mxu0 0
        %2694 = vmatpush.bf16.xpose.msra.mxu0 0
        %2695 = vmatpush.bf16.xpose.msra.mxu0 0
        %2696 = vmatpush.bf16.xpose.msra.mxu0 0
        %2697 = vmatpush.bf16.xpose.msra.mxu0 0
        %2698 = vmatpush.bf16.xpose.msra.mxu0 0
        %2699 = vmatpush.bf16.xpose.msra.mxu0 %v2690
        %2700 = vmatmul.bf16.gmra.mxu0 %v2687
        %v2701 = vpop.f32.mrf.mxu0
        %v2702 = vadd.f32 0.0, %v2701
        %v2703 = vpop.f32.mrf.mxu0
        %2704 = vdwg.mxu0
        %v2705 = vsel %vm1809, %v2569, -inf
        %2706 = vmax.xlane.f32.xlu0 %v2705
        %v2707 = vpop.xlane.xlu0 %2706
        %v2708 = vsel %vm1809, %v2588, -inf
        %2709 = vmax.xlane.f32.xlu0 %v2708
        %v2710 = vpop.xlane.xlu0 %2709
        %v2711 = vsel %vm1809, %v2607, -inf
        %2712 = vmax.xlane.f32.xlu0 %v2711
        %v2713 = vpop.xlane.xlu0 %2712
        %v2714 = vsel %vm1809, %v2626, -inf
        %2715 = vmax.xlane.f32.xlu0 %v2714
        %v2716 = vpop.xlane.xlu0 %2715
        %v2717 = vsel %vm1809, %v2645, -inf
        %2718 = vmax.xlane.f32.xlu0 %v2717
        %v2719 = vpop.xlane.xlu0 %2718
        %v2720 = vsel %vm1809, %v2664, -inf
        %2721 = vmax.xlane.f32.xlu0 %v2720
        %v2722 = vpop.xlane.xlu0 %2721
        %v2723 = vsel %vm1809, %v2683, -inf
        %2724 = vmax.xlane.f32.xlu0 %v2723
        %v2725 = vpop.xlane.xlu0 %2724
        %v2726 = vsel %vm1809, %v2702, -inf
        %2727 = vmax.xlane.f32.xlu0 %v2726
        %v2728 = vpop.xlane.xlu0 %2727
        %v2729 = vsub.f32 %v2569, %v2707
        %v2730 = vsub.f32 %v2588, %v2710
        %v2731 = vsub.f32 %v2607, %v2713
        %v2732 = vsub.f32 %v2626, %v2716
        %v2733 = vsub.f32 %v2645, %v2719
        %v2734 = vsub.f32 %v2664, %v2722
        %v2735 = vsub.f32 %v2683, %v2725
        %v2736 = vsub.f32 %v2702, %v2728
        %v2737 = vmul.f32 %v2729, 1.442695
        %v2738 = vpow.pop %v2737
        %v2739 = vmul.f32 %v2730, 1.442695
        %v2740 = vpow.pop %v2739
        %v2741 = vmul.f32 %v2731, 1.442695
        %v2742 = vpow.pop %v2741
        %v2743 = vmul.f32 %v2732, 1.442695
        %v2744 = vpow.pop %v2743
        %v2745 = vmul.f32 %v2733, 1.442695
        %v2746 = vpow.pop %v2745
        %v2747 = vmul.f32 %v2734, 1.442695
        %v2748 = vpow.pop %v2747
        %v2749 = vmul.f32 %v2735, 1.442695
        %v2750 = vpow.pop %v2749
        %v2751 = vmul.f32 %v2736, 1.442695
        %v2752 = vpow.pop %v2751
        %v2753 = vsel %vm1809, %v2738, 0.0
        %2754 = vadd.xlane.f32.xlu0 %v2753
        %v2755 = vpop.xlane.xlu0 %2754
        %v2756 = vsel %vm1809, %v2740, 0.0
        %2757 = vadd.xlane.f32.xlu0 %v2756
        %v2758 = vpop.xlane.xlu0 %2757
        %v2759 = vsel %vm1809, %v2742, 0.0
        %2760 = vadd.xlane.f32.xlu0 %v2759
        %v2761 = vpop.xlane.xlu0 %2760
        %v2762 = vsel %vm1809, %v2744, 0.0
        %2763 = vadd.xlane.f32.xlu0 %v2762
        %v2764 = vpop.xlane.xlu0 %2763
        %v2765 = vsel %vm1809, %v2746, 0.0
        %2766 = vadd.xlane.f32.xlu0 %v2765
        %v2767 = vpop.xlane.xlu0 %2766
        %v2768 = vsel %vm1809, %v2748, 0.0
        %2769 = vadd.xlane.f32.xlu0 %v2768
        %v2770 = vpop.xlane.xlu0 %2769
        %v2771 = vsel %vm1809, %v2750, 0.0
        %2772 = vadd.xlane.f32.xlu0 %v2771
        %v2773 = vpop.xlane.xlu0 %2772
        %v2774 = vsel %vm1809, %v2752, 0.0
        %2775 = vadd.xlane.f32.xlu0 %v2774
        %v2776 = vpop.xlane.xlu0 %2775
        %v2777 = vrcp.pop %v2755
        %v2778 = vrcp.pop %v2758
        %v2779 = vrcp.pop %v2761
        %v2780 = vrcp.pop %v2764
        %v2781 = vrcp.pop %v2767
        %v2782 = vrcp.pop %v2770
        %v2783 = vrcp.pop %v2773
        %v2784 = vrcp.pop %v2776
        %v2785 = vmul.f32 %v2738, %v2777
        %v2786 = vmul.f32 %v2740, %v2778
        %v2787 = vmul.f32 %v2742, %v2779
        %v2788 = vmul.f32 %v2744, %v2780
        %v2789 = vmul.f32 %v2746, %v2781
        %v2790 = vmul.f32 %v2748, %v2782
        %v2791 = vmul.f32 %v2750, %v2783
        %v2792 = vmul.f32 %v2752, %v2784
        %2793 = vst.msk [vmem:[%s1539] sm:$0xff] %vm1809, %v2785
        %2794 = vst.msk [vmem:[%s1539 + $0x8] sm:$0xff] %vm1809, %v2786
        %2795 = vst.msk [vmem:[%s1539 + $0x10] sm:$0xff] %vm1809, %v2787
        %2796 = vst.msk [vmem:[%s1539 + $0x18] sm:$0xff] %vm1809, %v2788
        %2797 = vst.msk [vmem:[%s1539 + $0x20] sm:$0xff] %vm1809, %v2789
        %2798 = vst.msk [vmem:[%s1539 + $0x28] sm:$0xff] %vm1809, %v2790
        %2799 = vst.msk [vmem:[%s1539 + $0x30] sm:$0xff] %vm1809, %v2791
        %2800 = vst.msk [vmem:[%s1539 + $0x38] sm:$0xff] %vm1809, %v2792
        %v2801 = vpack.c.bf16 %v2785, %v2785
        %v2802 = vpack.c.bf16 %v2786, %v2786
        %v2803 = vpack.c.bf16 %v2787, %v2787
        %v2804 = vpack.c.bf16 %v2788, %v2788
        %v2805 = vpack.c.bf16 %v2789, %v2789
        %v2806 = vpack.c.bf16 %v2790, %v2790
        %v2807 = vpack.c.bf16 %v2791, %v2791
        %v2808 = vpack.c.bf16 %v2792, %v2792
        %v2810 = vsel %vm1809, %v2801, 0
        %v2813 = vsel %vm2069, %v2545, 0
        %2815 = vmatpush.bf16.msra.mxu0 0
        %2816 = vmatpush.bf16.msra.mxu0 0
        %2817 = vmatpush.bf16.msra.mxu0 0
        %2818 = vmatpush.bf16.msra.mxu0 0
        %2819 = vmatpush.bf16.msra.mxu0 0
        %2820 = vmatpush.bf16.msra.mxu0 0
        %2821 = vmatpush.bf16.msra.mxu0 0
        %2822 = vmatpush.bf16.msra.mxu0 %v2813
        %2823 = vmatmul.bf16.gmra.mxu0 %v2810
        %v2824 = vpop.f32.mrf.mxu0
        %v2825 = vadd.f32 0.0, %v2824
        %v2826 = vpop.f32.mrf.mxu0
        %2827 = vdwg.mxu0
        %v2829 = vsel %vm1809, %v2802, 0
        %v2832 = vsel %vm2069, %v2546, 0
        %2834 = vmatpush.bf16.msra.mxu0 0
        %2835 = vmatpush.bf16.msra.mxu0 0
        %2836 = vmatpush.bf16.msra.mxu0 0
        %2837 = vmatpush.bf16.msra.mxu0 0
        %2838 = vmatpush.bf16.msra.mxu0 0
        %2839 = vmatpush.bf16.msra.mxu0 0
        %2840 = vmatpush.bf16.msra.mxu0 0
        %2841 = vmatpush.bf16.msra.mxu0 %v2832
        %2842 = vmatmul.bf16.gmra.mxu0 %v2829
        %v2843 = vpop.f32.mrf.mxu0
        %v2844 = vadd.f32 0.0, %v2843
        %v2845 = vpop.f32.mrf.mxu0
        %2846 = vdwg.mxu0
        %v2848 = vsel %vm1809, %v2803, 0
        %v2851 = vsel %vm2069, %v2547, 0
        %2853 = vmatpush.bf16.msra.mxu0 0
        %2854 = vmatpush.bf16.msra.mxu0 0
        %2855 = vmatpush.bf16.msra.mxu0 0
        %2856 = vmatpush.bf16.msra.mxu0 0
        %2857 = vmatpush.bf16.msra.mxu0 0
        %2858 = vmatpush.bf16.msra.mxu0 0
        %2859 = vmatpush.bf16.msra.mxu0 0
        %2860 = vmatpush.bf16.msra.mxu0 %v2851
        %2861 = vmatmul.bf16.gmra.mxu0 %v2848
        %v2862 = vpop.f32.mrf.mxu0
        %v2863 = vadd.f32 0.0, %v2862
        %v2864 = vpop.f32.mrf.mxu0
        %2865 = vdwg.mxu0
        %v2867 = vsel %vm1809, %v2804, 0
        %v2870 = vsel %vm2069, %v2548, 0
        %2872 = vmatpush.bf16.msra.mxu0 0
        %2873 = vmatpush.bf16.msra.mxu0 0
        %2874 = vmatpush.bf16.msra.mxu0 0
        %2875 = vmatpush.bf16.msra.mxu0 0
        %2876 = vmatpush.bf16.msra.mxu0 0
        %2877 = vmatpush.bf16.msra.mxu0 0
        %2878 = vmatpush.bf16.msra.mxu0 0
        %2879 = vmatpush.bf16.msra.mxu0 %v2870
        %2880 = vmatmul.bf16.gmra.mxu0 %v2867
        %v2881 = vpop.f32.mrf.mxu0
        %v2882 = vadd.f32 0.0, %v2881
        %v2883 = vpop.f32.mrf.mxu0
        %2884 = vdwg.mxu0
        %v2886 = vsel %vm1809, %v2805, 0
        %v2889 = vsel %vm2069, %v2549, 0
        %2891 = vmatpush.bf16.msra.mxu0 0
        %2892 = vmatpush.bf16.msra.mxu0 0
        %2893 = vmatpush.bf16.msra.mxu0 0
        %2894 = vmatpush.bf16.msra.mxu0 0
        %2895 = vmatpush.bf16.msra.mxu0 0
        %2896 = vmatpush.bf16.msra.mxu0 0
        %2897 = vmatpush.bf16.msra.mxu0 0
        %2898 = vmatpush.bf16.msra.mxu0 %v2889
        %2899 = vmatmul.bf16.gmra.mxu0 %v2886
        %v2900 = vpop.f32.mrf.mxu0
        %v2901 = vadd.f32 0.0, %v2900
        %v2902 = vpop.f32.mrf.mxu0
        %2903 = vdwg.mxu0
        %v2905 = vsel %vm1809, %v2806, 0
        %v2908 = vsel %vm2069, %v2550, 0
        %2910 = vmatpush.bf16.msra.mxu0 0
        %2911 = vmatpush.bf16.msra.mxu0 0
        %2912 = vmatpush.bf16.msra.mxu0 0
        %2913 = vmatpush.bf16.msra.mxu0 0
        %2914 = vmatpush.bf16.msra.mxu0 0
        %2915 = vmatpush.bf16.msra.mxu0 0
        %2916 = vmatpush.bf16.msra.mxu0 0
        %2917 = vmatpush.bf16.msra.mxu0 %v2908
        %2918 = vmatmul.bf16.gmra.mxu0 %v2905
        %v2919 = vpop.f32.mrf.mxu0
        %v2920 = vadd.f32 0.0, %v2919
        %v2921 = vpop.f32.mrf.mxu0
        %2922 = vdwg.mxu0
        %v2924 = vsel %vm1809, %v2807, 0
        %v2927 = vsel %vm2069, %v2551, 0
        %2929 = vmatpush.bf16.msra.mxu0 0
        %2930 = vmatpush.bf16.msra.mxu0 0
        %2931 = vmatpush.bf16.msra.mxu0 0
        %2932 = vmatpush.bf16.msra.mxu0 0
        %2933 = vmatpush.bf16.msra.mxu0 0
        %2934 = vmatpush.bf16.msra.mxu0 0
        %2935 = vmatpush.bf16.msra.mxu0 0
        %2936 = vmatpush.bf16.msra.mxu0 %v2927
        %2937 = vmatmul.bf16.gmra.mxu0 %v2924
        %v2938 = vpop.f32.mrf.mxu0
        %v2939 = vadd.f32 0.0, %v2938
        %v2940 = vpop.f32.mrf.mxu0
        %2941 = vdwg.mxu0
        %v2943 = vsel %vm1809, %v2808, 0
        %v2946 = vsel %vm2069, %v2552, 0
        %2948 = vmatpush.bf16.msra.mxu0 0
        %2949 = vmatpush.bf16.msra.mxu0 0
        %2950 = vmatpush.bf16.msra.mxu0 0
        %2951 = vmatpush.bf16.msra.mxu0 0
        %2952 = vmatpush.bf16.msra.mxu0 0
        %2953 = vmatpush.bf16.msra.mxu0 0
        %2954 = vmatpush.bf16.msra.mxu0 0
        %2955 = vmatpush.bf16.msra.mxu0 %v2946
        %2956 = vmatmul.bf16.gmra.mxu0 %v2943
        %v2957 = vpop.f32.mrf.mxu0
        %v2958 = vadd.f32 0.0, %v2957
        %v2959 = vpop.f32.mrf.mxu0
        %2960 = vdwg.mxu0
        %2962 = vrot.lane.b32.xlu0 %v2844, 8
        %v2963 = vpop.permute.xlu0 %2962
        %2966 = vrot.lane.b32.xlu0 %v2863, 16
        %v2967 = vpop.permute.xlu0 %2966
        %2970 = vrot.lane.b32.xlu0 %v2882, 24
        %v2971 = vpop.permute.xlu0 %2970
        %v2973 = vsel %vm1809, %v2825, %v2963
        %v2974 = vsel %vm2232, %v2973, %v2967
        %v2975 = vsel %vm2234, %v2974, %v2971
        %2977 = vrot.lane.b32.xlu0 %v2920, 8
        %v2978 = vpop.permute.xlu0 %2977
        %2981 = vrot.lane.b32.xlu0 %v2939, 16
        %v2982 = vpop.permute.xlu0 %2981
        %2985 = vrot.lane.b32.xlu0 %v2958, 24
        %v2986 = vpop.permute.xlu0 %2985
        %v2988 = vsel %vm1809, %v2901, %v2978
        %v2989 = vsel %vm2232, %v2988, %v2982
        %v2990 = vsel %vm2234, %v2989, %v2986
        %v2991 = vpack.c.bf16 %v2990, %v2975
        %v2992 = vld [vmem:[%s1323] sm:$0xf]
        %v2993 = vld [vmem:[%s1323 + $0x4] sm:$0xf]
        %v2994 = vld [vmem:[%s1323 + $0x8] sm:$0xf]
        %v2995 = vld [vmem:[%s1323 + $0xc] sm:$0xf]
        %v2996 = vld [vmem:[%s1577] sm:$0x1]
        %v2998 = vperm.slane %v2996, 0
        %v3004 = vunpack.c.l.b16 %v2992
        %v3005 = vunpack.c.l.b16 %v2993
        %v3006 = vunpack.c.l.b16 %v2994
        %v3007 = vunpack.c.l.b16 %v2995
        %v3008 = vpack.c.b16 %v3005, %v3004
        %v3009 = vpack.c.b16 %v3007, %v3006
        %v3013 = vsel %vm1637, %v2991, 0
        %3015 = vmatpush.bf16.msra.mxu0 0
        %3016 = vmatpush.bf16.msra.mxu0 0
        %3017 = vmatpush.bf16.msra.mxu0 0
        %3018 = vmatpush.bf16.msra.mxu0 0
        %3019 = vmatpush.bf16.msra.mxu0 0
        %3020 = vmatpush.bf16.msra.mxu0 0
        %3021 = vmatpush.bf16.msra.mxu0 %v3009
        %3022 = vmatpush.bf16.msra.mxu0 %v3008
        %3023 = vmatmul.bf16.gmra.mxu0 %v3013
        %v3024 = vpop.f32.mrf.mxu0
        %v3025 = vadd.f32 %v2998, %v3024
        %v3026 = vpop.f32.mrf.mxu0
        %v3027 = vadd.f32 %v2998, %v3026
        %3028 = vdwg.mxu0
        %v3029 = vadd.f32 %v2356, %v3025
        %v3030 = vadd.f32 %v2357, %v3027
        %v3031 = vsel %vm1637, %v3029, 0.0
        %3032 = vadd.xlane.f32.xlu0 %v3031
        %v3033 = vpop.xlane.xlu0 %3032
        %v3034 = vsel %vm1637, %v3030, 0.0
        %3035 = vadd.xlane.f32.xlu0 %v3034
        %v3036 = vpop.xlane.xlu0 %3035
        %v3037 = vmul.f32 %v3033, %v2303
        %v3038 = vmul.f32 %v3036, %v2303
        %v3039 = vmul.f32 %v3029, %v3029
        %v3040 = vmul.f32 %v3030, %v3030
        %v3041 = vsel %vm1637, %v3039, 0.0
        %3042 = vadd.xlane.f32.xlu0 %v3041
        %v3043 = vpop.xlane.xlu0 %3042
        %v3044 = vsel %vm1637, %v3040, 0.0
        %3045 = vadd.xlane.f32.xlu0 %v3044
        %v3046 = vpop.xlane.xlu0 %3045
        %v3047 = vmul.f32 %v3043, %v2303
        %v3048 = vmul.f32 %v3046, %v2303
        %v3049 = vmul.f32 %v3037, %v3037
        %v3050 = vmul.f32 %v3038, %v3038
        %v3051 = vsub.f32 %v3047, %v3049
        %v3052 = vsub.f32 %v3048, %v3050
        %v3053 = vsub.f32 %v3029, %v3037
        %v3054 = vsub.f32 %v3030, %v3038
        %v3055 = vadd.f32 %v3051, 1e-05
        %v3056 = vadd.f32 %v3052, 1e-05
        %v3057 = vrsqrt.pop %v3055
        %v3058 = vmul.f32 %v3057, %v3055
        %v3059 = vmul.f32 %v3058, %v3057
        %v3060 = vmul.f32 0.5, %v3059
        %v3061 = vsub.f32 1.5, %v3060
        %v3062 = vmul.f32 %v3057, %v3061
        %vm3063 = vweird.f32 %v3055
        %vm3064 = vweird.f32 %v3057
        %vm3065 = vmor %vm3063, %vm3064
        %v3066 = vsel %vm3065, %v3057, %v3062
        %v3067 = vrsqrt.pop %v3056
        %v3068 = vmul.f32 %v3067, %v3056
        %v3069 = vmul.f32 %v3068, %v3067
        %v3070 = vmul.f32 0.5, %v3069
        %v3071 = vsub.f32 1.5, %v3070
        %v3072 = vmul.f32 %v3067, %v3071
        %vm3073 = vweird.f32 %v3056
        %vm3074 = vweird.f32 %v3067
        %vm3075 = vmor %vm3073, %vm3074
        %v3076 = vsel %vm3075, %v3067, %v3072
        %v3077 = vmul.f32 %v3053, %v3066
        %v3078 = vmul.f32 %v3054, %v3076
        %v3079 = vld [vmem:[%s1594] sm:$0x1]
        %v3081 = vperm.slane %v3079, 0
        %v3083 = vmul.f32 %v3077, %v3081
        %v3084 = vmul.f32 %v3078, %v3081
        %v3085 = vld [vmem:[%s1351] sm:$0x1]
        %v3087 = vperm.slane %v3085, 0
        %v3089 = vadd.f32 %v3083, %v3087
        %v3090 = vadd.f32 %v3084, %v3087
        %v3091 = vpack.c.bf16 %v3090, %v3089
        %v3092 = vld [vmem:[%s1333] sm:$0xf]
        %v3093 = vld [vmem:[%s1333 + $0x4] sm:$0xf]
        %v3094 = vld [vmem:[%s1333 + $0x8] sm:$0xf]
        %v3095 = vld [vmem:[%s1333 + $0xc] sm:$0xf]
        %v3096 = vld [vmem:[%s1580] sm:$0x1]
        %v3098 = vperm.slane %v3096, 0
        %v3104 = vunpack.c.l.b16 %v3092
        %v3105 = vunpack.c.l.b16 %v3093
        %v3106 = vunpack.c.l.b16 %v3094
        %v3107 = vunpack.c.l.b16 %v3095
        %v3108 = vpack.c.b16 %v3105, %v3104
        %v3109 = vpack.c.b16 %v3107, %v3106
        %v3113 = vsel %vm1637, %v3091, 0
        %3115 = vmatpush.bf16.msra.mxu0 0
        %3116 = vmatpush.bf16.msra.mxu0 0
        %3117 = vmatpush.bf16.msra.mxu0 0
        %3118 = vmatpush.bf16.msra.mxu0 0
        %3119 = vmatpush.bf16.msra.mxu0 0
        %3120 = vmatpush.bf16.msra.mxu0 0
        %3121 = vmatpush.bf16.msra.mxu0 %v3109
        %3122 = vmatpush.bf16.msra.mxu0 %v3108
        %3123 = vmatmul.bf16.gmra.mxu0 %v3113
        %v3124 = vpop.f32.mrf.mxu0
        %v3125 = vadd.f32 %v3098, %v3124
        %v3126 = vpop.f32.mrf.mxu0
        %v3127 = vadd.f32 %v3098, %v3126
        %3128 = vdwg.mxu0
        %v3129 = vmax.f32 %v3125, 0.0
        %v3130 = vmax.f32 %v3127, 0.0
        %v3131 = vpack.c.bf16 %v3130, %v3129
        %v3132 = vld [vmem:[%s1585] sm:$0xf]
        %v3133 = vld [vmem:[%s1585 + $0x4] sm:$0xf]
        %v3134 = vld [vmem:[%s1585 + $0x8] sm:$0xf]
        %v3135 = vld [vmem:[%s1585 + $0xc] sm:$0xf]
        %v3136 = vld [vmem:[%s1585 + $0x10] sm:$0xf]
        %v3137 = vld [vmem:[%s1585 + $0x14] sm:$0xf]
        %v3138 = vld [vmem:[%s1585 + $0x18] sm:$0xf]
        %v3139 = vld [vmem:[%s1585 + $0x1c] sm:$0xf]
        %v3140 = vld [vmem:[%s1588] sm:$0x1]
        %v3142 = vperm.slane %v3140, 0
        %v3152 = vunpack.c.l.b16 %v3132
        %v3153 = vunpack.c.l.b16 %v3133
        %v3154 = vunpack.c.l.b16 %v3134
        %v3155 = vunpack.c.l.b16 %v3135
        %v3156 = vunpack.c.l.b16 %v3136
        %v3157 = vunpack.c.l.b16 %v3137
        %v3158 = vunpack.c.l.b16 %v3138
        %v3159 = vunpack.c.l.b16 %v3139
        %v3160 = vpack.c.b16 %v3153, %v3152
        %v3161 = vpack.c.b16 %v3155, %v3154
        %v3162 = vpack.c.b16 %v3157, %v3156
        %v3163 = vpack.c.b16 %v3159, %v3158
        %vm3168 = vcmask 523264
        %v3170 = vsel %vm3168, %v3131, 0
        %3172 = vmatpush.bf16.msra.mxu0 0
        %3173 = vmatpush.bf16.msra.mxu0 0
        %3174 = vmatpush.bf16.msra.mxu0 0
        %3175 = vmatpush.bf16.msra.mxu0 0
        %3176 = vmatpush.bf16.msra.mxu0 %v3163
        %3177 = vmatpush.bf16.msra.mxu0 %v3162
        %3178 = vmatpush.bf16.msra.mxu0 %v3161
        %3179 = vmatpush.bf16.msra.mxu0 %v3160
        %3180 = vmatmul.bf16.gmra.mxu0 %v3170
        %v3181 = vpop.f32.mrf.mxu0
        %v3182 = vadd.f32 %v3142, %v3181
        %v3183 = vpop.f32.mrf.mxu0
        %v3184 = vadd.f32 %v3142, %v3183
        %3185 = vdwg.mxu0
        %v3186 = vadd.f32 %v3089, %v3182
        %v3187 = vadd.f32 %v3090, %v3184
        %v3188 = vsel %vm1637, %v3186, 0.0
        %3189 = vadd.xlane.f32.xlu0 %v3188
        %v3190 = vpop.xlane.xlu0 %3189
        %v3191 = vsel %vm1637, %v3187, 0.0
        %3192 = vadd.xlane.f32.xlu0 %v3191
        %v3193 = vpop.xlane.xlu0 %3192
        %v3194 = vmul.f32 %v3190, %v2303
        %v3195 = vmul.f32 %v3193, %v2303
        %v3196 = vmul.f32 %v3186, %v3186
        %v3197 = vmul.f32 %v3187, %v3187
        %v3198 = vsel %vm1637, %v3196, 0.0
        %3199 = vadd.xlane.f32.xlu0 %v3198
        %v3200 = vpop.xlane.xlu0 %3199
        %v3201 = vsel %vm1637, %v3197, 0.0
        %3202 = vadd.xlane.f32.xlu0 %v3201
        %v3203 = vpop.xlane.xlu0 %3202
        %v3204 = vmul.f32 %v3200, %v2303
        %v3205 = vmul.f32 %v3203, %v2303
        %v3206 = vmul.f32 %v3194, %v3194
        %v3207 = vmul.f32 %v3195, %v3195
        %v3208 = vsub.f32 %v3204, %v3206
        %v3209 = vsub.f32 %v3205, %v3207
        %v3210 = vsub.f32 %v3186, %v3194
        %v3211 = vsub.f32 %v3187, %v3195
        %v3212 = vadd.f32 %v3208, 1e-05
        %v3213 = vadd.f32 %v3209, 1e-05
        %v3214 = vrsqrt.pop %v3212
        %v3215 = vmul.f32 %v3214, %v3212
        %v3216 = vmul.f32 %v3215, %v3214
        %v3217 = vmul.f32 0.5, %v3216
        %v3218 = vsub.f32 1.5, %v3217
        %v3219 = vmul.f32 %v3214, %v3218
        %vm3220 = vweird.f32 %v3212
        %vm3221 = vweird.f32 %v3214
        %vm3222 = vmor %vm3220, %vm3221
        %v3223 = vsel %vm3222, %v3214, %v3219
        %v3224 = vrsqrt.pop %v3213
        %v3225 = vmul.f32 %v3224, %v3213
        %v3226 = vmul.f32 %v3225, %v3224
        %v3227 = vmul.f32 0.5, %v3226
        %v3228 = vsub.f32 1.5, %v3227
        %v3229 = vmul.f32 %v3224, %v3228
        %vm3230 = vweird.f32 %v3213
        %vm3231 = vweird.f32 %v3224
        %vm3232 = vmor %vm3230, %vm3231
        %v3233 = vsel %vm3232, %v3224, %v3229
        %v3234 = vmul.f32 %v3210, %v3223
        %v3235 = vmul.f32 %v3211, %v3233
        %v3236 = vld [vmem:[%s1597] sm:$0x1]
        %v3238 = vperm.slane %v3236, 0
        %v3240 = vmul.f32 %v3234, %v3238
        %v3241 = vmul.f32 %v3235, %v3238
        %v3242 = vld [vmem:[%s1360] sm:$0x1]
        %v3244 = vperm.slane %v3242, 0
        %v3246 = vadd.f32 %v3240, %v3244
        %v3247 = vadd.f32 %v3241, %v3244
        %3248 = vst.msk [vmem:[#allocation17] sm:$0xff] %vm1637, %v3246
        %3249 = vst.msk [vmem:[#allocation17 + $0x8] sm:$0xff] %vm1637, %v3247
        %s3250 = sand.u32 %s79, 1
        %s3251 = scalar_lea.sflag [#allocation19], %s3250
        %s3252 = sand.u32 %s855, 1
        %s3253 = smul.addr %s3252, 64
        %s3254 = scalar_lea.vmem [#allocation18], %s3253
        %s3255 = sand.u32 %s79, 1
        %s3256 = scalar_lea.sflag [#allocation19], %s3255
        %s3257 = sand.u32 %s883, 1
        %s3258 = smul.addr %s3257, 64
        %s3259 = scalar_lea.vmem [#allocation20], %s3258
        // Predicated region
        $region185: #{tpu_custom_call.1} parent=131 // pred_check
          %p3260 = pneg %p837
        $region186: #{tpu_custom_call.1} parent=131 // pred_check_branch
          %3262 = sbr.rel (%p3260) target = $region188
        $region187: #{tpu_custom_call.1} parent=131 // pred_region
          %s3263 = smul.u32 2, %s83
          %3265 = vsyncadd [#allocation4], 0
          %s3266 = smul.addr %s3263, 8
          %s3267 = scalar_lea.hbm %s57, %s3266
          %s3268 = sshll.u32 [#allocation17], 4
          %s3269 = int_to_ptr.vmem [resolvable:$true] %s3268
          %s3270 = sshll.u32 %s3267, 4
          %s3271 = int_to_ptr.hbm [resolvable:$true] %s3270
          %3276 = dma.vmem_to_hbm [thread:$0]  %s3269, 256, %s3271, [#allocation4], 128, 128, 8
        $region188: #{tpu_custom_call.1} parent=131 // pred_fallthru
          _
        // Predicated region
        $region189: #{tpu_custom_call.1} parent=131 // pred_check
          %p3277 = pneg %p865
        $region190: #{tpu_custom_call.1} parent=131 // pred_check_branch
          %3279 = sbr.rel (%p3277) target = $region192
        $region191: #{tpu_custom_call.1} parent=131 // pred_region
          %s3280 = smul.u32 8, %s83
          %3282 = vsyncadd %s3251, 0
          %s3283 = smul.addr %s84, 8
          %s3284 = sadd.s32 %s3280, %s3283
          %s3285 = smul.addr %s3284, 8
          %s3286 = scalar_lea.hbm %s59, %s3285
          %s3287 = sshll.u32 %s3254, 4
          %s3288 = int_to_ptr.vmem [resolvable:$true] %s3287
          %s3289 = sshll.u32 %s3286, 4
          %s3290 = int_to_ptr.hbm [resolvable:$true] %s3289
          %3295 = dma.vmem_to_hbm [thread:$0]  %s3288, 1024, %s3290, %s3251, 128, 128, 8
        $region192: #{tpu_custom_call.1} parent=131 // pred_fallthru
          _
        // Predicated region
        $region193: #{tpu_custom_call.1} parent=131 // pred_check
          %p3296 = pneg %p893
        $region194: #{tpu_custom_call.1} parent=131 // pred_check_branch
          %3298 = sbr.rel (%p3296) target = $region196
        $region195: #{tpu_custom_call.1} parent=131 // pred_region
          %s3299 = smul.u32 8, %s83
          %3301 = vsyncadd %s3256, 0
          %s3302 = smul.addr %s84, 8
          %s3303 = sadd.s32 %s3299, %s3302
          %s3304 = smul.addr %s3303, 8
          %s3305 = scalar_lea.hbm %s61, %s3304
          %s3306 = sshll.u32 %s3259, 4
          %s3307 = int_to_ptr.vmem [resolvable:$true] %s3306
          %s3308 = sshll.u32 %s3305, 4
          %s3309 = int_to_ptr.hbm [resolvable:$true] %s3308
          %3314 = dma.vmem_to_hbm [thread:$0]  %s3307, 1024, %s3309, %s3256, 128, 128, 8
        $region196: #{tpu_custom_call.1} parent=131 // pred_fallthru
          _
        // Predicated region
        $region197: #{tpu_custom_call.1} parent=131 // pred_check
          %p3315 = pneg %p837
        $region198: #{tpu_custom_call.1} parent=131 // pred_check_branch
          %3317 = sbr.rel (%p3315) target = $region200
        $region199: #{tpu_custom_call.1} parent=131 // pred_region
          %3319 = dma.done [#allocation4], 256
        $region200: #{tpu_custom_call.1} parent=131 // pred_fallthru
          _
      $region132: #{tpu_custom_call.1} parent=5 // pred_fallthru
        _
      %p3320 = scmp.le.s32.totalorder 2, %s74
      // Predicated region
      $region201: #{tpu_custom_call.1} parent=5 // pred_check
        %p3321 = pneg %p3320
      $region202: #{tpu_custom_call.1} parent=5 // pred_check_branch
        %3323 = sbr.rel (%p3321) target = $region204
      $region203: #{tpu_custom_call.1} parent=5 // pred_region
        %s3324 = ssub.s32 %s74, 2
        // Predicated region
        $region205: #{tpu_custom_call.1} parent=203 // pred_check
          %p3325 = pneg %p871
        $region206: #{tpu_custom_call.1} parent=203 // pred_check_branch
          %3327 = sbr.rel (%p3325) target = $region208
        $region207: #{tpu_custom_call.1} parent=203 // pred_region
          %s3328 = sand.u32 %s80, 1
          %s3329 = scalar_lea.sflag [#allocation19], %s3328
          %s3330 = sand.u32 %s856, 1
          %s3331 = smul.addr %s3330, 64
          %s3332 = scalar_lea.vmem [#allocation18], %s3331
          %3334 = dma.done %s3329, 1024
        $region208: #{tpu_custom_call.1} parent=203 // pred_fallthru
          _
        // Predicated region
        $region209: #{tpu_custom_call.1} parent=203 // pred_check
          %p3335 = pneg %p899
        $region210: #{tpu_custom_call.1} parent=203 // pred_check_branch
          %3337 = sbr.rel (%p3335) target = $region212
        $region211: #{tpu_custom_call.1} parent=203 // pred_region
          %s3338 = sand.u32 %s80, 1
          %s3339 = scalar_lea.sflag [#allocation19], %s3338
          %s3340 = sand.u32 %s884, 1
          %s3341 = smul.addr %s3340, 64
          %s3342 = scalar_lea.vmem [#allocation20], %s3341
          %3344 = dma.done %s3339, 1024
        $region212: #{tpu_custom_call.1} parent=203 // pred_fallthru
          _
      $region204: #{tpu_custom_call.1} parent=5 // pred_fallthru
        _
    $region6: #{tpu_custom_call.1} parent=1 // loop_footer
      %s78 = sadd.s32 1, %s74
    $region7: #{tpu_custom_call.1} parent=1 // loop_footer_branch
      %73 = sbr.rel target = $region3
    $region8: #{tpu_custom_call.1} parent=1 // loop_exit
      _
    %3345 = vsyncpa [#allocation3], 1
    %s3346 = scalar_lea.sflag [#allocation3], 1
    %3347 = vsyncpa %s3346, 1
    %3348 = vsyncpa [#allocation6], 1
    %3349 = vsyncpa [#allocation4], 1
    %s3350 = scalar_lea.sflag [#allocation4], 1
    %3351 = vsyncpa %s3350, 1
    %3352 = vsyncpa [#allocation19], 1
    %s3353 = scalar_lea.sflag [#allocation19], 1
    %3354 = vsyncpa %s3353, 1

</llo_original>
